<compile_context>
chip_gen: v6e
topology: v6e:2x2x1
jax: 0.10.0
libtpu: 0.0.40
codegen_flags: <defaults>
</compile_context>

<pallas_src>
import math
import functools

import jax
import jax.numpy as jnp
from jax.experimental import pallas as pl
from jax.experimental.pallas import tpu as pltpu


# ----------------------------- config (small, synthetic) -----------------------------
BATCH = 2
SEQ = 8
HIDDEN = 32
NUM_HEADS = 4
HEAD_DIM = HIDDEN // NUM_HEADS
INTERMEDIATE = 64
INNER_GROUP_NUM = 2
LN_EPS = 1e-12
DTYPE = jnp.float32
# Set to jnp.bfloat16 on v6e/v7x at real model sizes (2x MXU throughput, half the
# weight DMA).  Kept f32 here so the correctness check stays tight; accumulation is
# f32 via preferred_element_type either way.
MXU_DTYPE = jnp.float32

NEG_INF = -1e9    # additive mask value for cross-batch score entries


# ----------------------------- in-kernel helpers -----------------------------
def _mm(a, b):
    return jnp.dot(a.astype(MXU_DTYPE), b.astype(MXU_DTYPE),
                   preferred_element_type=jnp.float32)


def _mm_tb(a, b):
    """a @ b.T without materializing the transpose (MXU trans_b path)."""
    return jax.lax.dot_general(
        a.astype(MXU_DTYPE), b.astype(MXU_DTYPE),
        dimension_numbers=(((1,), (1,)), ((), ())),
        preferred_element_type=jnp.float32)


def _layernorm(x, gamma, beta, eps):
    mu = jnp.mean(x, axis=-1, keepdims=True)
    var = jnp.mean((x - mu) ** 2, axis=-1, keepdims=True)
    return (x - mu) * jax.lax.rsqrt(var + eps) * gamma + beta


def _gelu_new(x):
    # ACT2FN["gelu_new"] (tanh approximation), ALBERT default activation.
    c = math.sqrt(2.0 / math.pi)
    return 0.5 * x * (1.0 + jnp.tanh(c * (x + 0.044715 * x * x * x)))


# ----------------------------- fused AlbertLayerGroup kernel -----------------------------
def albert_group_kernel(
    x_ref,          # (B*S, H)   hidden states, batch flattened into rows
    mask_ref,       # (B*S, B*S) combined additive mask (attention mask + cross-batch block)
    wqkv_ref,       # (L, H, 3H) fused QKV weights (scale folded into Q, head mask into V)
    bqkv_ref,       # (L, 1, 3H)
    wd_ref,         # (L, H, H)
    bd_ref,         # (L, 1, H)
    ln1g_ref, ln1b_ref,    # (L, 1, H)
    w1_ref, b1_ref,        # (L, H, I), (L, 1, I)
    w2_ref, b2_ref,        # (L, I, H), (L, 1, H)
    ln2g_ref, ln2b_ref,    # (L, 1, H)
    out_ref,        # (B*S, H)
    *, num_layers, num_heads, head_dim, eps,
):
    x = x_ref[...].astype(jnp.float32)        # activations live in vregs/VMEM the whole time
    mask = mask_ref[...]
    hidden = x.shape[1]

    for l in range(num_layers):               # inner_group_num, unrolled
        # ---- fused QKV projection: one MXU matmul + one bias add ----
        qkv = _mm(x, wqkv_ref[l]) + bqkv_ref[l]          # (BS, 3H)
        wd_l = wd_ref[l]                                  # (H, H)

        # ---- per-head attention over the flattened batch (cross-batch masked out) ----
        proj = None
        for h in range(num_heads):
            lo = h * head_dim
            q_h = qkv[:, lo:lo + head_dim]                          # (BS, dH)
            k_h = qkv[:, hidden + lo:hidden + lo + head_dim]        # (BS, dH)
            v_h = qkv[:, 2 * hidden + lo:2 * hidden + lo + head_dim]

            s = _mm_tb(q_h, k_h) + mask                   # (BS, BS); 1/sqrt(dH) pre-folded
            s = s - jnp.max(s, axis=-1, keepdims=True)
            e = jnp.exp(s)
            p = e * pl.reciprocal(jnp.sum(e, axis=-1, keepdims=True), approx=True)
            ctx_h = _mm(p, v_h)                           # (BS, dH); head mask pre-folded
            # output projection decomposed per head: sum_h ctx_h @ Wd[h*dH:(h+1)*dH, :]
            contrib = _mm(ctx_h, wd_l[lo:lo + head_dim, :])
            proj = contrib if proj is None else proj + contrib

        proj = proj + bd_ref[l]
        attn_out = _layernorm(x + proj, ln1g_ref[l], ln1b_ref[l], eps)

        # ---- FFN + residual + LayerNorm (full-batch M) ----
        ffn = _mm(attn_out, w1_ref[l]) + b1_ref[l]
        ffn = _gelu_new(ffn)
        ffn = _mm(ffn, w2_ref[l]) + b2_ref[l]
        x = _layernorm(ffn + attn_out, ln2g_ref[l], ln2b_ref[l], eps)

    out_ref[...] = x.astype(out_ref.dtype)


# ----------------------------- offline parameter / mask preparation -----------------------------
def prepare_group_params(layer_params, head_mask):
    """Stack per-layer weights with a leading layer axis; fold 1/sqrt(dH) into Wq/bq and
    the multiplicative head mask into Wv/bv (probs*hmask then @V == probs @ (hmask*V))."""
    scale = 1.0 / math.sqrt(HEAD_DIM)
    acc = {k: [] for k in
           ('wqkv', 'bqkv', 'wd', 'bd', 'ln1g', 'ln1b', 'w1', 'b1', 'w2', 'b2', 'ln2g', 'ln2b')}
    for l, p in enumerate(layer_params):
        hm_cols = jnp.repeat(head_mask[l], HEAD_DIM)                 # (H,) per output column
        wq, bq = p['wq'] * scale, p['bq'] * scale
        wv, bv = p['wv'] * hm_cols[None, :], p['bv'] * hm_cols
        acc['wqkv'].append(jnp.concatenate([wq, p['wk'], wv], axis=1))                 # (H, 3H)
        acc['bqkv'].append(jnp.concatenate([bq, p['bk'], bv], axis=0)[None, :])        # (1, 3H)
        acc['wd'].append(p['wd']);          acc['bd'].append(p['bd'][None, :])
        acc['ln1g'].append(p['ln1_g'][None, :]); acc['ln1b'].append(p['ln1_b'][None, :])
        acc['w1'].append(p['w1']);          acc['b1'].append(p['b1'][None, :])
        acc['w2'].append(p['w2']);          acc['b2'].append(p['b2'][None, :])
        acc['ln2g'].append(p['ln2_g'][None, :]); acc['ln2b'].append(p['ln2_b'][None, :])
    order = ('wqkv', 'bqkv', 'wd', 'bd', 'ln1g', 'ln1b', 'w1', 'b1', 'w2', 'b2', 'ln2g', 'ln2b')
    return tuple(jnp.stack(acc[k], axis=0) for k in order)


def build_combined_mask(attn_mask_add, B, S):
    """(B*S, B*S) additive mask over the flattened-batch score matrix: the user-provided
    additive attention mask within each batch's block, NEG_INF across batches."""
    cols = attn_mask_add.reshape(B * S).astype(jnp.float32)           # mask value per key column
    row_b = jnp.arange(B * S) // S
    same_batch = row_b[:, None] == row_b[None, :]
    mask = jnp.where(same_batch, jnp.broadcast_to(cols[None, :], (B * S, B * S)), NEG_INF)
    return mask.astype(DTYPE)


# ----------------------------- wrapper: whole AlbertLayerGroup in one pallas_call -----------------------------
@jax.jit
def albert_layer_group_forward(hidden_states, attn_mask_add, head_mask, layer_params):
    """Mirrors AlbertLayerGroup.forward (output_attentions/hidden_states = False)."""
    B, S, H = hidden_states.shape
    L = len(layer_params)

    x2d = hidden_states.reshape(B * S, H)
    mask = build_combined_mask(attn_mask_add, B, S)
    stacked = prepare_group_params(layer_params, head_mask)

    kernel = functools.partial(
        albert_group_kernel,
        num_layers=L, num_heads=NUM_HEADS, head_dim=HEAD_DIM, eps=LN_EPS,
    )

    out2d = pl.pallas_call(
        kernel,
        out_shape=jax.ShapeDtypeStruct((B * S, H), DTYPE),
        compiler_params=pltpu.CompilerParams(vmem_limit_bytes=32 * 1024 * 1024),
    )(x2d, mask, *stacked)

    return (out2d.reshape(B, S, H),)


# ----------------------------- pure-JAX reference (for correctness check) -----------------------------
def albert_layer_ref(x, amask, hmask, p):
    B, S, H = x.shape
    q = (x @ p['wq'] + p['bq']).reshape(B, S, NUM_HEADS, HEAD_DIM)
    k = (x @ p['wk'] + p['bk']).reshape(B, S, NUM_HEADS, HEAD_DIM)
    v = (x @ p['wv'] + p['bv']).reshape(B, S, NUM_HEADS, HEAD_DIM)
    scores = jnp.einsum('bsnd,btnd->bnst', q, k) / math.sqrt(HEAD_DIM)
    scores = scores + amask[:, None, :, :]                      # (B,1,1,S)
    probs = jax.nn.softmax(scores, axis=-1)
    probs = probs * hmask[None, :, None, None]
    ctx = jnp.einsum('bnst,btnd->bsnd', probs, v).reshape(B, S, H)
    proj = ctx @ p['wd'] + p['bd']
    attn_out = _layernorm(x + proj, p['ln1_g'], p['ln1_b'], LN_EPS)
    ffn = _gelu_new(attn_out @ p['w1'] + p['b1'])
    ffn = ffn @ p['w2'] + p['b2']
    return _layernorm(ffn + attn_out, p['ln2_g'], p['ln2_b'], LN_EPS)


def albert_layer_group_ref(x, amask, head_mask, layer_params):
    for layer_idx, p in enumerate(layer_params):
        x = albert_layer_ref(x, amask, head_mask[layer_idx], p)
    return x


# ----------------------------- deterministic parameter construction -----------------------------
def init_layer_params(key):
    ks = jax.random.split(key, 8)
    s = 0.02
    return {
        'wq': s * jax.random.normal(ks[0], (HIDDEN, HIDDEN), DTYPE),
        'bq': jnp.zeros((HIDDEN,), DTYPE),
        'wk': s * jax.random.normal(ks[1], (HIDDEN, HIDDEN), DTYPE),
        'bk': jnp.zeros((HIDDEN,), DTYPE),
        'wv': s * jax.random.normal(ks[2], (HIDDEN, HIDDEN), DTYPE),
        'bv': jnp.zeros((HIDDEN,), DTYPE),
        'wd': s * jax.random.normal(ks[3], (HIDDEN, HIDDEN), DTYPE),
        'bd': s * jax.random.normal(ks[4], (HIDDEN,), DTYPE),
        'ln1_g': jnp.ones((HIDDEN,), DTYPE),
        'ln1_b': jnp.zeros((HIDDEN,), DTYPE),
        'w1': s * jax.random.normal(ks[5], (HIDDEN, INTERMEDIATE), DTYPE),
        'b1': jnp.zeros((INTERMEDIATE,), DTYPE),
        'w2': s * jax.random.normal(ks[6], (INTERMEDIATE, HIDDEN), DTYPE),
        'b2': s * jax.random.normal(ks[7], (HIDDEN,), DTYPE),
        'ln2_g': jnp.ones((HIDDEN,), DTYPE),
        'ln2_b': jnp.zeros((HIDDEN,), DTYPE),
    }


# ----------------------------- main -----------------------------
if __name__ == "__main__":
    key = jax.random.PRNGKey(0)
    k_x, k_p = jax.random.split(key)

    hidden_states = jax.random.normal(k_x, (BATCH, SEQ, HIDDEN), DTYPE)

    # additive attention mask: batch 1 has its last 2 tokens masked out
    keep = jnp.ones((BATCH, 1, SEQ), DTYPE).at[1, 0, -2:].set(0.0)
    attn_mask_add = (1.0 - keep) * (-10000.0)

    # non-trivial per-layer head mask (exercises the folded-head-mask path)
    head_mask = jnp.array([[1.0, 1.0, 0.5, 1.0],
                           [1.0, 0.0, 1.0, 1.0]], DTYPE)
    assert head_mask.shape == (INNER_GROUP_NUM, NUM_HEADS)

    layer_keys = jax.random.split(k_p, INNER_GROUP_NUM)
    layer_params = [init_layer_params(lk) for lk in layer_keys]

    (out,) = albert_layer_group_forward(hidden_states, attn_mask_add, head_mask, layer_params)
    out = jax.block_until_ready(out)

    ref = jax.block_until_ready(
        albert_layer_group_ref(hidden_states, attn_mask_add, head_mask, layer_params))

    assert out.shape == (BATCH, SEQ, HIDDEN)
    assert jnp.allclose(out, ref, atol=2e-3, rtol=2e-3), \
        f"max abs err {jnp.max(jnp.abs(out - ref))}"

    print("KERNEL_OK")
</pallas_src>

<mosaic_0001>
module attributes {stable_mosaic.version = 11 : i64} {
  func.func @albert_group_kernel(%arg0: memref<16x32xf32, #tpu.memory_space<vmem>>, %arg1: memref<16x16xf32, #tpu.memory_space<vmem>>, %arg2: memref<2x32x96xf32, #tpu.memory_space<vmem>>, %arg3: memref<2x1x96xf32, #tpu.memory_space<vmem>>, %arg4: memref<2x32x32xf32, #tpu.memory_space<vmem>>, %arg5: memref<2x1x32xf32, #tpu.memory_space<vmem>>, %arg6: memref<2x1x32xf32, #tpu.memory_space<vmem>>, %arg7: memref<2x1x32xf32, #tpu.memory_space<vmem>>, %arg8: memref<2x32x64xf32, #tpu.memory_space<vmem>>, %arg9: memref<2x1x64xf32, #tpu.memory_space<vmem>>, %arg10: memref<2x64x32xf32, #tpu.memory_space<vmem>>, %arg11: memref<2x1x32xf32, #tpu.memory_space<vmem>>, %arg12: memref<2x1x32xf32, #tpu.memory_space<vmem>>, %arg13: memref<2x1x32xf32, #tpu.memory_space<vmem>>, %arg14: memref<16x32xf32, #tpu.memory_space<vmem>>) attributes {dimension_semantics = [], scalar_prefetch = 0 : i64, scratch_operands = 0 : i64, tpu.core_type = #tpu.core_type<tc>} {
    %c0 = arith.constant 0 : index
    %c0_0 = arith.constant 0 : index
    %0 = vector.load %arg0[%c0, %c0_0] : memref<16x32xf32, #tpu.memory_space<vmem>>, vector<16x32xf32>
    %c0_1 = arith.constant 0 : index
    %c0_2 = arith.constant 0 : index
    %1 = vector.load %arg1[%c0_1, %c0_2] : memref<16x16xf32, #tpu.memory_space<vmem>>, vector<16x16xf32>
    %c0_3 = arith.constant 0 : index
    %c0_4 = arith.constant 0 : index
    %c0_5 = arith.constant 0 : index
    %2 = vector.load %arg2[%c0_3, %c0_4, %c0_5] : memref<2x32x96xf32, #tpu.memory_space<vmem>>, vector<1x32x96xf32>
    %3 = vector.shape_cast %2 : vector<1x32x96xf32> to vector<32x96xf32>
    %cst = arith.constant dense<0.000000e+00> : vector<16x96xf32>
    %4 = tpu.matmul %0, %3, %cst {dimension_numbers = #tpu.dot_dimension_numbers<[1], [0], [0], [1], [0, 0, 1, 1], [], []>} : vector<16x32xf32>, vector<32x96xf32>, vector<16x96xf32> -> vector<16x96xf32>
    %c0_6 = arith.constant 0 : index
    %c0_7 = arith.constant 0 : index
    %c0_8 = arith.constant 0 : index
    %5 = vector.load %arg3[%c0_6, %c0_7, %c0_8] : memref<2x1x96xf32, #tpu.memory_space<vmem>>, vector<1x1x96xf32>
    %6 = vector.shape_cast %5 : vector<1x1x96xf32> to vector<1x96xf32>
    %7 = vector.broadcast %6 : vector<1x96xf32> to vector<16x96xf32>
    %8 = arith.addf %4, %7 : vector<16x96xf32>
    %c0_9 = arith.constant 0 : index
    %c0_10 = arith.constant 0 : index
    %c0_11 = arith.constant 0 : index
    %9 = vector.load %arg4[%c0_9, %c0_10, %c0_11] : memref<2x32x32xf32, #tpu.memory_space<vmem>>, vector<1x32x32xf32>
    %10 = vector.shape_cast %9 : vector<1x32x32xf32> to vector<32x32xf32>
    %11 = vector.extract_strided_slice %8 {offsets = [0, 0], sizes = [16, 8], strides = [1, 1]} : vector<16x96xf32> to vector<16x8xf32>
    %12 = vector.extract_strided_slice %8 {offsets = [0, 32], sizes = [16, 8], strides = [1, 1]} : vector<16x96xf32> to vector<16x8xf32>
    %13 = vector.extract_strided_slice %8 {offsets = [0, 64], sizes = [16, 8], strides = [1, 1]} : vector<16x96xf32> to vector<16x8xf32>
    %cst_12 = arith.constant dense<0.000000e+00> : vector<16x16xf32>
    %14 = tpu.matmul %11, %12, %cst_12 {dimension_numbers = #tpu.dot_dimension_numbers<[1], [1], [0], [0], [0, 0, 1, 0], [], []>} : vector<16x8xf32>, vector<16x8xf32>, vector<16x16xf32> -> vector<16x16xf32>
    %15 = arith.addf %14, %1 : vector<16x16xf32>
    %cst_13 = arith.constant dense<0xFF800000> : vector<16xf32>
    %16 = vector.multi_reduction <maximumf>, %15, %cst_13 [1] : vector<16x16xf32> to vector<16xf32>
    %17 = vector.shape_cast %16 : vector<16xf32> to vector<16x1xf32>
    %18 = vector.broadcast %17 : vector<16x1xf32> to vector<16x16xf32>
    %19 = arith.subf %15, %18 : vector<16x16xf32>
    %20 = math.exp %19 : vector<16x16xf32>
    %cst_14 = arith.constant dense<0.000000e+00> : vector<16xf32>
    %21 = vector.multi_reduction <add>, %20, %cst_14 [1] : vector<16x16xf32> to vector<16xf32>
    %22 = vector.shape_cast %21 : vector<16xf32> to vector<16x1xf32>
    %23 = tpu.reciprocal %22 {approx = true} : vector<16x1xf32> -> vector<16x1xf32>
    %24 = vector.broadcast %23 : vector<16x1xf32> to vector<16x16xf32>
    %25 = arith.mulf %20, %24 : vector<16x16xf32>
    %cst_15 = arith.constant dense<0.000000e+00> : vector<16x8xf32>
    %26 = tpu.matmul %25, %13, %cst_15 {dimension_numbers = #tpu.dot_dimension_numbers<[1], [0], [0], [1], [0, 0, 1, 1], [], []>} : vector<16x16xf32>, vector<16x8xf32>, vector<16x8xf32> -> vector<16x8xf32>
    %27 = vector.extract_strided_slice %10 {offsets = [0, 0], sizes = [8, 32], strides = [1, 1]} : vector<32x32xf32> to vector<8x32xf32>
    %cst_16 = arith.constant dense<0.000000e+00> : vector<16x32xf32>
    %28 = tpu.matmul %26, %27, %cst_16 {dimension_numbers = #tpu.dot_dimension_numbers<[1], [0], [0], [1], [0, 0, 1, 1], [], []>} : vector<16x8xf32>, vector<8x32xf32>, vector<16x32xf32> -> vector<16x32xf32>
    %29 = vector.extract_strided_slice %8 {offsets = [0, 8], sizes = [16, 8], strides = [1, 1]} : vector<16x96xf32> to vector<16x8xf32>
    %30 = vector.extract_strided_slice %8 {offsets = [0, 40], sizes = [16, 8], strides = [1, 1]} : vector<16x96xf32> to vector<16x8xf32>
    %31 = vector.extract_strided_slice %8 {offsets = [0, 72], sizes = [16, 8], strides = [1, 1]} : vector<16x96xf32> to vector<16x8xf32>
    %cst_17 = arith.constant dense<0.000000e+00> : vector<16x16xf32>
    %32 = tpu.matmul %29, %30, %cst_17 {dimension_numbers = #tpu.dot_dimension_numbers<[1], [1], [0], [0], [0, 0, 1, 0], [], []>} : vector<16x8xf32>, vector<16x8xf32>, vector<16x16xf32> -> vector<16x16xf32>
    %33 = arith.addf %32, %1 : vector<16x16xf32>
    %cst_18 = arith.constant dense<0xFF800000> : vector<16xf32>
    %34 = vector.multi_reduction <maximumf>, %33, %cst_18 [1] : vector<16x16xf32> to vector<16xf32>
    %35 = vector.shape_cast %34 : vector<16xf32> to vector<16x1xf32>
    %36 = vector.broadcast %35 : vector<16x1xf32> to vector<16x16xf32>
    %37 = arith.subf %33, %36 : vector<16x16xf32>
    %38 = math.exp %37 : vector<16x16xf32>
    %cst_19 = arith.constant dense<0.000000e+00> : vector<16xf32>
    %39 = vector.multi_reduction <add>, %38, %cst_19 [1] : vector<16x16xf32> to vector<16xf32>
    %40 = vector.shape_cast %39 : vector<16xf32> to vector<16x1xf32>
    %41 = tpu.reciprocal %40 {approx = true} : vector<16x1xf32> -> vector<16x1xf32>
    %42 = vector.broadcast %41 : vector<16x1xf32> to vector<16x16xf32>
    %43 = arith.mulf %38, %42 : vector<16x16xf32>
    %cst_20 = arith.constant dense<0.000000e+00> : vector<16x8xf32>
    %44 = tpu.matmul %43, %31, %cst_20 {dimension_numbers = #tpu.dot_dimension_numbers<[1], [0], [0], [1], [0, 0, 1, 1], [], []>} : vector<16x16xf32>, vector<16x8xf32>, vector<16x8xf32> -> vector<16x8xf32>
    %45 = vector.extract_strided_slice %10 {offsets = [8, 0], sizes = [8, 32], strides = [1, 1]} : vector<32x32xf32> to vector<8x32xf32>
    %cst_21 = arith.constant dense<0.000000e+00> : vector<16x32xf32>
    %46 = tpu.matmul %44, %45, %cst_21 {dimension_numbers = #tpu.dot_dimension_numbers<[1], [0], [0], [1], [0, 0, 1, 1], [], []>} : vector<16x8xf32>, vector<8x32xf32>, vector<16x32xf32> -> vector<16x32xf32>
    %47 = arith.addf %28, %46 : vector<16x32xf32>
    %48 = vector.extract_strided_slice %8 {offsets = [0, 16], sizes = [16, 8], strides = [1, 1]} : vector<16x96xf32> to vector<16x8xf32>
    %49 = vector.extract_strided_slice %8 {offsets = [0, 48], sizes = [16, 8], strides = [1, 1]} : vector<16x96xf32> to vector<16x8xf32>
    %50 = vector.extract_strided_slice %8 {offsets = [0, 80], sizes = [16, 8], strides = [1, 1]} : vector<16x96xf32> to vector<16x8xf32>
    %cst_22 = arith.constant dense<0.000000e+00> : vector<16x16xf32>
    %51 = tpu.matmul %48, %49, %cst_22 {dimension_numbers = #tpu.dot_dimension_numbers<[1], [1], [0], [0], [0, 0, 1, 0], [], []>} : vector<16x8xf32>, vector<16x8xf32>, vector<16x16xf32> -> vector<16x16xf32>
    %52 = arith.addf %51, %1 : vector<16x16xf32>
    %cst_23 = arith.constant dense<0xFF800000> : vector<16xf32>
    %53 = vector.multi_reduction <maximumf>, %52, %cst_23 [1] : vector<16x16xf32> to vector<16xf32>
    %54 = vector.shape_cast %53 : vector<16xf32> to vector<16x1xf32>
    %55 = vector.broadcast %54 : vector<16x1xf32> to vector<16x16xf32>
    %56 = arith.subf %52, %55 : vector<16x16xf32>
    %57 = math.exp %56 : vector<16x16xf32>
    %cst_24 = arith.constant dense<0.000000e+00> : vector<16xf32>
    %58 = vector.multi_reduction <add>, %57, %cst_24 [1] : vector<16x16xf32> to vector<16xf32>
    %59 = vector.shape_cast %58 : vector<16xf32> to vector<16x1xf32>
    %60 = tpu.reciprocal %59 {approx = true} : vector<16x1xf32> -> vector<16x1xf32>
    %61 = vector.broadcast %60 : vector<16x1xf32> to vector<16x16xf32>
    %62 = arith.mulf %57, %61 : vector<16x16xf32>
    %cst_25 = arith.constant dense<0.000000e+00> : vector<16x8xf32>
    %63 = tpu.matmul %62, %50, %cst_25 {dimension_numbers = #tpu.dot_dimension_numbers<[1], [0], [0], [1], [0, 0, 1, 1], [], []>} : vector<16x16xf32>, vector<16x8xf32>, vector<16x8xf32> -> vector<16x8xf32>
    %64 = vector.extract_strided_slice %10 {offsets = [16, 0], sizes = [8, 32], strides = [1, 1]} : vector<32x32xf32> to vector<8x32xf32>
    %cst_26 = arith.constant dense<0.000000e+00> : vector<16x32xf32>
    %65 = tpu.matmul %63, %64, %cst_26 {dimension_numbers = #tpu.dot_dimension_numbers<[1], [0], [0], [1], [0, 0, 1, 1], [], []>} : vector<16x8xf32>, vector<8x32xf32>, vector<16x32xf32> -> vector<16x32xf32>
    %66 = arith.addf %47, %65 : vector<16x32xf32>
    %67 = vector.extract_strided_slice %8 {offsets = [0, 24], sizes = [16, 8], strides = [1, 1]} : vector<16x96xf32> to vector<16x8xf32>
    %68 = vector.extract_strided_slice %8 {offsets = [0, 56], sizes = [16, 8], strides = [1, 1]} : vector<16x96xf32> to vector<16x8xf32>
    %69 = vector.extract_strided_slice %8 {offsets = [0, 88], sizes = [16, 8], strides = [1, 1]} : vector<16x96xf32> to vector<16x8xf32>
    %cst_27 = arith.constant dense<0.000000e+00> : vector<16x16xf32>
    %70 = tpu.matmul %67, %68, %cst_27 {dimension_numbers = #tpu.dot_dimension_numbers<[1], [1], [0], [0], [0, 0, 1, 0], [], []>} : vector<16x8xf32>, vector<16x8xf32>, vector<16x16xf32> -> vector<16x16xf32>
    %71 = arith.addf %70, %1 : vector<16x16xf32>
    %cst_28 = arith.constant dense<0xFF800000> : vector<16xf32>
    %72 = vector.multi_reduction <maximumf>, %71, %cst_28 [1] : vector<16x16xf32> to vector<16xf32>
    %73 = vector.shape_cast %72 : vector<16xf32> to vector<16x1xf32>
    %74 = vector.broadcast %73 : vector<16x1xf32> to vector<16x16xf32>
    %75 = arith.subf %71, %74 : vector<16x16xf32>
    %76 = math.exp %75 : vector<16x16xf32>
    %cst_29 = arith.constant dense<0.000000e+00> : vector<16xf32>
    %77 = vector.multi_reduction <add>, %76, %cst_29 [1] : vector<16x16xf32> to vector<16xf32>
    %78 = vector.shape_cast %77 : vector<16xf32> to vector<16x1xf32>
    %79 = tpu.reciprocal %78 {approx = true} : vector<16x1xf32> -> vector<16x1xf32>
    %80 = vector.broadcast %79 : vector<16x1xf32> to vector<16x16xf32>
    %81 = arith.mulf %76, %80 : vector<16x16xf32>
    %cst_30 = arith.constant dense<0.000000e+00> : vector<16x8xf32>
    %82 = tpu.matmul %81, %69, %cst_30 {dimension_numbers = #tpu.dot_dimension_numbers<[1], [0], [0], [1], [0, 0, 1, 1], [], []>} : vector<16x16xf32>, vector<16x8xf32>, vector<16x8xf32> -> vector<16x8xf32>
    %83 = vector.extract_strided_slice %10 {offsets = [24, 0], sizes = [8, 32], strides = [1, 1]} : vector<32x32xf32> to vector<8x32xf32>
    %cst_31 = arith.constant dense<0.000000e+00> : vector<16x32xf32>
    %84 = tpu.matmul %82, %83, %cst_31 {dimension_numbers = #tpu.dot_dimension_numbers<[1], [0], [0], [1], [0, 0, 1, 1], [], []>} : vector<16x8xf32>, vector<8x32xf32>, vector<16x32xf32> -> vector<16x32xf32>
    %85 = arith.addf %66, %84 : vector<16x32xf32>
    %c0_32 = arith.constant 0 : index
    %c0_33 = arith.constant 0 : index
    %c0_34 = arith.constant 0 : index
    %86 = vector.load %arg5[%c0_32, %c0_33, %c0_34] : memref<2x1x32xf32, #tpu.memory_space<vmem>>, vector<1x1x32xf32>
    %87 = vector.shape_cast %86 : vector<1x1x32xf32> to vector<1x32xf32>
    %88 = vector.broadcast %87 : vector<1x32xf32> to vector<16x32xf32>
    %89 = arith.addf %85, %88 : vector<16x32xf32>
    %90 = arith.addf %0, %89 : vector<16x32xf32>
    %c0_35 = arith.constant 0 : index
    %c0_36 = arith.constant 0 : index
    %c0_37 = arith.constant 0 : index
    %91 = vector.load %arg6[%c0_35, %c0_36, %c0_37] : memref<2x1x32xf32, #tpu.memory_space<vmem>>, vector<1x1x32xf32>
    %92 = vector.shape_cast %91 : vector<1x1x32xf32> to vector<1x32xf32>
    %c0_38 = arith.constant 0 : index
    %c0_39 = arith.constant 0 : index
    %c0_40 = arith.constant 0 : index
    %93 = vector.load %arg7[%c0_38, %c0_39, %c0_40] : memref<2x1x32xf32, #tpu.memory_space<vmem>>, vector<1x1x32xf32>
    %94 = vector.shape_cast %93 : vector<1x1x32xf32> to vector<1x32xf32>
    %cst_41 = arith.constant dense<0.000000e+00> : vector<16xf32>
    %95 = vector.multi_reduction <add>, %90, %cst_41 [1] : vector<16x32xf32> to vector<16xf32>
    %96 = vector.shape_cast %95 : vector<16xf32> to vector<16x1xf32>
    %cst_42 = arith.constant 3.200000e+01 : f32
    %97 = vector.broadcast %cst_42 : f32 to vector<16x1xf32>
    %98 = arith.divf %96, %97 : vector<16x1xf32>
    %99 = vector.broadcast %98 : vector<16x1xf32> to vector<16x32xf32>
    %100 = arith.subf %90, %99 : vector<16x32xf32>
    %101 = arith.mulf %100, %100 : vector<16x32xf32>
    %cst_43 = arith.constant dense<0.000000e+00> : vector<16xf32>
    %102 = vector.multi_reduction <add>, %101, %cst_43 [1] : vector<16x32xf32> to vector<16xf32>
    %103 = vector.shape_cast %102 : vector<16xf32> to vector<16x1xf32>
    %cst_44 = arith.constant 3.200000e+01 : f32
    %104 = vector.broadcast %cst_44 : f32 to vector<16x1xf32>
    %105 = arith.divf %103, %104 : vector<16x1xf32>
    %106 = vector.broadcast %98 : vector<16x1xf32> to vector<16x32xf32>
    %107 = arith.subf %90, %106 : vector<16x32xf32>
    %cst_45 = arith.constant 9.99999996E-13 : f32
    %108 = vector.broadcast %cst_45 : f32 to vector<16x1xf32>
    %109 = arith.addf %105, %108 : vector<16x1xf32>
    %110 = math.rsqrt %109 : vector<16x1xf32>
    %111 = vector.broadcast %110 : vector<16x1xf32> to vector<16x32xf32>
    %112 = arith.mulf %107, %111 : vector<16x32xf32>
    %113 = vector.broadcast %92 : vector<1x32xf32> to vector<16x32xf32>
    %114 = arith.mulf %112, %113 : vector<16x32xf32>
    %115 = vector.broadcast %94 : vector<1x32xf32> to vector<16x32xf32>
    %116 = arith.addf %114, %115 : vector<16x32xf32>
    %c0_46 = arith.constant 0 : index
    %c0_47 = arith.constant 0 : index
    %c0_48 = arith.constant 0 : index
    %117 = vector.load %arg8[%c0_46, %c0_47, %c0_48] : memref<2x32x64xf32, #tpu.memory_space<vmem>>, vector<1x32x64xf32>
    %118 = vector.shape_cast %117 : vector<1x32x64xf32> to vector<32x64xf32>
    %cst_49 = arith.constant dense<0.000000e+00> : vector<16x64xf32>
    %119 = tpu.matmul %116, %118, %cst_49 {dimension_numbers = #tpu.dot_dimension_numbers<[1], [0], [0], [1], [0, 0, 1, 1], [], []>} : vector<16x32xf32>, vector<32x64xf32>, vector<16x64xf32> -> vector<16x64xf32>
    %c0_50 = arith.constant 0 : index
    %c0_51 = arith.constant 0 : index
    %c0_52 = arith.constant 0 : index
    %120 = vector.load %arg9[%c0_50, %c0_51, %c0_52] : memref<2x1x64xf32, #tpu.memory_space<vmem>>, vector<1x1x64xf32>
    %121 = vector.shape_cast %120 : vector<1x1x64xf32> to vector<1x64xf32>
    %122 = vector.broadcast %121 : vector<1x64xf32> to vector<16x64xf32>
    %123 = arith.addf %119, %122 : vector<16x64xf32>
    %cst_53 = arith.constant 5.000000e-01 : f32
    %124 = vector.broadcast %cst_53 : f32 to vector<16x64xf32>
    %125 = arith.mulf %124, %123 : vector<16x64xf32>
    %cst_54 = arith.constant 4.471500e-02 : f32
    %126 = vector.broadcast %cst_54 : f32 to vector<16x64xf32>
    %127 = arith.mulf %126, %123 : vector<16x64xf32>
    %128 = arith.mulf %127, %123 : vector<16x64xf32>
    %129 = arith.mulf %128, %123 : vector<16x64xf32>
    %130 = arith.addf %123, %129 : vector<16x64xf32>
    %cst_55 = arith.constant 0.797884583 : f32
    %131 = vector.broadcast %cst_55 : f32 to vector<16x64xf32>
    %132 = arith.mulf %131, %130 : vector<16x64xf32>
    %133 = math.tanh %132 : vector<16x64xf32>
    %cst_56 = arith.constant 1.000000e+00 : f32
    %134 = vector.broadcast %cst_56 : f32 to vector<16x64xf32>
    %135 = arith.addf %134, %133 : vector<16x64xf32>
    %136 = arith.mulf %125, %135 : vector<16x64xf32>
    %c0_57 = arith.constant 0 : index
    %c0_58 = arith.constant 0 : index
    %c0_59 = arith.constant 0 : index
    %137 = vector.load %arg10[%c0_57, %c0_58, %c0_59] : memref<2x64x32xf32, #tpu.memory_space<vmem>>, vector<1x64x32xf32>
    %138 = vector.shape_cast %137 : vector<1x64x32xf32> to vector<64x32xf32>
    %cst_60 = arith.constant dense<0.000000e+00> : vector<16x32xf32>
    %139 = tpu.matmul %136, %138, %cst_60 {dimension_numbers = #tpu.dot_dimension_numbers<[1], [0], [0], [1], [0, 0, 1, 1], [], []>} : vector<16x64xf32>, vector<64x32xf32>, vector<16x32xf32> -> vector<16x32xf32>
    %c0_61 = arith.constant 0 : index
    %c0_62 = arith.constant 0 : index
    %c0_63 = arith.constant 0 : index
    %140 = vector.load %arg11[%c0_61, %c0_62, %c0_63] : memref<2x1x32xf32, #tpu.memory_space<vmem>>, vector<1x1x32xf32>
    %141 = vector.shape_cast %140 : vector<1x1x32xf32> to vector<1x32xf32>
    %142 = vector.broadcast %141 : vector<1x32xf32> to vector<16x32xf32>
    %143 = arith.addf %139, %142 : vector<16x32xf32>
    %144 = arith.addf %143, %116 : vector<16x32xf32>
    %c0_64 = arith.constant 0 : index
    %c0_65 = arith.constant 0 : index
    %c0_66 = arith.constant 0 : index
    %145 = vector.load %arg12[%c0_64, %c0_65, %c0_66] : memref<2x1x32xf32, #tpu.memory_space<vmem>>, vector<1x1x32xf32>
    %146 = vector.shape_cast %145 : vector<1x1x32xf32> to vector<1x32xf32>
    %c0_67 = arith.constant 0 : index
    %c0_68 = arith.constant 0 : index
    %c0_69 = arith.constant 0 : index
    %147 = vector.load %arg13[%c0_67, %c0_68, %c0_69] : memref<2x1x32xf32, #tpu.memory_space<vmem>>, vector<1x1x32xf32>
    %148 = vector.shape_cast %147 : vector<1x1x32xf32> to vector<1x32xf32>
    %cst_70 = arith.constant dense<0.000000e+00> : vector<16xf32>
    %149 = vector.multi_reduction <add>, %144, %cst_70 [1] : vector<16x32xf32> to vector<16xf32>
    %150 = vector.shape_cast %149 : vector<16xf32> to vector<16x1xf32>
    %cst_71 = arith.constant 3.200000e+01 : f32
    %151 = vector.broadcast %cst_71 : f32 to vector<16x1xf32>
    %152 = arith.divf %150, %151 : vector<16x1xf32>
    %153 = vector.broadcast %152 : vector<16x1xf32> to vector<16x32xf32>
    %154 = arith.subf %144, %153 : vector<16x32xf32>
    %155 = arith.mulf %154, %154 : vector<16x32xf32>
    %cst_72 = arith.constant dense<0.000000e+00> : vector<16xf32>
    %156 = vector.multi_reduction <add>, %155, %cst_72 [1] : vector<16x32xf32> to vector<16xf32>
    %157 = vector.shape_cast %156 : vector<16xf32> to vector<16x1xf32>
    %cst_73 = arith.constant 3.200000e+01 : f32
    %158 = vector.broadcast %cst_73 : f32 to vector<16x1xf32>
    %159 = arith.divf %157, %158 : vector<16x1xf32>
    %160 = vector.broadcast %152 : vector<16x1xf32> to vector<16x32xf32>
    %161 = arith.subf %144, %160 : vector<16x32xf32>
    %cst_74 = arith.constant 9.99999996E-13 : f32
    %162 = vector.broadcast %cst_74 : f32 to vector<16x1xf32>
    %163 = arith.addf %159, %162 : vector<16x1xf32>
    %164 = math.rsqrt %163 : vector<16x1xf32>
    %165 = vector.broadcast %164 : vector<16x1xf32> to vector<16x32xf32>
    %166 = arith.mulf %161, %165 : vector<16x32xf32>
    %167 = vector.broadcast %146 : vector<1x32xf32> to vector<16x32xf32>
    %168 = arith.mulf %166, %167 : vector<16x32xf32>
    %169 = vector.broadcast %148 : vector<1x32xf32> to vector<16x32xf32>
    %170 = arith.addf %168, %169 : vector<16x32xf32>
    %c1 = arith.constant 1 : index
    %c0_75 = arith.constant 0 : index
    %c0_76 = arith.constant 0 : index
    %171 = vector.load %arg2[%c1, %c0_75, %c0_76] : memref<2x32x96xf32, #tpu.memory_space<vmem>>, vector<1x32x96xf32>
    %172 = vector.shape_cast %171 : vector<1x32x96xf32> to vector<32x96xf32>
    %cst_77 = arith.constant dense<0.000000e+00> : vector<16x96xf32>
    %173 = tpu.matmul %170, %172, %cst_77 {dimension_numbers = #tpu.dot_dimension_numbers<[1], [0], [0], [1], [0, 0, 1, 1], [], []>} : vector<16x32xf32>, vector<32x96xf32>, vector<16x96xf32> -> vector<16x96xf32>
    %c1_78 = arith.constant 1 : index
    %c0_79 = arith.constant 0 : index
    %c0_80 = arith.constant 0 : index
    %174 = vector.load %arg3[%c1_78, %c0_79, %c0_80] : memref<2x1x96xf32, #tpu.memory_space<vmem>>, vector<1x1x96xf32>
    %175 = vector.shape_cast %174 : vector<1x1x96xf32> to vector<1x96xf32>
    %176 = vector.broadcast %175 : vector<1x96xf32> to vector<16x96xf32>
    %177 = arith.addf %173, %176 : vector<16x96xf32>
    %c1_81 = arith.constant 1 : index
    %c0_82 = arith.constant 0 : index
    %c0_83 = arith.constant 0 : index
    %178 = vector.load %arg4[%c1_81, %c0_82, %c0_83] : memref<2x32x32xf32, #tpu.memory_space<vmem>>, vector<1x32x32xf32>
    %179 = vector.shape_cast %178 : vector<1x32x32xf32> to vector<32x32xf32>
    %180 = vector.extract_strided_slice %177 {offsets = [0, 0], sizes = [16, 8], strides = [1, 1]} : vector<16x96xf32> to vector<16x8xf32>
    %181 = vector.extract_strided_slice %177 {offsets = [0, 32], sizes = [16, 8], strides = [1, 1]} : vector<16x96xf32> to vector<16x8xf32>
    %182 = vector.extract_strided_slice %177 {offsets = [0, 64], sizes = [16, 8], strides = [1, 1]} : vector<16x96xf32> to vector<16x8xf32>
    %cst_84 = arith.constant dense<0.000000e+00> : vector<16x16xf32>
    %183 = tpu.matmul %180, %181, %cst_84 {dimension_numbers = #tpu.dot_dimension_numbers<[1], [1], [0], [0], [0, 0, 1, 0], [], []>} : vector<16x8xf32>, vector<16x8xf32>, vector<16x16xf32> -> vector<16x16xf32>
    %184 = arith.addf %183, %1 : vector<16x16xf32>
    %cst_85 = arith.constant dense<0xFF800000> : vector<16xf32>
    %185 = vector.multi_reduction <maximumf>, %184, %cst_85 [1] : vector<16x16xf32> to vector<16xf32>
    %186 = vector.shape_cast %185 : vector<16xf32> to vector<16x1xf32>
    %187 = vector.broadcast %186 : vector<16x1xf32> to vector<16x16xf32>
    %188 = arith.subf %184, %187 : vector<16x16xf32>
    %189 = math.exp %188 : vector<16x16xf32>
    %cst_86 = arith.constant dense<0.000000e+00> : vector<16xf32>
    %190 = vector.multi_reduction <add>, %189, %cst_86 [1] : vector<16x16xf32> to vector<16xf32>
    %191 = vector.shape_cast %190 : vector<16xf32> to vector<16x1xf32>
    %192 = tpu.reciprocal %191 {approx = true} : vector<16x1xf32> -> vector<16x1xf32>
    %193 = vector.broadcast %192 : vector<16x1xf32> to vector<16x16xf32>
    %194 = arith.mulf %189, %193 : vector<16x16xf32>
    %cst_87 = arith.constant dense<0.000000e+00> : vector<16x8xf32>
    %195 = tpu.matmul %194, %182, %cst_87 {dimension_numbers = #tpu.dot_dimension_numbers<[1], [0], [0], [1], [0, 0, 1, 1], [], []>} : vector<16x16xf32>, vector<16x8xf32>, vector<16x8xf32> -> vector<16x8xf32>
    %196 = vector.extract_strided_slice %179 {offsets = [0, 0], sizes = [8, 32], strides = [1, 1]} : vector<32x32xf32> to vector<8x32xf32>
    %cst_88 = arith.constant dense<0.000000e+00> : vector<16x32xf32>
    %197 = tpu.matmul %195, %196, %cst_88 {dimension_numbers = #tpu.dot_dimension_numbers<[1], [0], [0], [1], [0, 0, 1, 1], [], []>} : vector<16x8xf32>, vector<8x32xf32>, vector<16x32xf32> -> vector<16x32xf32>
    %198 = vector.extract_strided_slice %177 {offsets = [0, 8], sizes = [16, 8], strides = [1, 1]} : vector<16x96xf32> to vector<16x8xf32>
    %199 = vector.extract_strided_slice %177 {offsets = [0, 40], sizes = [16, 8], strides = [1, 1]} : vector<16x96xf32> to vector<16x8xf32>
    %200 = vector.extract_strided_slice %177 {offsets = [0, 72], sizes = [16, 8], strides = [1, 1]} : vector<16x96xf32> to vector<16x8xf32>
    %cst_89 = arith.constant dense<0.000000e+00> : vector<16x16xf32>
    %201 = tpu.matmul %198, %199, %cst_89 {dimension_numbers = #tpu.dot_dimension_numbers<[1], [1], [0], [0], [0, 0, 1, 0], [], []>} : vector<16x8xf32>, vector<16x8xf32>, vector<16x16xf32> -> vector<16x16xf32>
    %202 = arith.addf %201, %1 : vector<16x16xf32>
    %cst_90 = arith.constant dense<0xFF800000> : vector<16xf32>
    %203 = vector.multi_reduction <maximumf>, %202, %cst_90 [1] : vector<16x16xf32> to vector<16xf32>
    %204 = vector.shape_cast %203 : vector<16xf32> to vector<16x1xf32>
    %205 = vector.broadcast %204 : vector<16x1xf32> to vector<16x16xf32>
    %206 = arith.subf %202, %205 : vector<16x16xf32>
    %207 = math.exp %206 : vector<16x16xf32>
    %cst_91 = arith.constant dense<0.000000e+00> : vector<16xf32>
    %208 = vector.multi_reduction <add>, %207, %cst_91 [1] : vector<16x16xf32> to vector<16xf32>
    %209 = vector.shape_cast %208 : vector<16xf32> to vector<16x1xf32>
    %210 = tpu.reciprocal %209 {approx = true} : vector<16x1xf32> -> vector<16x1xf32>
    %211 = vector.broadcast %210 : vector<16x1xf32> to vector<16x16xf32>
    %212 = arith.mulf %207, %211 : vector<16x16xf32>
    %cst_92 = arith.constant dense<0.000000e+00> : vector<16x8xf32>
    %213 = tpu.matmul %212, %200, %cst_92 {dimension_numbers = #tpu.dot_dimension_numbers<[1], [0], [0], [1], [0, 0, 1, 1], [], []>} : vector<16x16xf32>, vector<16x8xf32>, vector<16x8xf32> -> vector<16x8xf32>
    %214 = vector.extract_strided_slice %179 {offsets = [8, 0], sizes = [8, 32], strides = [1, 1]} : vector<32x32xf32> to vector<8x32xf32>
    %cst_93 = arith.constant dense<0.000000e+00> : vector<16x32xf32>
    %215 = tpu.matmul %213, %214, %cst_93 {dimension_numbers = #tpu.dot_dimension_numbers<[1], [0], [0], [1], [0, 0, 1, 1], [], []>} : vector<16x8xf32>, vector<8x32xf32>, vector<16x32xf32> -> vector<16x32xf32>
    %216 = arith.addf %197, %215 : vector<16x32xf32>
    %217 = vector.extract_strided_slice %177 {offsets = [0, 16], sizes = [16, 8], strides = [1, 1]} : vector<16x96xf32> to vector<16x8xf32>
    %218 = vector.extract_strided_slice %177 {offsets = [0, 48], sizes = [16, 8], strides = [1, 1]} : vector<16x96xf32> to vector<16x8xf32>
    %219 = vector.extract_strided_slice %177 {offsets = [0, 80], sizes = [16, 8], strides = [1, 1]} : vector<16x96xf32> to vector<16x8xf32>
    %cst_94 = arith.constant dense<0.000000e+00> : vector<16x16xf32>
    %220 = tpu.matmul %217, %218, %cst_94 {dimension_numbers = #tpu.dot_dimension_numbers<[1], [1], [0], [0], [0, 0, 1, 0], [], []>} : vector<16x8xf32>, vector<16x8xf32>, vector<16x16xf32> -> vector<16x16xf32>
    %221 = arith.addf %220, %1 : vector<16x16xf32>
    %cst_95 = arith.constant dense<0xFF800000> : vector<16xf32>
    %222 = vector.multi_reduction <maximumf>, %221, %cst_95 [1] : vector<16x16xf32> to vector<16xf32>
    %223 = vector.shape_cast %222 : vector<16xf32> to vector<16x1xf32>
    %224 = vector.broadcast %223 : vector<16x1xf32> to vector<16x16xf32>
    %225 = arith.subf %221, %224 : vector<16x16xf32>
    %226 = math.exp %225 : vector<16x16xf32>
    %cst_96 = arith.constant dense<0.000000e+00> : vector<16xf32>
    %227 = vector.multi_reduction <add>, %226, %cst_96 [1] : vector<16x16xf32> to vector<16xf32>
    %228 = vector.shape_cast %227 : vector<16xf32> to vector<16x1xf32>
    %229 = tpu.reciprocal %228 {approx = true} : vector<16x1xf32> -> vector<16x1xf32>
    %230 = vector.broadcast %229 : vector<16x1xf32> to vector<16x16xf32>
    %231 = arith.mulf %226, %230 : vector<16x16xf32>
    %cst_97 = arith.constant dense<0.000000e+00> : vector<16x8xf32>
    %232 = tpu.matmul %231, %219, %cst_97 {dimension_numbers = #tpu.dot_dimension_numbers<[1], [0], [0], [1], [0, 0, 1, 1], [], []>} : vector<16x16xf32>, vector<16x8xf32>, vector<16x8xf32> -> vector<16x8xf32>
    %233 = vector.extract_strided_slice %179 {offsets = [16, 0], sizes = [8, 32], strides = [1, 1]} : vector<32x32xf32> to vector<8x32xf32>
    %cst_98 = arith.constant dense<0.000000e+00> : vector<16x32xf32>
    %234 = tpu.matmul %232, %233, %cst_98 {dimension_numbers = #tpu.dot_dimension_numbers<[1], [0], [0], [1], [0, 0, 1, 1], [], []>} : vector<16x8xf32>, vector<8x32xf32>, vector<16x32xf32> -> vector<16x32xf32>
    %235 = arith.addf %216, %234 : vector<16x32xf32>
    %236 = vector.extract_strided_slice %177 {offsets = [0, 24], sizes = [16, 8], strides = [1, 1]} : vector<16x96xf32> to vector<16x8xf32>
    %237 = vector.extract_strided_slice %177 {offsets = [0, 56], sizes = [16, 8], strides = [1, 1]} : vector<16x96xf32> to vector<16x8xf32>
    %238 = vector.extract_strided_slice %177 {offsets = [0, 88], sizes = [16, 8], strides = [1, 1]} : vector<16x96xf32> to vector<16x8xf32>
    %cst_99 = arith.constant dense<0.000000e+00> : vector<16x16xf32>
    %239 = tpu.matmul %236, %237, %cst_99 {dimension_numbers = #tpu.dot_dimension_numbers<[1], [1], [0], [0], [0, 0, 1, 0], [], []>} : vector<16x8xf32>, vector<16x8xf32>, vector<16x16xf32> -> vector<16x16xf32>
    %240 = arith.addf %239, %1 : vector<16x16xf32>
    %cst_100 = arith.constant dense<0xFF800000> : vector<16xf32>
    %241 = vector.multi_reduction <maximumf>, %240, %cst_100 [1] : vector<16x16xf32> to vector<16xf32>
    %242 = vector.shape_cast %241 : vector<16xf32> to vector<16x1xf32>
    %243 = vector.broadcast %242 : vector<16x1xf32> to vector<16x16xf32>
    %244 = arith.subf %240, %243 : vector<16x16xf32>
    %245 = math.exp %244 : vector<16x16xf32>
    %cst_101 = arith.constant dense<0.000000e+00> : vector<16xf32>
    %246 = vector.multi_reduction <add>, %245, %cst_101 [1] : vector<16x16xf32> to vector<16xf32>
    %247 = vector.shape_cast %246 : vector<16xf32> to vector<16x1xf32>
    %248 = tpu.reciprocal %247 {approx = true} : vector<16x1xf32> -> vector<16x1xf32>
    %249 = vector.broadcast %248 : vector<16x1xf32> to vector<16x16xf32>
    %250 = arith.mulf %245, %249 : vector<16x16xf32>
    %cst_102 = arith.constant dense<0.000000e+00> : vector<16x8xf32>
    %251 = tpu.matmul %250, %238, %cst_102 {dimension_numbers = #tpu.dot_dimension_numbers<[1], [0], [0], [1], [0, 0, 1, 1], [], []>} : vector<16x16xf32>, vector<16x8xf32>, vector<16x8xf32> -> vector<16x8xf32>
    %252 = vector.extract_strided_slice %179 {offsets = [24, 0], sizes = [8, 32], strides = [1, 1]} : vector<32x32xf32> to vector<8x32xf32>
    %cst_103 = arith.constant dense<0.000000e+00> : vector<16x32xf32>
    %253 = tpu.matmul %251, %252, %cst_103 {dimension_numbers = #tpu.dot_dimension_numbers<[1], [0], [0], [1], [0, 0, 1, 1], [], []>} : vector<16x8xf32>, vector<8x32xf32>, vector<16x32xf32> -> vector<16x32xf32>
    %254 = arith.addf %235, %253 : vector<16x32xf32>
    %c1_104 = arith.constant 1 : index
    %c0_105 = arith.constant 0 : index
    %c0_106 = arith.constant 0 : index
    %255 = vector.load %arg5[%c1_104, %c0_105, %c0_106] : memref<2x1x32xf32, #tpu.memory_space<vmem>>, vector<1x1x32xf32>
    %256 = vector.shape_cast %255 : vector<1x1x32xf32> to vector<1x32xf32>
    %257 = vector.broadcast %256 : vector<1x32xf32> to vector<16x32xf32>
    %258 = arith.addf %254, %257 : vector<16x32xf32>
    %259 = arith.addf %170, %258 : vector<16x32xf32>
    %c1_107 = arith.constant 1 : index
    %c0_108 = arith.constant 0 : index
    %c0_109 = arith.constant 0 : index
    %260 = vector.load %arg6[%c1_107, %c0_108, %c0_109] : memref<2x1x32xf32, #tpu.memory_space<vmem>>, vector<1x1x32xf32>
    %261 = vector.shape_cast %260 : vector<1x1x32xf32> to vector<1x32xf32>
    %c1_110 = arith.constant 1 : index
    %c0_111 = arith.constant 0 : index
    %c0_112 = arith.constant 0 : index
    %262 = vector.load %arg7[%c1_110, %c0_111, %c0_112] : memref<2x1x32xf32, #tpu.memory_space<vmem>>, vector<1x1x32xf32>
    %263 = vector.shape_cast %262 : vector<1x1x32xf32> to vector<1x32xf32>
    %cst_113 = arith.constant dense<0.000000e+00> : vector<16xf32>
    %264 = vector.multi_reduction <add>, %259, %cst_113 [1] : vector<16x32xf32> to vector<16xf32>
    %265 = vector.shape_cast %264 : vector<16xf32> to vector<16x1xf32>
    %cst_114 = arith.constant 3.200000e+01 : f32
    %266 = vector.broadcast %cst_114 : f32 to vector<16x1xf32>
    %267 = arith.divf %265, %266 : vector<16x1xf32>
    %268 = vector.broadcast %267 : vector<16x1xf32> to vector<16x32xf32>
    %269 = arith.subf %259, %268 : vector<16x32xf32>
    %270 = arith.mulf %269, %269 : vector<16x32xf32>
    %cst_115 = arith.constant dense<0.000000e+00> : vector<16xf32>
    %271 = vector.multi_reduction <add>, %270, %cst_115 [1] : vector<16x32xf32> to vector<16xf32>
    %272 = vector.shape_cast %271 : vector<16xf32> to vector<16x1xf32>
    %cst_116 = arith.constant 3.200000e+01 : f32
    %273 = vector.broadcast %cst_116 : f32 to vector<16x1xf32>
    %274 = arith.divf %272, %273 : vector<16x1xf32>
    %275 = vector.broadcast %267 : vector<16x1xf32> to vector<16x32xf32>
    %276 = arith.subf %259, %275 : vector<16x32xf32>
    %cst_117 = arith.constant 9.99999996E-13 : f32
    %277 = vector.broadcast %cst_117 : f32 to vector<16x1xf32>
    %278 = arith.addf %274, %277 : vector<16x1xf32>
    %279 = math.rsqrt %278 : vector<16x1xf32>
    %280 = vector.broadcast %279 : vector<16x1xf32> to vector<16x32xf32>
    %281 = arith.mulf %276, %280 : vector<16x32xf32>
    %282 = vector.broadcast %261 : vector<1x32xf32> to vector<16x32xf32>
    %283 = arith.mulf %281, %282 : vector<16x32xf32>
    %284 = vector.broadcast %263 : vector<1x32xf32> to vector<16x32xf32>
    %285 = arith.addf %283, %284 : vector<16x32xf32>
    %c1_118 = arith.constant 1 : index
    %c0_119 = arith.constant 0 : index
    %c0_120 = arith.constant 0 : index
    %286 = vector.load %arg8[%c1_118, %c0_119, %c0_120] : memref<2x32x64xf32, #tpu.memory_space<vmem>>, vector<1x32x64xf32>
    %287 = vector.shape_cast %286 : vector<1x32x64xf32> to vector<32x64xf32>
    %cst_121 = arith.constant dense<0.000000e+00> : vector<16x64xf32>
    %288 = tpu.matmul %285, %287, %cst_121 {dimension_numbers = #tpu.dot_dimension_numbers<[1], [0], [0], [1], [0, 0, 1, 1], [], []>} : vector<16x32xf32>, vector<32x64xf32>, vector<16x64xf32> -> vector<16x64xf32>
    %c1_122 = arith.constant 1 : index
    %c0_123 = arith.constant 0 : index
    %c0_124 = arith.constant 0 : index
    %289 = vector.load %arg9[%c1_122, %c0_123, %c0_124] : memref<2x1x64xf32, #tpu.memory_space<vmem>>, vector<1x1x64xf32>
    %290 = vector.shape_cast %289 : vector<1x1x64xf32> to vector<1x64xf32>
    %291 = vector.broadcast %290 : vector<1x64xf32> to vector<16x64xf32>
    %292 = arith.addf %288, %291 : vector<16x64xf32>
    %cst_125 = arith.constant 5.000000e-01 : f32
    %293 = vector.broadcast %cst_125 : f32 to vector<16x64xf32>
    %294 = arith.mulf %293, %292 : vector<16x64xf32>
    %cst_126 = arith.constant 4.471500e-02 : f32
    %295 = vector.broadcast %cst_126 : f32 to vector<16x64xf32>
    %296 = arith.mulf %295, %292 : vector<16x64xf32>
    %297 = arith.mulf %296, %292 : vector<16x64xf32>
    %298 = arith.mulf %297, %292 : vector<16x64xf32>
    %299 = arith.addf %292, %298 : vector<16x64xf32>
    %cst_127 = arith.constant 0.797884583 : f32
    %300 = vector.broadcast %cst_127 : f32 to vector<16x64xf32>
    %301 = arith.mulf %300, %299 : vector<16x64xf32>
    %302 = math.tanh %301 : vector<16x64xf32>
    %cst_128 = arith.constant 1.000000e+00 : f32
    %303 = vector.broadcast %cst_128 : f32 to vector<16x64xf32>
    %304 = arith.addf %303, %302 : vector<16x64xf32>
    %305 = arith.mulf %294, %304 : vector<16x64xf32>
    %c1_129 = arith.constant 1 : index
    %c0_130 = arith.constant 0 : index
    %c0_131 = arith.constant 0 : index
    %306 = vector.load %arg10[%c1_129, %c0_130, %c0_131] : memref<2x64x32xf32, #tpu.memory_space<vmem>>, vector<1x64x32xf32>
    %307 = vector.shape_cast %306 : vector<1x64x32xf32> to vector<64x32xf32>
    %cst_132 = arith.constant dense<0.000000e+00> : vector<16x32xf32>
    %308 = tpu.matmul %305, %307, %cst_132 {dimension_numbers = #tpu.dot_dimension_numbers<[1], [0], [0], [1], [0, 0, 1, 1], [], []>} : vector<16x64xf32>, vector<64x32xf32>, vector<16x32xf32> -> vector<16x32xf32>
    %c1_133 = arith.constant 1 : index
    %c0_134 = arith.constant 0 : index
    %c0_135 = arith.constant 0 : index
    %309 = vector.load %arg11[%c1_133, %c0_134, %c0_135] : memref<2x1x32xf32, #tpu.memory_space<vmem>>, vector<1x1x32xf32>
    %310 = vector.shape_cast %309 : vector<1x1x32xf32> to vector<1x32xf32>
    %311 = vector.broadcast %310 : vector<1x32xf32> to vector<16x32xf32>
    %312 = arith.addf %308, %311 : vector<16x32xf32>
    %313 = arith.addf %312, %285 : vector<16x32xf32>
    %c1_136 = arith.constant 1 : index
    %c0_137 = arith.constant 0 : index
    %c0_138 = arith.constant 0 : index
    %314 = vector.load %arg12[%c1_136, %c0_137, %c0_138] : memref<2x1x32xf32, #tpu.memory_space<vmem>>, vector<1x1x32xf32>
    %315 = vector.shape_cast %314 : vector<1x1x32xf32> to vector<1x32xf32>
    %c1_139 = arith.constant 1 : index
    %c0_140 = arith.constant 0 : index
    %c0_141 = arith.constant 0 : index
    %316 = vector.load %arg13[%c1_139, %c0_140, %c0_141] : memref<2x1x32xf32, #tpu.memory_space<vmem>>, vector<1x1x32xf32>
    %317 = vector.shape_cast %316 : vector<1x1x32xf32> to vector<1x32xf32>
    %cst_142 = arith.constant dense<0.000000e+00> : vector<16xf32>
    %318 = vector.multi_reduction <add>, %313, %cst_142 [1] : vector<16x32xf32> to vector<16xf32>
    %319 = vector.shape_cast %318 : vector<16xf32> to vector<16x1xf32>
    %cst_143 = arith.constant 3.200000e+01 : f32
    %320 = vector.broadcast %cst_143 : f32 to vector<16x1xf32>
    %321 = arith.divf %319, %320 : vector<16x1xf32>
    %322 = vector.broadcast %321 : vector<16x1xf32> to vector<16x32xf32>
    %323 = arith.subf %313, %322 : vector<16x32xf32>
    %324 = arith.mulf %323, %323 : vector<16x32xf32>
    %cst_144 = arith.constant dense<0.000000e+00> : vector<16xf32>
    %325 = vector.multi_reduction <add>, %324, %cst_144 [1] : vector<16x32xf32> to vector<16xf32>
    %326 = vector.shape_cast %325 : vector<16xf32> to vector<16x1xf32>
    %cst_145 = arith.constant 3.200000e+01 : f32
    %327 = vector.broadcast %cst_145 : f32 to vector<16x1xf32>
    %328 = arith.divf %326, %327 : vector<16x1xf32>
    %329 = vector.broadcast %321 : vector<16x1xf32> to vector<16x32xf32>
    %330 = arith.subf %313, %329 : vector<16x32xf32>
    %cst_146 = arith.constant 9.99999996E-13 : f32
    %331 = vector.broadcast %cst_146 : f32 to vector<16x1xf32>
    %332 = arith.addf %328, %331 : vector<16x1xf32>
    %333 = math.rsqrt %332 : vector<16x1xf32>
    %334 = vector.broadcast %333 : vector<16x1xf32> to vector<16x32xf32>
    %335 = arith.mulf %330, %334 : vector<16x32xf32>
    %336 = vector.broadcast %315 : vector<1x32xf32> to vector<16x32xf32>
    %337 = arith.mulf %335, %336 : vector<16x32xf32>
    %338 = vector.broadcast %317 : vector<1x32xf32> to vector<16x32xf32>
    %339 = arith.addf %337, %338 : vector<16x32xf32>
    %c0_147 = arith.constant 0 : index
    %c0_148 = arith.constant 0 : index
    %340 = vector.load %arg14[%c0_147, %c0_148] : memref<16x32xf32, #tpu.memory_space<vmem>>, vector<16x32xf32>
    tpu.vector_store %arg14[%c0_147, %c0_148], %339 {strides = array<i32>} : memref<16x32xf32, #tpu.memory_space<vmem>>, vector<16x32xf32>,
    return
  }
}

</mosaic_0001>

<llo_original>
// kernel: mul.17
$region0: #{mul.17}
  %s0 = inlined_call_operand.vmem [shape: f32[4,8], index: 0, kind: input, shape index: {}]
  %s1 = inlined_call_operand.vmem [shape: f32[32], index: 1, kind: output, shape index: {}]
  $region1: #{mul.17} parent=0
    #allocation0 [shape = 'u8[4096]{0}', space=vmem, size = 0x1000, scoped, tag = 'scoped mem for output reshape']
    #allocation1 [shape = 'u8[4096]{0}', space=vmem, size = 0x1000, scoped, tag = 'scoped mem for input reshape']
    %s3 = sshll.u32 1, 4
    %s4 = ssub.s32 %s3, 1
    %v5 = vld [vmem:[%s0] sm:%s4]
    %6 = vst [vmem:[#allocation1] sm:%s4] %v5
    %v7 = vld [vmem:[#allocation1] sm:$0x1]
    %vm8 = vcmask 64512
    %9 = vst.msk [vmem:[#allocation0] sm:$0x1] %vm8, %v7
    %s10 = scalar_lea.vmem [#allocation1], 3
    %v11 = vld [vmem:[%s10] sm:$0x1]
    %12 = vrot.lane.b32.xlu0 %v11, 24
    %v13 = vpop.permute.xlu0 %12
    %vm14 = vcmask 261312
    %15 = vst.msk [vmem:[#allocation0] sm:$0x1] %vm14, %v13
    %s16 = scalar_lea.vmem [#allocation1], 2
    %v17 = vld [vmem:[%s16] sm:$0x1]
    %18 = vrot.lane.b32.xlu0 %v17, 16
    %v19 = vpop.permute.xlu0 %18
    %vm20 = vcmask 195712
    %21 = vst.msk [vmem:[#allocation0] sm:$0x1] %vm20, %v19
    %s22 = scalar_lea.vmem [#allocation1], 1
    %v23 = vld [vmem:[%s22] sm:$0x1]
    %24 = vrot.lane.b32.xlu0 %v23, 8
    %v25 = vpop.permute.xlu0 %24
    %vm26 = vcmask 130112
    %27 = vst.msk [vmem:[#allocation0] sm:$0x1] %vm26, %v25
    %s29 = sshll.u32 1, 1
    %s30 = ssub.s32 %s29, 1
    %v32 = vld [vmem:[#allocation0] sm:%s30]
    %s33 = sshll.u32 1, 1
    %s34 = ssub.s32 %s33, 1
    %35 = vst [vmem:[%s1] sm:%s34] %v32

// kernel: mul.20
$region0: #{mul.20}
  #allocation0 [shape = 's32[1]{0}', space=sflag, size = 0x4, scoped, tag = 'scoped memory for mul.20']
  %s0 = inlined_call_operand.vmem [shape: f32[32], index: 0, kind: input, shape index: {}]
  %s1 = inlined_call_operand.vmem [shape: f32[32], index: 1, kind: input, shape index: {}]
  %s2 = inlined_call_operand.vmem [shape: f32[32], index: 2, kind: output, shape index: {}]
  %v3 = vld [vmem:[%s0] sm:$0x1]
  %v4 = vld [vmem:[%s1] sm:$0x1]
  %5 = xla_tuple %v3, %v4
  %6 = xla_tuple %5
  %v7 = vmul.f32 %v3, %v4
  %8 = xla_tuple %v7
  %9 = vst [vmem:[%s2] sm:$0x1] %v7

// kernel: albert_layer_group_forward.1
$region0: #{albert_layer_group_forward.1}
  #allocation0 [shape = 'u32[]', space=smem, size = 0x4, offset = 0x4, fixed_abs, tag = 'smem constant byte address 0x4 - core index']
  #allocation1 [shape = 'u32[144,128]{1,0:T(1,128)}', space=vmem, size = 0x12000, scoped, tag = 'internal scratch']
  %s0 = inlined_call_operand.vmem [shape: f32[16,32], index: 0, kind: input, shape index: {}]
  %s1 = inlined_call_operand.vmem [shape: f32[16,16], index: 1, kind: input, shape index: {}]
  %s2 = inlined_call_operand.vmem [shape: f32[2,32,96], index: 2, kind: input, shape index: {}]
  %s3 = inlined_call_operand.vmem [shape: f32[2,1,96], index: 3, kind: input, shape index: {}]
  %s4 = inlined_call_operand.vmem [shape: f32[2,32,32], index: 4, kind: input, shape index: {}]
  %s5 = inlined_call_operand.vmem [shape: f32[2,1,32], index: 5, kind: input, shape index: {}]
  %s6 = inlined_call_operand.vmem [shape: f32[2,1,32], index: 6, kind: input, shape index: {}]
  %s7 = inlined_call_operand.vmem [shape: f32[2,1,32], index: 7, kind: input, shape index: {}]
  %s8 = inlined_call_operand.vmem [shape: f32[2,32,64], index: 8, kind: input, shape index: {}]
  %s9 = inlined_call_operand.vmem [shape: f32[2,1,64], index: 9, kind: input, shape index: {}]
  %s10 = inlined_call_operand.vmem [shape: f32[2,64,32], index: 10, kind: input, shape index: {}]
  %s11 = inlined_call_operand.vmem [shape: f32[2,1,32], index: 11, kind: input, shape index: {}]
  %s12 = inlined_call_operand.vmem [shape: f32[2,1,32], index: 12, kind: input, shape index: {}]
  %s13 = inlined_call_operand.vmem [shape: f32[2,1,32], index: 13, kind: input, shape index: {}]
  %s14 = inlined_call_operand.hbm [shape: f32[16,32], index: 14, kind: output, shape index: {}]
  %s15 = sld [smem:[#allocation0]]
  $region66: #{albert_layer_group_forward.1} parent=0
    _
  %s17 = ssub.s32 1, %s15
  %s18 = scalar_select 0, %s17, %s15
  $region1: #{albert_layer_group_forward.1} parent=0
    #allocation2 [shape = 'u8[8192]{0}', space=vmem, size = 0x2000, scoped, tag = 'output window, operand 0, single buffered']
    #allocation3 [shape = 's32[1]{0}', space=sflag, size = 0x4, scoped, tag = 'scoped memory for albert_layer_group_forward.1']
    %19 = vsyncpa [#allocation3], 0
    // Predicated region
    $region2: #{albert_layer_group_forward.1} parent=1 // pred_check
      _
    $region3: #{albert_layer_group_forward.1} parent=1 // pred_check_branch
      %21 = sbr.rel (0) target = $region5
    $region4: #{albert_layer_group_forward.1} parent=1 // pred_region
      _
    $region5: #{albert_layer_group_forward.1} parent=1 // pred_fallthru
      _
    // Predicated region
    $region6: #{albert_layer_group_forward.1} parent=1 // pred_check
      _
    $region7: #{albert_layer_group_forward.1} parent=1 // pred_check_branch
      %23 = sbr.rel (0) target = $region9
    $region8: #{albert_layer_group_forward.1} parent=1 // pred_region
      _
    $region9: #{albert_layer_group_forward.1} parent=1 // pred_fallthru
      _
    // Predicated region
    $region10: #{albert_layer_group_forward.1} parent=1 // pred_check
      _
    $region11: #{albert_layer_group_forward.1} parent=1 // pred_check_branch
      %25 = sbr.rel (0) target = $region13
    $region12: #{albert_layer_group_forward.1} parent=1 // pred_region
      _
    $region13: #{albert_layer_group_forward.1} parent=1 // pred_fallthru
      _
    // Predicated region
    $region14: #{albert_layer_group_forward.1} parent=1 // pred_check
      _
    $region15: #{albert_layer_group_forward.1} parent=1 // pred_check_branch
      %27 = sbr.rel (0) target = $region17
    $region16: #{albert_layer_group_forward.1} parent=1 // pred_region
      _
    $region17: #{albert_layer_group_forward.1} parent=1 // pred_fallthru
      _
    // Predicated region
    $region18: #{albert_layer_group_forward.1} parent=1 // pred_check
      _
    $region19: #{albert_layer_group_forward.1} parent=1 // pred_check_branch
      %29 = sbr.rel (0) target = $region21
    $region20: #{albert_layer_group_forward.1} parent=1 // pred_region
      _
    $region21: #{albert_layer_group_forward.1} parent=1 // pred_fallthru
      _
    // Predicated region
    $region22: #{albert_layer_group_forward.1} parent=1 // pred_check
      _
    $region23: #{albert_layer_group_forward.1} parent=1 // pred_check_branch
      %31 = sbr.rel (0) target = $region25
    $region24: #{albert_layer_group_forward.1} parent=1 // pred_region
      _
    $region25: #{albert_layer_group_forward.1} parent=1 // pred_fallthru
      _
    // Predicated region
    $region26: #{albert_layer_group_forward.1} parent=1 // pred_check
      _
    $region27: #{albert_layer_group_forward.1} parent=1 // pred_check_branch
      %33 = sbr.rel (0) target = $region29
    $region28: #{albert_layer_group_forward.1} parent=1 // pred_region
      _
    $region29: #{albert_layer_group_forward.1} parent=1 // pred_fallthru
      _
    // Predicated region
    $region30: #{albert_layer_group_forward.1} parent=1 // pred_check
      _
    $region31: #{albert_layer_group_forward.1} parent=1 // pred_check_branch
      %35 = sbr.rel (0) target = $region33
    $region32: #{albert_layer_group_forward.1} parent=1 // pred_region
      _
    $region33: #{albert_layer_group_forward.1} parent=1 // pred_fallthru
      _
    // Predicated region
    $region34: #{albert_layer_group_forward.1} parent=1 // pred_check
      _
    $region35: #{albert_layer_group_forward.1} parent=1 // pred_check_branch
      %37 = sbr.rel (0) target = $region37
    $region36: #{albert_layer_group_forward.1} parent=1 // pred_region
      _
    $region37: #{albert_layer_group_forward.1} parent=1 // pred_fallthru
      _
    // Predicated region
    $region38: #{albert_layer_group_forward.1} parent=1 // pred_check
      _
    $region39: #{albert_layer_group_forward.1} parent=1 // pred_check_branch
      %39 = sbr.rel (0) target = $region41
    $region40: #{albert_layer_group_forward.1} parent=1 // pred_region
      _
    $region41: #{albert_layer_group_forward.1} parent=1 // pred_fallthru
      _
    // Predicated region
    $region42: #{albert_layer_group_forward.1} parent=1 // pred_check
      _
    $region43: #{albert_layer_group_forward.1} parent=1 // pred_check_branch
      %41 = sbr.rel (0) target = $region45
    $region44: #{albert_layer_group_forward.1} parent=1 // pred_region
      _
    $region45: #{albert_layer_group_forward.1} parent=1 // pred_fallthru
      _
    // Predicated region
    $region46: #{albert_layer_group_forward.1} parent=1 // pred_check
      _
    $region47: #{albert_layer_group_forward.1} parent=1 // pred_check_branch
      %43 = sbr.rel (0) target = $region49
    $region48: #{albert_layer_group_forward.1} parent=1 // pred_region
      _
    $region49: #{albert_layer_group_forward.1} parent=1 // pred_fallthru
      _
    // Predicated region
    $region50: #{albert_layer_group_forward.1} parent=1 // pred_check
      _
    $region51: #{albert_layer_group_forward.1} parent=1 // pred_check_branch
      %45 = sbr.rel (0) target = $region53
    $region52: #{albert_layer_group_forward.1} parent=1 // pred_region
      _
    $region53: #{albert_layer_group_forward.1} parent=1 // pred_fallthru
      _
    // Predicated region
    $region54: #{albert_layer_group_forward.1} parent=1 // pred_check
      _
    $region55: #{albert_layer_group_forward.1} parent=1 // pred_check_branch
      %47 = sbr.rel (0) target = $region57
    $region56: #{albert_layer_group_forward.1} parent=1 // pred_region
      _
    $region57: #{albert_layer_group_forward.1} parent=1 // pred_fallthru
      _
    %v48 = vld [vmem:[%s0] sm:$0xff]
    %v49 = vld [vmem:[%s0 + $0x8] sm:$0xff]
    %v50 = vld [vmem:[%s1] sm:$0xff]
    %v51 = vld [vmem:[%s1 + $0x8] sm:$0xff]
    %v52 = vld [vmem:[%s2] sm:$0xff]
    %v53 = vld [vmem:[%s2 + $0x8] sm:$0xff]
    %v54 = vld [vmem:[%s2 + $0x10] sm:$0xff]
    %v55 = vld [vmem:[%s2 + $0x18] sm:$0xff]
    %v56 = vld [vmem:[%s3] sm:$0x1]
    %v58 = vlaneseq
    %v59 = vshrl.u32 %v58, 7
    %v60 = vsub.s32 0, %v59
    %v61 = vrot.slane %v56, %v60
    %vm63 = vcmask 261120
    %v65 = vsel %vm63, %v48, 0
    %v68 = vsel %vm63, %v49, 0
    %70 = vmatprep.subr.mxu0 0.0
    %71 = vmatpush1.msra.mxu0 0.0
    %72 = vmatprep.subr.mxu0 0.0
    %73 = vmatpush1.msra.mxu0 0.0
    %74 = vmatprep.subr.mxu0 0.0
    %75 = vmatpush1.msra.mxu0 0.0
    %76 = vmatprep.subr.mxu0 0.0
    %77 = vmatpush1.msra.mxu0 0.0
    %78 = vmatprep.subr.mxu0 0.0
    %79 = vmatpush1.msra.mxu0 0.0
    %80 = vmatprep.subr.mxu0 0.0
    %81 = vmatpush1.msra.mxu0 0.0
    %82 = vmatprep.subr.mxu0 0.0
    %83 = vmatpush1.msra.mxu0 0.0
    %84 = vmatprep.subr.mxu0 0.0
    %85 = vmatpush1.msra.mxu0 0.0
    %86 = vmatprep.subr.mxu0 0.0
    %87 = vmatpush1.msra.mxu0 0.0
    %88 = vmatprep.subr.mxu0 0.0
    %89 = vmatpush1.msra.mxu0 0.0
    %90 = vmatprep.subr.mxu0 0.0
    %91 = vmatpush1.msra.mxu0 0.0
    %92 = vmatprep.subr.mxu0 0.0
    %93 = vmatpush1.msra.mxu0 0.0
    %94 = vmatprep.subr.mxu0 0.0
    %95 = vmatpush1.msra.mxu0 %v55
    %96 = vmatprep.subr.mxu0 0.0
    %97 = vmatpush1.msra.mxu0 %v54
    %98 = vmatprep.subr.mxu0 0.0
    %99 = vmatpush1.msra.mxu0 %v53
    %100 = vmatprep.subr.mxu0 0.0
    %101 = vmatpush1.msra.mxu0 %v52
    %102 = vmatprep.subr.mxu0 0.0
    %103 = vmatpush2.msra.mxu0 0.0
    %104 = vmatprep.subr.mxu0 0.0
    %105 = vmatpush2.msra.mxu0 0.0
    %106 = vmatprep.subr.mxu0 0.0
    %107 = vmatpush2.msra.mxu0 0.0
    %108 = vmatprep.subr.mxu0 0.0
    %109 = vmatpush2.msra.mxu0 0.0
    %110 = vmatprep.subr.mxu0 0.0
    %111 = vmatpush2.msra.mxu0 0.0
    %112 = vmatprep.subr.mxu0 0.0
    %113 = vmatpush2.msra.mxu0 0.0
    %114 = vmatprep.subr.mxu0 0.0
    %115 = vmatpush2.msra.mxu0 0.0
    %116 = vmatprep.subr.mxu0 0.0
    %117 = vmatpush2.msra.mxu0 0.0
    %118 = vmatprep.subr.mxu0 0.0
    %119 = vmatpush2.msra.mxu0 0.0
    %120 = vmatprep.subr.mxu0 0.0
    %121 = vmatpush2.msra.mxu0 0.0
    %122 = vmatprep.subr.mxu0 0.0
    %123 = vmatpush2.msra.mxu0 0.0
    %124 = vmatprep.subr.mxu0 0.0
    %125 = vmatpush2.msra.mxu0 0.0
    %126 = vmatprep.subr.mxu0 0.0
    %127 = vmatpush2.msra.mxu0 0.0
    %128 = vmatprep.subr.mxu0 0.0
    %129 = vmatpush2.msra.mxu0 0.0
    %130 = vmatprep.subr.mxu0 0.0
    %131 = vmatpush2.msra.mxu0 0.0
    %132 = vmatprep.subr.mxu0 0.0
    %133 = vmatpush2.msra.mxu0 0.0
    %134 = vmatprep.mubr.f32.mxu0 0.0
    %135 = vmatmul.mubr.f32.gmra.mxu0 %v65
    %v136 = vpop.f32.mrf.mxu0
    %v137 = vadd.f32 %v61, %v136
    %v138 = vpop.f32.mrf.mxu0
    %139 = vmatprep.mubr.f32.mxu0 0.0
    %140 = vmatmul.mubr.f32.gmra.mxu0 %v68
    %v141 = vpop.f32.mrf.mxu0
    %v142 = vadd.f32 %v61, %v141
    %v143 = vpop.f32.mrf.mxu0
    %144 = vdwg.mxu0
    %v145 = vld [vmem:[%s4] sm:$0xff]
    %v146 = vld [vmem:[%s4 + $0x8] sm:$0xff]
    %v147 = vld [vmem:[%s4 + $0x10] sm:$0xff]
    %v148 = vld [vmem:[%s4 + $0x18] sm:$0xff]
    %151 = vrot.lane.b32.xlu0 %v137, 96
    %v152 = vpop.permute.xlu0 %151
    %153 = vrot.lane.b32.xlu0 %v142, 96
    %v154 = vpop.permute.xlu0 %153
    %vm155 = vcmask 64512
    %v156 = vsel %vm155, %v137, 0
    %v158 = vsel %vm155, %v142, 0
    %v160 = vsel %vm155, %v152, 0
    %v162 = vsel %vm155, %v154, 0
    %164 = vmatprep.subr.mxu0 0.0
    %165 = vmatpush1.xpose.msra.mxu0 0.0
    %166 = vmatprep.subr.mxu0 0.0
    %167 = vmatpush1.xpose.msra.mxu0 0.0
    %168 = vmatprep.subr.mxu0 0.0
    %169 = vmatpush1.xpose.msra.mxu0 0.0
    %170 = vmatprep.subr.mxu0 0.0
    %171 = vmatpush1.xpose.msra.mxu0 0.0
    %172 = vmatprep.subr.mxu0 0.0
    %173 = vmatpush1.xpose.msra.mxu0 0.0
    %174 = vmatprep.subr.mxu0 0.0
    %175 = vmatpush1.xpose.msra.mxu0 0.0
    %176 = vmatprep.subr.mxu0 0.0
    %177 = vmatpush1.xpose.msra.mxu0 0.0
    %178 = vmatprep.subr.mxu0 0.0
    %179 = vmatpush1.xpose.msra.mxu0 0.0
    %180 = vmatprep.subr.mxu0 0.0
    %181 = vmatpush1.xpose.msra.mxu0 0.0
    %182 = vmatprep.subr.mxu0 0.0
    %183 = vmatpush1.xpose.msra.mxu0 0.0
    %184 = vmatprep.subr.mxu0 0.0
    %185 = vmatpush1.xpose.msra.mxu0 0.0
    %186 = vmatprep.subr.mxu0 0.0
    %187 = vmatpush1.xpose.msra.mxu0 0.0
    %188 = vmatprep.subr.mxu0 0.0
    %189 = vmatpush1.xpose.msra.mxu0 0.0
    %190 = vmatprep.subr.mxu0 0.0
    %191 = vmatpush1.xpose.msra.mxu0 0.0
    %192 = vmatprep.subr.mxu0 0.0
    %193 = vmatpush1.xpose.msra.mxu0 %v162
    %194 = vmatprep.subr.mxu0 0.0
    %195 = vmatpush1.xpose.msra.mxu0 %v160
    %196 = vmatprep.subr.mxu0 0.0
    %197 = vmatpush2.xpose.msra.mxu0 0.0
    %198 = vmatprep.subr.mxu0 0.0
    %199 = vmatpush2.xpose.msra.mxu0 0.0
    %200 = vmatprep.subr.mxu0 0.0
    %201 = vmatpush2.xpose.msra.mxu0 0.0
    %202 = vmatprep.subr.mxu0 0.0
    %203 = vmatpush2.xpose.msra.mxu0 0.0
    %204 = vmatprep.subr.mxu0 0.0
    %205 = vmatpush2.xpose.msra.mxu0 0.0
    %206 = vmatprep.subr.mxu0 0.0
    %207 = vmatpush2.xpose.msra.mxu0 0.0
    %208 = vmatprep.subr.mxu0 0.0
    %209 = vmatpush2.xpose.msra.mxu0 0.0
    %210 = vmatprep.subr.mxu0 0.0
    %211 = vmatpush2.xpose.msra.mxu0 0.0
    %212 = vmatprep.subr.mxu0 0.0
    %213 = vmatpush2.xpose.msra.mxu0 0.0
    %214 = vmatprep.subr.mxu0 0.0
    %215 = vmatpush2.xpose.msra.mxu0 0.0
    %216 = vmatprep.subr.mxu0 0.0
    %217 = vmatpush2.xpose.msra.mxu0 0.0
    %218 = vmatprep.subr.mxu0 0.0
    %219 = vmatpush2.xpose.msra.mxu0 0.0
    %220 = vmatprep.subr.mxu0 0.0
    %221 = vmatpush2.xpose.msra.mxu0 0.0
    %222 = vmatprep.subr.mxu0 0.0
    %223 = vmatpush2.xpose.msra.mxu0 0.0
    %224 = vmatprep.subr.mxu0 0.0
    %225 = vmatpush2.xpose.msra.mxu0 0.0
    %226 = vmatprep.subr.mxu0 0.0
    %227 = vmatpush2.xpose.msra.mxu0 0.0
    %228 = vmatprep.mubr.f32.mxu0 0.0
    %229 = vmatmul.mubr.f32.gmra.mxu0 %v156
    %v230 = vpop.f32.mrf.mxu0
    %v231 = vadd.f32 %v50, %v230
    %v232 = vpop.f32.mrf.mxu0
    %233 = vmatprep.mubr.f32.mxu0 0.0
    %234 = vmatmul.mubr.f32.gmra.mxu0 %v158
    %v235 = vpop.f32.mrf.mxu0
    %v236 = vadd.f32 %v51, %v235
    %v237 = vpop.f32.mrf.mxu0
    %238 = vdwg.mxu0
    %vm239 = vcmask 130048
    %v240 = vsel %vm239, %v231, -inf
    %241 = vmax.xlane.f32.xlu0 %v240
    %v242 = vpop.xlane.xlu0 %241
    %v243 = vsel %vm239, %v236, -inf
    %244 = vmax.xlane.f32.xlu0 %v243
    %v245 = vpop.xlane.xlu0 %244
    %v246 = vsub.f32 %v231, %v242
    %v247 = vsub.f32 %v236, %v245
    %v248 = vmul.f32 %v246, 1.442695
    %v249 = vpow.pop %v248
    %v250 = vmul.f32 %v247, 1.442695
    %v251 = vpow.pop %v250
    %v252 = vsel %vm239, %v249, 0.0
    %253 = vadd.xlane.f32.xlu0 %v252
    %v254 = vpop.xlane.xlu0 %253
    %v255 = vsel %vm239, %v251, 0.0
    %256 = vadd.xlane.f32.xlu0 %v255
    %v257 = vpop.xlane.xlu0 %256
    %v258 = vrcp.pop %v254
    %v259 = vrcp.pop %v257
    %v260 = vmul.f32 %v249, %v258
    %v261 = vmul.f32 %v251, %v259
    %262 = vrot.lane.b32.xlu0 %v137, 64
    %v263 = vpop.permute.xlu0 %262
    %264 = vrot.lane.b32.xlu0 %v142, 64
    %v265 = vpop.permute.xlu0 %264
    %v269 = vsel %vm239, %v260, 0
    %v272 = vsel %vm239, %v261, 0
    %274 = vmatprep.subr.mxu0 0.0
    %275 = vmatpush1.msra.mxu0 0.0
    %276 = vmatprep.subr.mxu0 0.0
    %277 = vmatpush1.msra.mxu0 0.0
    %278 = vmatprep.subr.mxu0 0.0
    %279 = vmatpush1.msra.mxu0 0.0
    %280 = vmatprep.subr.mxu0 0.0
    %281 = vmatpush1.msra.mxu0 0.0
    %282 = vmatprep.subr.mxu0 0.0
    %283 = vmatpush1.msra.mxu0 0.0
    %284 = vmatprep.subr.mxu0 0.0
    %285 = vmatpush1.msra.mxu0 0.0
    %286 = vmatprep.subr.mxu0 0.0
    %287 = vmatpush1.msra.mxu0 0.0
    %288 = vmatprep.subr.mxu0 0.0
    %289 = vmatpush1.msra.mxu0 0.0
    %290 = vmatprep.subr.mxu0 0.0
    %291 = vmatpush1.msra.mxu0 0.0
    %292 = vmatprep.subr.mxu0 0.0
    %293 = vmatpush1.msra.mxu0 0.0
    %294 = vmatprep.subr.mxu0 0.0
    %295 = vmatpush1.msra.mxu0 0.0
    %296 = vmatprep.subr.mxu0 0.0
    %297 = vmatpush1.msra.mxu0 0.0
    %298 = vmatprep.subr.mxu0 0.0
    %299 = vmatpush1.msra.mxu0 0.0
    %300 = vmatprep.subr.mxu0 0.0
    %301 = vmatpush1.msra.mxu0 0.0
    %302 = vmatprep.subr.mxu0 0.0
    %303 = vmatpush1.msra.mxu0 %v265
    %304 = vmatprep.subr.mxu0 0.0
    %305 = vmatpush1.msra.mxu0 %v263
    %306 = vmatprep.subr.mxu0 0.0
    %307 = vmatpush2.msra.mxu0 0.0
    %308 = vmatprep.subr.mxu0 0.0
    %309 = vmatpush2.msra.mxu0 0.0
    %310 = vmatprep.subr.mxu0 0.0
    %311 = vmatpush2.msra.mxu0 0.0
    %312 = vmatprep.subr.mxu0 0.0
    %313 = vmatpush2.msra.mxu0 0.0
    %314 = vmatprep.subr.mxu0 0.0
    %315 = vmatpush2.msra.mxu0 0.0
    %316 = vmatprep.subr.mxu0 0.0
    %317 = vmatpush2.msra.mxu0 0.0
    %318 = vmatprep.subr.mxu0 0.0
    %319 = vmatpush2.msra.mxu0 0.0
    %320 = vmatprep.subr.mxu0 0.0
    %321 = vmatpush2.msra.mxu0 0.0
    %322 = vmatprep.subr.mxu0 0.0
    %323 = vmatpush2.msra.mxu0 0.0
    %324 = vmatprep.subr.mxu0 0.0
    %325 = vmatpush2.msra.mxu0 0.0
    %326 = vmatprep.subr.mxu0 0.0
    %327 = vmatpush2.msra.mxu0 0.0
    %328 = vmatprep.subr.mxu0 0.0
    %329 = vmatpush2.msra.mxu0 0.0
    %330 = vmatprep.subr.mxu0 0.0
    %331 = vmatpush2.msra.mxu0 0.0
    %332 = vmatprep.subr.mxu0 0.0
    %333 = vmatpush2.msra.mxu0 0.0
    %334 = vmatprep.subr.mxu0 0.0
    %335 = vmatpush2.msra.mxu0 0.0
    %336 = vmatprep.subr.mxu0 0.0
    %337 = vmatpush2.msra.mxu0 0.0
    %338 = vmatprep.mubr.f32.mxu0 0.0
    %339 = vmatmul.mubr.f32.gmra.mxu0 %v269
    %v340 = vpop.f32.mrf.mxu0
    %v341 = vadd.f32 0.0, %v340
    %v342 = vpop.f32.mrf.mxu0
    %343 = vmatprep.mubr.f32.mxu0 0.0
    %344 = vmatmul.mubr.f32.gmra.mxu0 %v272
    %v345 = vpop.f32.mrf.mxu0
    %v346 = vadd.f32 0.0, %v345
    %v347 = vpop.f32.mrf.mxu0
    %348 = vdwg.mxu0
    %349 = vrot.lane.b32.xlu0 %v137, 120
    %v350 = vpop.permute.xlu0 %349
    %351 = vrot.lane.b32.xlu0 %v142, 120
    %v352 = vpop.permute.xlu0 %351
    %353 = vrot.lane.b32.xlu0 %v137, 88
    %v354 = vpop.permute.xlu0 %353
    %355 = vrot.lane.b32.xlu0 %v142, 88
    %v356 = vpop.permute.xlu0 %355
    %v357 = vsel %vm155, %v350, 0
    %v359 = vsel %vm155, %v352, 0
    %v361 = vsel %vm155, %v354, 0
    %v363 = vsel %vm155, %v356, 0
    %365 = vmatprep.subr.mxu0 0.0
    %366 = vmatpush1.xpose.msra.mxu0 0.0
    %367 = vmatprep.subr.mxu0 0.0
    %368 = vmatpush1.xpose.msra.mxu0 0.0
    %369 = vmatprep.subr.mxu0 0.0
    %370 = vmatpush1.xpose.msra.mxu0 0.0
    %371 = vmatprep.subr.mxu0 0.0
    %372 = vmatpush1.xpose.msra.mxu0 0.0
    %373 = vmatprep.subr.mxu0 0.0
    %374 = vmatpush1.xpose.msra.mxu0 0.0
    %375 = vmatprep.subr.mxu0 0.0
    %376 = vmatpush1.xpose.msra.mxu0 0.0
    %377 = vmatprep.subr.mxu0 0.0
    %378 = vmatpush1.xpose.msra.mxu0 0.0
    %379 = vmatprep.subr.mxu0 0.0
    %380 = vmatpush1.xpose.msra.mxu0 0.0
    %381 = vmatprep.subr.mxu0 0.0
    %382 = vmatpush1.xpose.msra.mxu0 0.0
    %383 = vmatprep.subr.mxu0 0.0
    %384 = vmatpush1.xpose.msra.mxu0 0.0
    %385 = vmatprep.subr.mxu0 0.0
    %386 = vmatpush1.xpose.msra.mxu0 0.0
    %387 = vmatprep.subr.mxu0 0.0
    %388 = vmatpush1.xpose.msra.mxu0 0.0
    %389 = vmatprep.subr.mxu0 0.0
    %390 = vmatpush1.xpose.msra.mxu0 0.0
    %391 = vmatprep.subr.mxu0 0.0
    %392 = vmatpush1.xpose.msra.mxu0 0.0
    %393 = vmatprep.subr.mxu0 0.0
    %394 = vmatpush1.xpose.msra.mxu0 %v363
    %395 = vmatprep.subr.mxu0 0.0
    %396 = vmatpush1.xpose.msra.mxu0 %v361
    %397 = vmatprep.subr.mxu0 0.0
    %398 = vmatpush2.xpose.msra.mxu0 0.0
    %399 = vmatprep.subr.mxu0 0.0
    %400 = vmatpush2.xpose.msra.mxu0 0.0
    %401 = vmatprep.subr.mxu0 0.0
    %402 = vmatpush2.xpose.msra.mxu0 0.0
    %403 = vmatprep.subr.mxu0 0.0
    %404 = vmatpush2.xpose.msra.mxu0 0.0
    %405 = vmatprep.subr.mxu0 0.0
    %406 = vmatpush2.xpose.msra.mxu0 0.0
    %407 = vmatprep.subr.mxu0 0.0
    %408 = vmatpush2.xpose.msra.mxu0 0.0
    %409 = vmatprep.subr.mxu0 0.0
    %410 = vmatpush2.xpose.msra.mxu0 0.0
    %411 = vmatprep.subr.mxu0 0.0
    %412 = vmatpush2.xpose.msra.mxu0 0.0
    %413 = vmatprep.subr.mxu0 0.0
    %414 = vmatpush2.xpose.msra.mxu0 0.0
    %415 = vmatprep.subr.mxu0 0.0
    %416 = vmatpush2.xpose.msra.mxu0 0.0
    %417 = vmatprep.subr.mxu0 0.0
    %418 = vmatpush2.xpose.msra.mxu0 0.0
    %419 = vmatprep.subr.mxu0 0.0
    %420 = vmatpush2.xpose.msra.mxu0 0.0
    %421 = vmatprep.subr.mxu0 0.0
    %422 = vmatpush2.xpose.msra.mxu0 0.0
    %423 = vmatprep.subr.mxu0 0.0
    %424 = vmatpush2.xpose.msra.mxu0 0.0
    %425 = vmatprep.subr.mxu0 0.0
    %426 = vmatpush2.xpose.msra.mxu0 0.0
    %427 = vmatprep.subr.mxu0 0.0
    %428 = vmatpush2.xpose.msra.mxu0 0.0
    %429 = vmatprep.mubr.f32.mxu0 0.0
    %430 = vmatmul.mubr.f32.gmra.mxu0 %v357
    %v431 = vpop.f32.mrf.mxu0
    %v432 = vadd.f32 %v50, %v431
    %v433 = vpop.f32.mrf.mxu0
    %434 = vmatprep.mubr.f32.mxu0 0.0
    %435 = vmatmul.mubr.f32.gmra.mxu0 %v359
    %v436 = vpop.f32.mrf.mxu0
    %v437 = vadd.f32 %v51, %v436
    %v438 = vpop.f32.mrf.mxu0
    %439 = vdwg.mxu0
    %v440 = vsel %vm239, %v432, -inf
    %441 = vmax.xlane.f32.xlu0 %v440
    %v442 = vpop.xlane.xlu0 %441
    %v443 = vsel %vm239, %v437, -inf
    %444 = vmax.xlane.f32.xlu0 %v443
    %v445 = vpop.xlane.xlu0 %444
    %v446 = vsub.f32 %v432, %v442
    %v447 = vsub.f32 %v437, %v445
    %v448 = vmul.f32 %v446, 1.442695
    %v449 = vpow.pop %v448
    %v450 = vmul.f32 %v447, 1.442695
    %v451 = vpow.pop %v450
    %v452 = vsel %vm239, %v449, 0.0
    %453 = vadd.xlane.f32.xlu0 %v452
    %v454 = vpop.xlane.xlu0 %453
    %v455 = vsel %vm239, %v451, 0.0
    %456 = vadd.xlane.f32.xlu0 %v455
    %v457 = vpop.xlane.xlu0 %456
    %v458 = vrcp.pop %v454
    %v459 = vrcp.pop %v457
    %v460 = vmul.f32 %v449, %v458
    %v461 = vmul.f32 %v451, %v459
    %462 = vrot.lane.b32.xlu0 %v137, 56
    %v463 = vpop.permute.xlu0 %462
    %464 = vrot.lane.b32.xlu0 %v142, 56
    %v465 = vpop.permute.xlu0 %464
    %v469 = vsel %vm239, %v460, 0
    %v472 = vsel %vm239, %v461, 0
    %474 = vmatprep.subr.mxu0 0.0
    %475 = vmatpush1.msra.mxu0 0.0
    %476 = vmatprep.subr.mxu0 0.0
    %477 = vmatpush1.msra.mxu0 0.0
    %478 = vmatprep.subr.mxu0 0.0
    %479 = vmatpush1.msra.mxu0 0.0
    %480 = vmatprep.subr.mxu0 0.0
    %481 = vmatpush1.msra.mxu0 0.0
    %482 = vmatprep.subr.mxu0 0.0
    %483 = vmatpush1.msra.mxu0 0.0
    %484 = vmatprep.subr.mxu0 0.0
    %485 = vmatpush1.msra.mxu0 0.0
    %486 = vmatprep.subr.mxu0 0.0
    %487 = vmatpush1.msra.mxu0 0.0
    %488 = vmatprep.subr.mxu0 0.0
    %489 = vmatpush1.msra.mxu0 0.0
    %490 = vmatprep.subr.mxu0 0.0
    %491 = vmatpush1.msra.mxu0 0.0
    %492 = vmatprep.subr.mxu0 0.0
    %493 = vmatpush1.msra.mxu0 0.0
    %494 = vmatprep.subr.mxu0 0.0
    %495 = vmatpush1.msra.mxu0 0.0
    %496 = vmatprep.subr.mxu0 0.0
    %497 = vmatpush1.msra.mxu0 0.0
    %498 = vmatprep.subr.mxu0 0.0
    %499 = vmatpush1.msra.mxu0 0.0
    %500 = vmatprep.subr.mxu0 0.0
    %501 = vmatpush1.msra.mxu0 0.0
    %502 = vmatprep.subr.mxu0 0.0
    %503 = vmatpush1.msra.mxu0 %v465
    %504 = vmatprep.subr.mxu0 0.0
    %505 = vmatpush1.msra.mxu0 %v463
    %506 = vmatprep.subr.mxu0 0.0
    %507 = vmatpush2.msra.mxu0 0.0
    %508 = vmatprep.subr.mxu0 0.0
    %509 = vmatpush2.msra.mxu0 0.0
    %510 = vmatprep.subr.mxu0 0.0
    %511 = vmatpush2.msra.mxu0 0.0
    %512 = vmatprep.subr.mxu0 0.0
    %513 = vmatpush2.msra.mxu0 0.0
    %514 = vmatprep.subr.mxu0 0.0
    %515 = vmatpush2.msra.mxu0 0.0
    %516 = vmatprep.subr.mxu0 0.0
    %517 = vmatpush2.msra.mxu0 0.0
    %518 = vmatprep.subr.mxu0 0.0
    %519 = vmatpush2.msra.mxu0 0.0
    %520 = vmatprep.subr.mxu0 0.0
    %521 = vmatpush2.msra.mxu0 0.0
    %522 = vmatprep.subr.mxu0 0.0
    %523 = vmatpush2.msra.mxu0 0.0
    %524 = vmatprep.subr.mxu0 0.0
    %525 = vmatpush2.msra.mxu0 0.0
    %526 = vmatprep.subr.mxu0 0.0
    %527 = vmatpush2.msra.mxu0 0.0
    %528 = vmatprep.subr.mxu0 0.0
    %529 = vmatpush2.msra.mxu0 0.0
    %530 = vmatprep.subr.mxu0 0.0
    %531 = vmatpush2.msra.mxu0 0.0
    %532 = vmatprep.subr.mxu0 0.0
    %533 = vmatpush2.msra.mxu0 0.0
    %534 = vmatprep.subr.mxu0 0.0
    %535 = vmatpush2.msra.mxu0 0.0
    %536 = vmatprep.subr.mxu0 0.0
    %537 = vmatpush2.msra.mxu0 0.0
    %538 = vmatprep.mubr.f32.mxu0 0.0
    %539 = vmatmul.mubr.f32.gmra.mxu0 %v469
    %v540 = vpop.f32.mrf.mxu0
    %v541 = vadd.f32 0.0, %v540
    %v542 = vpop.f32.mrf.mxu0
    %543 = vmatprep.mubr.f32.mxu0 0.0
    %544 = vmatmul.mubr.f32.gmra.mxu0 %v472
    %v545 = vpop.f32.mrf.mxu0
    %v546 = vadd.f32 0.0, %v545
    %v547 = vpop.f32.mrf.mxu0
    %548 = vdwg.mxu0
    %v550 = vsel %vm155, %v541, 0
    %v553 = vsel %vm155, %v546, 0
    %555 = vmatprep.subr.mxu0 0.0
    %556 = vmatpush1.msra.mxu0 0.0
    %557 = vmatprep.subr.mxu0 0.0
    %558 = vmatpush1.msra.mxu0 0.0
    %559 = vmatprep.subr.mxu0 0.0
    %560 = vmatpush1.msra.mxu0 0.0
    %561 = vmatprep.subr.mxu0 0.0
    %562 = vmatpush1.msra.mxu0 0.0
    %563 = vmatprep.subr.mxu0 0.0
    %564 = vmatpush1.msra.mxu0 0.0
    %565 = vmatprep.subr.mxu0 0.0
    %566 = vmatpush1.msra.mxu0 0.0
    %567 = vmatprep.subr.mxu0 0.0
    %568 = vmatpush1.msra.mxu0 0.0
    %569 = vmatprep.subr.mxu0 0.0
    %570 = vmatpush1.msra.mxu0 0.0
    %571 = vmatprep.subr.mxu0 0.0
    %572 = vmatpush1.msra.mxu0 0.0
    %573 = vmatprep.subr.mxu0 0.0
    %574 = vmatpush1.msra.mxu0 0.0
    %575 = vmatprep.subr.mxu0 0.0
    %576 = vmatpush1.msra.mxu0 0.0
    %577 = vmatprep.subr.mxu0 0.0
    %578 = vmatpush1.msra.mxu0 0.0
    %579 = vmatprep.subr.mxu0 0.0
    %580 = vmatpush1.msra.mxu0 0.0
    %581 = vmatprep.subr.mxu0 0.0
    %582 = vmatpush1.msra.mxu0 0.0
    %583 = vmatprep.subr.mxu0 0.0
    %584 = vmatpush1.msra.mxu0 0.0
    %585 = vmatprep.subr.mxu0 0.0
    %586 = vmatpush1.msra.mxu0 %v146
    %587 = vmatprep.subr.mxu0 0.0
    %588 = vmatpush2.msra.mxu0 0.0
    %589 = vmatprep.subr.mxu0 0.0
    %590 = vmatpush2.msra.mxu0 0.0
    %591 = vmatprep.subr.mxu0 0.0
    %592 = vmatpush2.msra.mxu0 0.0
    %593 = vmatprep.subr.mxu0 0.0
    %594 = vmatpush2.msra.mxu0 0.0
    %595 = vmatprep.subr.mxu0 0.0
    %596 = vmatpush2.msra.mxu0 0.0
    %597 = vmatprep.subr.mxu0 0.0
    %598 = vmatpush2.msra.mxu0 0.0
    %599 = vmatprep.subr.mxu0 0.0
    %600 = vmatpush2.msra.mxu0 0.0
    %601 = vmatprep.subr.mxu0 0.0
    %602 = vmatpush2.msra.mxu0 0.0
    %603 = vmatprep.subr.mxu0 0.0
    %604 = vmatpush2.msra.mxu0 0.0
    %605 = vmatprep.subr.mxu0 0.0
    %606 = vmatpush2.msra.mxu0 0.0
    %607 = vmatprep.subr.mxu0 0.0
    %608 = vmatpush2.msra.mxu0 0.0
    %609 = vmatprep.subr.mxu0 0.0
    %610 = vmatpush2.msra.mxu0 0.0
    %611 = vmatprep.subr.mxu0 0.0
    %612 = vmatpush2.msra.mxu0 0.0
    %613 = vmatprep.subr.mxu0 0.0
    %614 = vmatpush2.msra.mxu0 0.0
    %615 = vmatprep.subr.mxu0 0.0
    %616 = vmatpush2.msra.mxu0 0.0
    %617 = vmatprep.subr.mxu0 0.0
    %618 = vmatpush2.msra.mxu0 0.0
    %619 = vmatprep.mubr.f32.mxu0 0.0
    %620 = vmatmul.mubr.f32.gmra.mxu0 %v550
    %v621 = vpop.f32.mrf.mxu0
    %v622 = vadd.f32 0.0, %v621
    %v623 = vpop.f32.mrf.mxu0
    %624 = vmatprep.mubr.f32.mxu0 0.0
    %625 = vmatmul.mubr.f32.gmra.mxu0 %v553
    %v626 = vpop.f32.mrf.mxu0
    %v627 = vadd.f32 0.0, %v626
    %v628 = vpop.f32.mrf.mxu0
    %629 = vdwg.mxu0
    %v631 = vsel %vm155, %v341, 0
    %v634 = vsel %vm155, %v346, 0
    %636 = vmatprep.subr.mxu0 0.0
    %637 = vmatpush1.msra.mxu0 0.0
    %638 = vmatprep.subr.mxu0 0.0
    %639 = vmatpush1.msra.mxu0 0.0
    %640 = vmatprep.subr.mxu0 0.0
    %641 = vmatpush1.msra.mxu0 0.0
    %642 = vmatprep.subr.mxu0 0.0
    %643 = vmatpush1.msra.mxu0 0.0
    %644 = vmatprep.subr.mxu0 0.0
    %645 = vmatpush1.msra.mxu0 0.0
    %646 = vmatprep.subr.mxu0 0.0
    %647 = vmatpush1.msra.mxu0 0.0
    %648 = vmatprep.subr.mxu0 0.0
    %649 = vmatpush1.msra.mxu0 0.0
    %650 = vmatprep.subr.mxu0 0.0
    %651 = vmatpush1.msra.mxu0 0.0
    %652 = vmatprep.subr.mxu0 0.0
    %653 = vmatpush1.msra.mxu0 0.0
    %654 = vmatprep.subr.mxu0 0.0
    %655 = vmatpush1.msra.mxu0 0.0
    %656 = vmatprep.subr.mxu0 0.0
    %657 = vmatpush1.msra.mxu0 0.0
    %658 = vmatprep.subr.mxu0 0.0
    %659 = vmatpush1.msra.mxu0 0.0
    %660 = vmatprep.subr.mxu0 0.0
    %661 = vmatpush1.msra.mxu0 0.0
    %662 = vmatprep.subr.mxu0 0.0
    %663 = vmatpush1.msra.mxu0 0.0
    %664 = vmatprep.subr.mxu0 0.0
    %665 = vmatpush1.msra.mxu0 0.0
    %666 = vmatprep.subr.mxu0 0.0
    %667 = vmatpush1.msra.mxu0 %v145
    %668 = vmatprep.subr.mxu0 0.0
    %669 = vmatpush2.msra.mxu0 0.0
    %670 = vmatprep.subr.mxu0 0.0
    %671 = vmatpush2.msra.mxu0 0.0
    %672 = vmatprep.subr.mxu0 0.0
    %673 = vmatpush2.msra.mxu0 0.0
    %674 = vmatprep.subr.mxu0 0.0
    %675 = vmatpush2.msra.mxu0 0.0
    %676 = vmatprep.subr.mxu0 0.0
    %677 = vmatpush2.msra.mxu0 0.0
    %678 = vmatprep.subr.mxu0 0.0
    %679 = vmatpush2.msra.mxu0 0.0
    %680 = vmatprep.subr.mxu0 0.0
    %681 = vmatpush2.msra.mxu0 0.0
    %682 = vmatprep.subr.mxu0 0.0
    %683 = vmatpush2.msra.mxu0 0.0
    %684 = vmatprep.subr.mxu0 0.0
    %685 = vmatpush2.msra.mxu0 0.0
    %686 = vmatprep.subr.mxu0 0.0
    %687 = vmatpush2.msra.mxu0 0.0
    %688 = vmatprep.subr.mxu0 0.0
    %689 = vmatpush2.msra.mxu0 0.0
    %690 = vmatprep.subr.mxu0 0.0
    %691 = vmatpush2.msra.mxu0 0.0
    %692 = vmatprep.subr.mxu0 0.0
    %693 = vmatpush2.msra.mxu0 0.0
    %694 = vmatprep.subr.mxu0 0.0
    %695 = vmatpush2.msra.mxu0 0.0
    %696 = vmatprep.subr.mxu0 0.0
    %697 = vmatpush2.msra.mxu0 0.0
    %698 = vmatprep.subr.mxu0 0.0
    %699 = vmatpush2.msra.mxu0 0.0
    %700 = vmatprep.mubr.f32.mxu0 0.0
    %701 = vmatmul.mubr.f32.gmra.mxu0 %v631
    %v702 = vpop.f32.mrf.mxu0
    %v703 = vadd.f32 %v622, %v702
    %v704 = vpop.f32.mrf.mxu0
    %705 = vmatprep.mubr.f32.mxu0 0.0
    %706 = vmatmul.mubr.f32.gmra.mxu0 %v634
    %v707 = vpop.f32.mrf.mxu0
    %v708 = vadd.f32 %v627, %v707
    %v709 = vpop.f32.mrf.mxu0
    %710 = vdwg.mxu0
    %711 = vrot.lane.b32.xlu0 %v137, 112
    %v712 = vpop.permute.xlu0 %711
    %713 = vrot.lane.b32.xlu0 %v142, 112
    %v714 = vpop.permute.xlu0 %713
    %715 = vrot.lane.b32.xlu0 %v137, 80
    %v716 = vpop.permute.xlu0 %715
    %717 = vrot.lane.b32.xlu0 %v142, 80
    %v718 = vpop.permute.xlu0 %717
    %v719 = vsel %vm155, %v712, 0
    %v721 = vsel %vm155, %v714, 0
    %v723 = vsel %vm155, %v716, 0
    %v725 = vsel %vm155, %v718, 0
    %727 = vmatprep.subr.mxu0 0.0
    %728 = vmatpush1.xpose.msra.mxu0 0.0
    %729 = vmatprep.subr.mxu0 0.0
    %730 = vmatpush1.xpose.msra.mxu0 0.0
    %731 = vmatprep.subr.mxu0 0.0
    %732 = vmatpush1.xpose.msra.mxu0 0.0
    %733 = vmatprep.subr.mxu0 0.0
    %734 = vmatpush1.xpose.msra.mxu0 0.0
    %735 = vmatprep.subr.mxu0 0.0
    %736 = vmatpush1.xpose.msra.mxu0 0.0
    %737 = vmatprep.subr.mxu0 0.0
    %738 = vmatpush1.xpose.msra.mxu0 0.0
    %739 = vmatprep.subr.mxu0 0.0
    %740 = vmatpush1.xpose.msra.mxu0 0.0
    %741 = vmatprep.subr.mxu0 0.0
    %742 = vmatpush1.xpose.msra.mxu0 0.0
    %743 = vmatprep.subr.mxu0 0.0
    %744 = vmatpush1.xpose.msra.mxu0 0.0
    %745 = vmatprep.subr.mxu0 0.0
    %746 = vmatpush1.xpose.msra.mxu0 0.0
    %747 = vmatprep.subr.mxu0 0.0
    %748 = vmatpush1.xpose.msra.mxu0 0.0
    %749 = vmatprep.subr.mxu0 0.0
    %750 = vmatpush1.xpose.msra.mxu0 0.0
    %751 = vmatprep.subr.mxu0 0.0
    %752 = vmatpush1.xpose.msra.mxu0 0.0
    %753 = vmatprep.subr.mxu0 0.0
    %754 = vmatpush1.xpose.msra.mxu0 0.0
    %755 = vmatprep.subr.mxu0 0.0
    %756 = vmatpush1.xpose.msra.mxu0 %v725
    %757 = vmatprep.subr.mxu0 0.0
    %758 = vmatpush1.xpose.msra.mxu0 %v723
    %759 = vmatprep.subr.mxu0 0.0
    %760 = vmatpush2.xpose.msra.mxu0 0.0
    %761 = vmatprep.subr.mxu0 0.0
    %762 = vmatpush2.xpose.msra.mxu0 0.0
    %763 = vmatprep.subr.mxu0 0.0
    %764 = vmatpush2.xpose.msra.mxu0 0.0
    %765 = vmatprep.subr.mxu0 0.0
    %766 = vmatpush2.xpose.msra.mxu0 0.0
    %767 = vmatprep.subr.mxu0 0.0
    %768 = vmatpush2.xpose.msra.mxu0 0.0
    %769 = vmatprep.subr.mxu0 0.0
    %770 = vmatpush2.xpose.msra.mxu0 0.0
    %771 = vmatprep.subr.mxu0 0.0
    %772 = vmatpush2.xpose.msra.mxu0 0.0
    %773 = vmatprep.subr.mxu0 0.0
    %774 = vmatpush2.xpose.msra.mxu0 0.0
    %775 = vmatprep.subr.mxu0 0.0
    %776 = vmatpush2.xpose.msra.mxu0 0.0
    %777 = vmatprep.subr.mxu0 0.0
    %778 = vmatpush2.xpose.msra.mxu0 0.0
    %779 = vmatprep.subr.mxu0 0.0
    %780 = vmatpush2.xpose.msra.mxu0 0.0
    %781 = vmatprep.subr.mxu0 0.0
    %782 = vmatpush2.xpose.msra.mxu0 0.0
    %783 = vmatprep.subr.mxu0 0.0
    %784 = vmatpush2.xpose.msra.mxu0 0.0
    %785 = vmatprep.subr.mxu0 0.0
    %786 = vmatpush2.xpose.msra.mxu0 0.0
    %787 = vmatprep.subr.mxu0 0.0
    %788 = vmatpush2.xpose.msra.mxu0 0.0
    %789 = vmatprep.subr.mxu0 0.0
    %790 = vmatpush2.xpose.msra.mxu0 0.0
    %791 = vmatprep.mubr.f32.mxu0 0.0
    %792 = vmatmul.mubr.f32.gmra.mxu0 %v719
    %v793 = vpop.f32.mrf.mxu0
    %v794 = vadd.f32 %v50, %v793
    %v795 = vpop.f32.mrf.mxu0
    %796 = vmatprep.mubr.f32.mxu0 0.0
    %797 = vmatmul.mubr.f32.gmra.mxu0 %v721
    %v798 = vpop.f32.mrf.mxu0
    %v799 = vadd.f32 %v51, %v798
    %v800 = vpop.f32.mrf.mxu0
    %801 = vdwg.mxu0
    %v802 = vsel %vm239, %v794, -inf
    %803 = vmax.xlane.f32.xlu0 %v802
    %v804 = vpop.xlane.xlu0 %803
    %v805 = vsel %vm239, %v799, -inf
    %806 = vmax.xlane.f32.xlu0 %v805
    %v807 = vpop.xlane.xlu0 %806
    %v808 = vsub.f32 %v794, %v804
    %v809 = vsub.f32 %v799, %v807
    %v810 = vmul.f32 %v808, 1.442695
    %v811 = vpow.pop %v810
    %v812 = vmul.f32 %v809, 1.442695
    %v813 = vpow.pop %v812
    %v814 = vsel %vm239, %v811, 0.0
    %815 = vadd.xlane.f32.xlu0 %v814
    %v816 = vpop.xlane.xlu0 %815
    %v817 = vsel %vm239, %v813, 0.0
    %818 = vadd.xlane.f32.xlu0 %v817
    %v819 = vpop.xlane.xlu0 %818
    %v820 = vrcp.pop %v816
    %v821 = vrcp.pop %v819
    %v822 = vmul.f32 %v811, %v820
    %v823 = vmul.f32 %v813, %v821
    %824 = vrot.lane.b32.xlu0 %v137, 48
    %v825 = vpop.permute.xlu0 %824
    %826 = vrot.lane.b32.xlu0 %v142, 48
    %v827 = vpop.permute.xlu0 %826
    %v831 = vsel %vm239, %v822, 0
    %v834 = vsel %vm239, %v823, 0
    %836 = vmatprep.subr.mxu0 0.0
    %837 = vmatpush1.msra.mxu0 0.0
    %838 = vmatprep.subr.mxu0 0.0
    %839 = vmatpush1.msra.mxu0 0.0
    %840 = vmatprep.subr.mxu0 0.0
    %841 = vmatpush1.msra.mxu0 0.0
    %842 = vmatprep.subr.mxu0 0.0
    %843 = vmatpush1.msra.mxu0 0.0
    %844 = vmatprep.subr.mxu0 0.0
    %845 = vmatpush1.msra.mxu0 0.0
    %846 = vmatprep.subr.mxu0 0.0
    %847 = vmatpush1.msra.mxu0 0.0
    %848 = vmatprep.subr.mxu0 0.0
    %849 = vmatpush1.msra.mxu0 0.0
    %850 = vmatprep.subr.mxu0 0.0
    %851 = vmatpush1.msra.mxu0 0.0
    %852 = vmatprep.subr.mxu0 0.0
    %853 = vmatpush1.msra.mxu0 0.0
    %854 = vmatprep.subr.mxu0 0.0
    %855 = vmatpush1.msra.mxu0 0.0
    %856 = vmatprep.subr.mxu0 0.0
    %857 = vmatpush1.msra.mxu0 0.0
    %858 = vmatprep.subr.mxu0 0.0
    %859 = vmatpush1.msra.mxu0 0.0
    %860 = vmatprep.subr.mxu0 0.0
    %861 = vmatpush1.msra.mxu0 0.0
    %862 = vmatprep.subr.mxu0 0.0
    %863 = vmatpush1.msra.mxu0 0.0
    %864 = vmatprep.subr.mxu0 0.0
    %865 = vmatpush1.msra.mxu0 %v827
    %866 = vmatprep.subr.mxu0 0.0
    %867 = vmatpush1.msra.mxu0 %v825
    %868 = vmatprep.subr.mxu0 0.0
    %869 = vmatpush2.msra.mxu0 0.0
    %870 = vmatprep.subr.mxu0 0.0
    %871 = vmatpush2.msra.mxu0 0.0
    %872 = vmatprep.subr.mxu0 0.0
    %873 = vmatpush2.msra.mxu0 0.0
    %874 = vmatprep.subr.mxu0 0.0
    %875 = vmatpush2.msra.mxu0 0.0
    %876 = vmatprep.subr.mxu0 0.0
    %877 = vmatpush2.msra.mxu0 0.0
    %878 = vmatprep.subr.mxu0 0.0
    %879 = vmatpush2.msra.mxu0 0.0
    %880 = vmatprep.subr.mxu0 0.0
    %881 = vmatpush2.msra.mxu0 0.0
    %882 = vmatprep.subr.mxu0 0.0
    %883 = vmatpush2.msra.mxu0 0.0
    %884 = vmatprep.subr.mxu0 0.0
    %885 = vmatpush2.msra.mxu0 0.0
    %886 = vmatprep.subr.mxu0 0.0
    %887 = vmatpush2.msra.mxu0 0.0
    %888 = vmatprep.subr.mxu0 0.0
    %889 = vmatpush2.msra.mxu0 0.0
    %890 = vmatprep.subr.mxu0 0.0
    %891 = vmatpush2.msra.mxu0 0.0
    %892 = vmatprep.subr.mxu0 0.0
    %893 = vmatpush2.msra.mxu0 0.0
    %894 = vmatprep.subr.mxu0 0.0
    %895 = vmatpush2.msra.mxu0 0.0
    %896 = vmatprep.subr.mxu0 0.0
    %897 = vmatpush2.msra.mxu0 0.0
    %898 = vmatprep.subr.mxu0 0.0
    %899 = vmatpush2.msra.mxu0 0.0
    %900 = vmatprep.mubr.f32.mxu0 0.0
    %901 = vmatmul.mubr.f32.gmra.mxu0 %v831
    %v902 = vpop.f32.mrf.mxu0
    %v903 = vadd.f32 0.0, %v902
    %v904 = vpop.f32.mrf.mxu0
    %905 = vmatprep.mubr.f32.mxu0 0.0
    %906 = vmatmul.mubr.f32.gmra.mxu0 %v834
    %v907 = vpop.f32.mrf.mxu0
    %v908 = vadd.f32 0.0, %v907
    %v909 = vpop.f32.mrf.mxu0
    %910 = vdwg.mxu0
    %v912 = vsel %vm155, %v903, 0
    %v915 = vsel %vm155, %v908, 0
    %917 = vmatprep.subr.mxu0 0.0
    %918 = vmatpush1.msra.mxu0 0.0
    %919 = vmatprep.subr.mxu0 0.0
    %920 = vmatpush1.msra.mxu0 0.0
    %921 = vmatprep.subr.mxu0 0.0
    %922 = vmatpush1.msra.mxu0 0.0
    %923 = vmatprep.subr.mxu0 0.0
    %924 = vmatpush1.msra.mxu0 0.0
    %925 = vmatprep.subr.mxu0 0.0
    %926 = vmatpush1.msra.mxu0 0.0
    %927 = vmatprep.subr.mxu0 0.0
    %928 = vmatpush1.msra.mxu0 0.0
    %929 = vmatprep.subr.mxu0 0.0
    %930 = vmatpush1.msra.mxu0 0.0
    %931 = vmatprep.subr.mxu0 0.0
    %932 = vmatpush1.msra.mxu0 0.0
    %933 = vmatprep.subr.mxu0 0.0
    %934 = vmatpush1.msra.mxu0 0.0
    %935 = vmatprep.subr.mxu0 0.0
    %936 = vmatpush1.msra.mxu0 0.0
    %937 = vmatprep.subr.mxu0 0.0
    %938 = vmatpush1.msra.mxu0 0.0
    %939 = vmatprep.subr.mxu0 0.0
    %940 = vmatpush1.msra.mxu0 0.0
    %941 = vmatprep.subr.mxu0 0.0
    %942 = vmatpush1.msra.mxu0 0.0
    %943 = vmatprep.subr.mxu0 0.0
    %944 = vmatpush1.msra.mxu0 0.0
    %945 = vmatprep.subr.mxu0 0.0
    %946 = vmatpush1.msra.mxu0 0.0
    %947 = vmatprep.subr.mxu0 0.0
    %948 = vmatpush1.msra.mxu0 %v147
    %949 = vmatprep.subr.mxu0 0.0
    %950 = vmatpush2.msra.mxu0 0.0
    %951 = vmatprep.subr.mxu0 0.0
    %952 = vmatpush2.msra.mxu0 0.0
    %953 = vmatprep.subr.mxu0 0.0
    %954 = vmatpush2.msra.mxu0 0.0
    %955 = vmatprep.subr.mxu0 0.0
    %956 = vmatpush2.msra.mxu0 0.0
    %957 = vmatprep.subr.mxu0 0.0
    %958 = vmatpush2.msra.mxu0 0.0
    %959 = vmatprep.subr.mxu0 0.0
    %960 = vmatpush2.msra.mxu0 0.0
    %961 = vmatprep.subr.mxu0 0.0
    %962 = vmatpush2.msra.mxu0 0.0
    %963 = vmatprep.subr.mxu0 0.0
    %964 = vmatpush2.msra.mxu0 0.0
    %965 = vmatprep.subr.mxu0 0.0
    %966 = vmatpush2.msra.mxu0 0.0
    %967 = vmatprep.subr.mxu0 0.0
    %968 = vmatpush2.msra.mxu0 0.0
    %969 = vmatprep.subr.mxu0 0.0
    %970 = vmatpush2.msra.mxu0 0.0
    %971 = vmatprep.subr.mxu0 0.0
    %972 = vmatpush2.msra.mxu0 0.0
    %973 = vmatprep.subr.mxu0 0.0
    %974 = vmatpush2.msra.mxu0 0.0
    %975 = vmatprep.subr.mxu0 0.0
    %976 = vmatpush2.msra.mxu0 0.0
    %977 = vmatprep.subr.mxu0 0.0
    %978 = vmatpush2.msra.mxu0 0.0
    %979 = vmatprep.subr.mxu0 0.0
    %980 = vmatpush2.msra.mxu0 0.0
    %981 = vmatprep.mubr.f32.mxu0 0.0
    %982 = vmatmul.mubr.f32.gmra.mxu0 %v912
    %v983 = vpop.f32.mrf.mxu0
    %v984 = vadd.f32 0.0, %v983
    %v985 = vpop.f32.mrf.mxu0
    %986 = vmatprep.mubr.f32.mxu0 0.0
    %987 = vmatmul.mubr.f32.gmra.mxu0 %v915
    %v988 = vpop.f32.mrf.mxu0
    %v989 = vadd.f32 0.0, %v988
    %v990 = vpop.f32.mrf.mxu0
    %991 = vdwg.mxu0
    %v992 = vadd.f32 %v703, %v984
    %v993 = vadd.f32 %v708, %v989
    %994 = vrot.lane.b32.xlu0 %v137, 104
    %v995 = vpop.permute.xlu0 %994
    %996 = vrot.lane.b32.xlu0 %v142, 104
    %v997 = vpop.permute.xlu0 %996
    %998 = vrot.lane.b32.xlu0 %v137, 72
    %v999 = vpop.permute.xlu0 %998
    %1000 = vrot.lane.b32.xlu0 %v142, 72
    %v1001 = vpop.permute.xlu0 %1000
    %v1002 = vsel %vm155, %v995, 0
    %v1004 = vsel %vm155, %v997, 0
    %v1006 = vsel %vm155, %v999, 0
    %v1008 = vsel %vm155, %v1001, 0
    %1010 = vmatprep.subr.mxu0 0.0
    %1011 = vmatpush1.xpose.msra.mxu0 0.0
    %1012 = vmatprep.subr.mxu0 0.0
    %1013 = vmatpush1.xpose.msra.mxu0 0.0
    %1014 = vmatprep.subr.mxu0 0.0
    %1015 = vmatpush1.xpose.msra.mxu0 0.0
    %1016 = vmatprep.subr.mxu0 0.0
    %1017 = vmatpush1.xpose.msra.mxu0 0.0
    %1018 = vmatprep.subr.mxu0 0.0
    %1019 = vmatpush1.xpose.msra.mxu0 0.0
    %1020 = vmatprep.subr.mxu0 0.0
    %1021 = vmatpush1.xpose.msra.mxu0 0.0
    %1022 = vmatprep.subr.mxu0 0.0
    %1023 = vmatpush1.xpose.msra.mxu0 0.0
    %1024 = vmatprep.subr.mxu0 0.0
    %1025 = vmatpush1.xpose.msra.mxu0 0.0
    %1026 = vmatprep.subr.mxu0 0.0
    %1027 = vmatpush1.xpose.msra.mxu0 0.0
    %1028 = vmatprep.subr.mxu0 0.0
    %1029 = vmatpush1.xpose.msra.mxu0 0.0
    %1030 = vmatprep.subr.mxu0 0.0
    %1031 = vmatpush1.xpose.msra.mxu0 0.0
    %1032 = vmatprep.subr.mxu0 0.0
    %1033 = vmatpush1.xpose.msra.mxu0 0.0
    %1034 = vmatprep.subr.mxu0 0.0
    %1035 = vmatpush1.xpose.msra.mxu0 0.0
    %1036 = vmatprep.subr.mxu0 0.0
    %1037 = vmatpush1.xpose.msra.mxu0 0.0
    %1038 = vmatprep.subr.mxu0 0.0
    %1039 = vmatpush1.xpose.msra.mxu0 %v1008
    %1040 = vmatprep.subr.mxu0 0.0
    %1041 = vmatpush1.xpose.msra.mxu0 %v1006
    %1042 = vmatprep.subr.mxu0 0.0
    %1043 = vmatpush2.xpose.msra.mxu0 0.0
    %1044 = vmatprep.subr.mxu0 0.0
    %1045 = vmatpush2.xpose.msra.mxu0 0.0
    %1046 = vmatprep.subr.mxu0 0.0
    %1047 = vmatpush2.xpose.msra.mxu0 0.0
    %1048 = vmatprep.subr.mxu0 0.0
    %1049 = vmatpush2.xpose.msra.mxu0 0.0
    %1050 = vmatprep.subr.mxu0 0.0
    %1051 = vmatpush2.xpose.msra.mxu0 0.0
    %1052 = vmatprep.subr.mxu0 0.0
    %1053 = vmatpush2.xpose.msra.mxu0 0.0
    %1054 = vmatprep.subr.mxu0 0.0
    %1055 = vmatpush2.xpose.msra.mxu0 0.0
    %1056 = vmatprep.subr.mxu0 0.0
    %1057 = vmatpush2.xpose.msra.mxu0 0.0
    %1058 = vmatprep.subr.mxu0 0.0
    %1059 = vmatpush2.xpose.msra.mxu0 0.0
    %1060 = vmatprep.subr.mxu0 0.0
    %1061 = vmatpush2.xpose.msra.mxu0 0.0
    %1062 = vmatprep.subr.mxu0 0.0
    %1063 = vmatpush2.xpose.msra.mxu0 0.0
    %1064 = vmatprep.subr.mxu0 0.0
    %1065 = vmatpush2.xpose.msra.mxu0 0.0
    %1066 = vmatprep.subr.mxu0 0.0
    %1067 = vmatpush2.xpose.msra.mxu0 0.0
    %1068 = vmatprep.subr.mxu0 0.0
    %1069 = vmatpush2.xpose.msra.mxu0 0.0
    %1070 = vmatprep.subr.mxu0 0.0
    %1071 = vmatpush2.xpose.msra.mxu0 0.0
    %1072 = vmatprep.subr.mxu0 0.0
    %1073 = vmatpush2.xpose.msra.mxu0 0.0
    %1074 = vmatprep.mubr.f32.mxu0 0.0
    %1075 = vmatmul.mubr.f32.gmra.mxu0 %v1002
    %v1076 = vpop.f32.mrf.mxu0
    %v1077 = vadd.f32 %v50, %v1076
    %v1078 = vpop.f32.mrf.mxu0
    %1079 = vmatprep.mubr.f32.mxu0 0.0
    %1080 = vmatmul.mubr.f32.gmra.mxu0 %v1004
    %v1081 = vpop.f32.mrf.mxu0
    %v1082 = vadd.f32 %v51, %v1081
    %v1083 = vpop.f32.mrf.mxu0
    %1084 = vdwg.mxu0
    %v1085 = vsel %vm239, %v1077, -inf
    %1086 = vmax.xlane.f32.xlu0 %v1085
    %v1087 = vpop.xlane.xlu0 %1086
    %v1088 = vsel %vm239, %v1082, -inf
    %1089 = vmax.xlane.f32.xlu0 %v1088
    %v1090 = vpop.xlane.xlu0 %1089
    %v1091 = vsub.f32 %v1077, %v1087
    %v1092 = vsub.f32 %v1082, %v1090
    %v1093 = vmul.f32 %v1091, 1.442695
    %v1094 = vpow.pop %v1093
    %v1095 = vmul.f32 %v1092, 1.442695
    %v1096 = vpow.pop %v1095
    %v1097 = vsel %vm239, %v1094, 0.0
    %1098 = vadd.xlane.f32.xlu0 %v1097
    %v1099 = vpop.xlane.xlu0 %1098
    %v1100 = vsel %vm239, %v1096, 0.0
    %1101 = vadd.xlane.f32.xlu0 %v1100
    %v1102 = vpop.xlane.xlu0 %1101
    %v1103 = vrcp.pop %v1099
    %v1104 = vrcp.pop %v1102
    %v1105 = vmul.f32 %v1094, %v1103
    %v1106 = vmul.f32 %v1096, %v1104
    %1107 = vrot.lane.b32.xlu0 %v137, 40
    %v1108 = vpop.permute.xlu0 %1107
    %1109 = vrot.lane.b32.xlu0 %v142, 40
    %v1110 = vpop.permute.xlu0 %1109
    %v1114 = vsel %vm239, %v1105, 0
    %v1117 = vsel %vm239, %v1106, 0
    %1119 = vmatprep.subr.mxu0 0.0
    %1120 = vmatpush1.msra.mxu0 0.0
    %1121 = vmatprep.subr.mxu0 0.0
    %1122 = vmatpush1.msra.mxu0 0.0
    %1123 = vmatprep.subr.mxu0 0.0
    %1124 = vmatpush1.msra.mxu0 0.0
    %1125 = vmatprep.subr.mxu0 0.0
    %1126 = vmatpush1.msra.mxu0 0.0
    %1127 = vmatprep.subr.mxu0 0.0
    %1128 = vmatpush1.msra.mxu0 0.0
    %1129 = vmatprep.subr.mxu0 0.0
    %1130 = vmatpush1.msra.mxu0 0.0
    %1131 = vmatprep.subr.mxu0 0.0
    %1132 = vmatpush1.msra.mxu0 0.0
    %1133 = vmatprep.subr.mxu0 0.0
    %1134 = vmatpush1.msra.mxu0 0.0
    %1135 = vmatprep.subr.mxu0 0.0
    %1136 = vmatpush1.msra.mxu0 0.0
    %1137 = vmatprep.subr.mxu0 0.0
    %1138 = vmatpush1.msra.mxu0 0.0
    %1139 = vmatprep.subr.mxu0 0.0
    %1140 = vmatpush1.msra.mxu0 0.0
    %1141 = vmatprep.subr.mxu0 0.0
    %1142 = vmatpush1.msra.mxu0 0.0
    %1143 = vmatprep.subr.mxu0 0.0
    %1144 = vmatpush1.msra.mxu0 0.0
    %1145 = vmatprep.subr.mxu0 0.0
    %1146 = vmatpush1.msra.mxu0 0.0
    %1147 = vmatprep.subr.mxu0 0.0
    %1148 = vmatpush1.msra.mxu0 %v1110
    %1149 = vmatprep.subr.mxu0 0.0
    %1150 = vmatpush1.msra.mxu0 %v1108
    %1151 = vmatprep.subr.mxu0 0.0
    %1152 = vmatpush2.msra.mxu0 0.0
    %1153 = vmatprep.subr.mxu0 0.0
    %1154 = vmatpush2.msra.mxu0 0.0
    %1155 = vmatprep.subr.mxu0 0.0
    %1156 = vmatpush2.msra.mxu0 0.0
    %1157 = vmatprep.subr.mxu0 0.0
    %1158 = vmatpush2.msra.mxu0 0.0
    %1159 = vmatprep.subr.mxu0 0.0
    %1160 = vmatpush2.msra.mxu0 0.0
    %1161 = vmatprep.subr.mxu0 0.0
    %1162 = vmatpush2.msra.mxu0 0.0
    %1163 = vmatprep.subr.mxu0 0.0
    %1164 = vmatpush2.msra.mxu0 0.0
    %1165 = vmatprep.subr.mxu0 0.0
    %1166 = vmatpush2.msra.mxu0 0.0
    %1167 = vmatprep.subr.mxu0 0.0
    %1168 = vmatpush2.msra.mxu0 0.0
    %1169 = vmatprep.subr.mxu0 0.0
    %1170 = vmatpush2.msra.mxu0 0.0
    %1171 = vmatprep.subr.mxu0 0.0
    %1172 = vmatpush2.msra.mxu0 0.0
    %1173 = vmatprep.subr.mxu0 0.0
    %1174 = vmatpush2.msra.mxu0 0.0
    %1175 = vmatprep.subr.mxu0 0.0
    %1176 = vmatpush2.msra.mxu0 0.0
    %1177 = vmatprep.subr.mxu0 0.0
    %1178 = vmatpush2.msra.mxu0 0.0
    %1179 = vmatprep.subr.mxu0 0.0
    %1180 = vmatpush2.msra.mxu0 0.0
    %1181 = vmatprep.subr.mxu0 0.0
    %1182 = vmatpush2.msra.mxu0 0.0
    %1183 = vmatprep.mubr.f32.mxu0 0.0
    %1184 = vmatmul.mubr.f32.gmra.mxu0 %v1114
    %v1185 = vpop.f32.mrf.mxu0
    %v1186 = vadd.f32 0.0, %v1185
    %v1187 = vpop.f32.mrf.mxu0
    %1188 = vmatprep.mubr.f32.mxu0 0.0
    %1189 = vmatmul.mubr.f32.gmra.mxu0 %v1117
    %v1190 = vpop.f32.mrf.mxu0
    %v1191 = vadd.f32 0.0, %v1190
    %v1192 = vpop.f32.mrf.mxu0
    %1193 = vdwg.mxu0
    %v1195 = vsel %vm155, %v1186, 0
    %v1198 = vsel %vm155, %v1191, 0
    %1200 = vmatprep.subr.mxu0 0.0
    %1201 = vmatpush1.msra.mxu0 0.0
    %1202 = vmatprep.subr.mxu0 0.0
    %1203 = vmatpush1.msra.mxu0 0.0
    %1204 = vmatprep.subr.mxu0 0.0
    %1205 = vmatpush1.msra.mxu0 0.0
    %1206 = vmatprep.subr.mxu0 0.0
    %1207 = vmatpush1.msra.mxu0 0.0
    %1208 = vmatprep.subr.mxu0 0.0
    %1209 = vmatpush1.msra.mxu0 0.0
    %1210 = vmatprep.subr.mxu0 0.0
    %1211 = vmatpush1.msra.mxu0 0.0
    %1212 = vmatprep.subr.mxu0 0.0
    %1213 = vmatpush1.msra.mxu0 0.0
    %1214 = vmatprep.subr.mxu0 0.0
    %1215 = vmatpush1.msra.mxu0 0.0
    %1216 = vmatprep.subr.mxu0 0.0
    %1217 = vmatpush1.msra.mxu0 0.0
    %1218 = vmatprep.subr.mxu0 0.0
    %1219 = vmatpush1.msra.mxu0 0.0
    %1220 = vmatprep.subr.mxu0 0.0
    %1221 = vmatpush1.msra.mxu0 0.0
    %1222 = vmatprep.subr.mxu0 0.0
    %1223 = vmatpush1.msra.mxu0 0.0
    %1224 = vmatprep.subr.mxu0 0.0
    %1225 = vmatpush1.msra.mxu0 0.0
    %1226 = vmatprep.subr.mxu0 0.0
    %1227 = vmatpush1.msra.mxu0 0.0
    %1228 = vmatprep.subr.mxu0 0.0
    %1229 = vmatpush1.msra.mxu0 0.0
    %1230 = vmatprep.subr.mxu0 0.0
    %1231 = vmatpush1.msra.mxu0 %v148
    %1232 = vmatprep.subr.mxu0 0.0
    %1233 = vmatpush2.msra.mxu0 0.0
    %1234 = vmatprep.subr.mxu0 0.0
    %1235 = vmatpush2.msra.mxu0 0.0
    %1236 = vmatprep.subr.mxu0 0.0
    %1237 = vmatpush2.msra.mxu0 0.0
    %1238 = vmatprep.subr.mxu0 0.0
    %1239 = vmatpush2.msra.mxu0 0.0
    %1240 = vmatprep.subr.mxu0 0.0
    %1241 = vmatpush2.msra.mxu0 0.0
    %1242 = vmatprep.subr.mxu0 0.0
    %1243 = vmatpush2.msra.mxu0 0.0
    %1244 = vmatprep.subr.mxu0 0.0
    %1245 = vmatpush2.msra.mxu0 0.0
    %1246 = vmatprep.subr.mxu0 0.0
    %1247 = vmatpush2.msra.mxu0 0.0
    %1248 = vmatprep.subr.mxu0 0.0
    %1249 = vmatpush2.msra.mxu0 0.0
    %1250 = vmatprep.subr.mxu0 0.0
    %1251 = vmatpush2.msra.mxu0 0.0
    %1252 = vmatprep.subr.mxu0 0.0
    %1253 = vmatpush2.msra.mxu0 0.0
    %1254 = vmatprep.subr.mxu0 0.0
    %1255 = vmatpush2.msra.mxu0 0.0
    %1256 = vmatprep.subr.mxu0 0.0
    %1257 = vmatpush2.msra.mxu0 0.0
    %1258 = vmatprep.subr.mxu0 0.0
    %1259 = vmatpush2.msra.mxu0 0.0
    %1260 = vmatprep.subr.mxu0 0.0
    %1261 = vmatpush2.msra.mxu0 0.0
    %1262 = vmatprep.subr.mxu0 0.0
    %1263 = vmatpush2.msra.mxu0 0.0
    %1264 = vmatprep.mubr.f32.mxu0 0.0
    %1265 = vmatmul.mubr.f32.gmra.mxu0 %v1195
    %v1266 = vpop.f32.mrf.mxu0
    %v1267 = vadd.f32 0.0, %v1266
    %v1268 = vpop.f32.mrf.mxu0
    %1269 = vmatprep.mubr.f32.mxu0 0.0
    %1270 = vmatmul.mubr.f32.gmra.mxu0 %v1198
    %v1271 = vpop.f32.mrf.mxu0
    %v1272 = vadd.f32 0.0, %v1271
    %v1273 = vpop.f32.mrf.mxu0
    %1274 = vdwg.mxu0
    %v1275 = vadd.f32 %v992, %v1267
    %v1276 = vadd.f32 %v993, %v1272
    %v1277 = vld [vmem:[%s5] sm:$0x1]
    %v1279 = vlaneseq
    %v1280 = vshrl.u32 %v1279, 7
    %v1281 = vsub.s32 0, %v1280
    %v1282 = vrot.slane %v1277, %v1281
    %v1284 = vadd.f32 %v1275, %v1282
    %v1285 = vadd.f32 %v1276, %v1282
    %v1286 = vadd.f32 %v48, %v1284
    %v1287 = vadd.f32 %v49, %v1285
    %v1288 = vld [vmem:[%s6] sm:$0x1]
    %v1289 = vld [vmem:[%s7] sm:$0x1]
    %v1290 = vsel %vm63, %v1286, 0.0
    %1291 = vadd.xlane.f32.xlu0 %v1290
    %v1292 = vpop.xlane.xlu0 %1291
    %v1293 = vsel %vm63, %v1287, 0.0
    %1294 = vadd.xlane.f32.xlu0 %v1293
    %v1295 = vpop.xlane.xlu0 %1294
    %v1296 = vrcp.pop 32.0
    %v1297 = vmul.f32 %v1292, %v1296
    %v1298 = vmul.f32 %v1295, %v1296
    %v1299 = vsub.f32 %v1286, %v1297
    %v1300 = vsub.f32 %v1287, %v1298
    %v1301 = vmul.f32 %v1299, %v1299
    %v1302 = vmul.f32 %v1300, %v1300
    %v1303 = vsel %vm63, %v1301, 0.0
    %1304 = vadd.xlane.f32.xlu0 %v1303
    %v1305 = vpop.xlane.xlu0 %1304
    %v1306 = vsel %vm63, %v1302, 0.0
    %1307 = vadd.xlane.f32.xlu0 %v1306
    %v1308 = vpop.xlane.xlu0 %1307
    %v1309 = vmul.f32 %v1305, %v1296
    %v1310 = vmul.f32 %v1308, %v1296
    %v1311 = vadd.f32 %v1309, 1e-12
    %v1312 = vadd.f32 %v1310, 1e-12
    %v1313 = vrsqrt.pop %v1311
    %v1314 = vrsqrt.pop %v1312
    %v1315 = vmul.f32 %v1299, %v1313
    %v1316 = vmul.f32 %v1300, %v1314
    %v1318 = vlaneseq
    %v1319 = vshrl.u32 %v1318, 7
    %v1320 = vsub.s32 0, %v1319
    %v1321 = vrot.slane %v1288, %v1320
    %v1323 = vmul.f32 %v1315, %v1321
    %v1324 = vmul.f32 %v1316, %v1321
    %v1326 = vlaneseq
    %v1327 = vshrl.u32 %v1326, 7
    %v1328 = vsub.s32 0, %v1327
    %v1329 = vrot.slane %v1289, %v1328
    %v1331 = vadd.f32 %v1323, %v1329
    %v1332 = vadd.f32 %v1324, %v1329
    %v1333 = vld [vmem:[%s8] sm:$0xff]
    %v1334 = vld [vmem:[%s8 + $0x8] sm:$0xff]
    %v1335 = vld [vmem:[%s8 + $0x10] sm:$0xff]
    %v1336 = vld [vmem:[%s8 + $0x18] sm:$0xff]
    %v1337 = vld [vmem:[%s9] sm:$0x1]
    %v1339 = vlaneseq
    %v1340 = vshrl.u32 %v1339, 7
    %v1341 = vsub.s32 0, %v1340
    %v1342 = vrot.slane %v1337, %v1341
    %v1345 = vsel %vm63, %v1331, 0
    %v1348 = vsel %vm63, %v1332, 0
    %1350 = vmatprep.subr.mxu0 0.0
    %1351 = vmatpush1.msra.mxu0 0.0
    %1352 = vmatprep.subr.mxu0 0.0
    %1353 = vmatpush1.msra.mxu0 0.0
    %1354 = vmatprep.subr.mxu0 0.0
    %1355 = vmatpush1.msra.mxu0 0.0
    %1356 = vmatprep.subr.mxu0 0.0
    %1357 = vmatpush1.msra.mxu0 0.0
    %1358 = vmatprep.subr.mxu0 0.0
    %1359 = vmatpush1.msra.mxu0 0.0
    %1360 = vmatprep.subr.mxu0 0.0
    %1361 = vmatpush1.msra.mxu0 0.0
    %1362 = vmatprep.subr.mxu0 0.0
    %1363 = vmatpush1.msra.mxu0 0.0
    %1364 = vmatprep.subr.mxu0 0.0
    %1365 = vmatpush1.msra.mxu0 0.0
    %1366 = vmatprep.subr.mxu0 0.0
    %1367 = vmatpush1.msra.mxu0 0.0
    %1368 = vmatprep.subr.mxu0 0.0
    %1369 = vmatpush1.msra.mxu0 0.0
    %1370 = vmatprep.subr.mxu0 0.0
    %1371 = vmatpush1.msra.mxu0 0.0
    %1372 = vmatprep.subr.mxu0 0.0
    %1373 = vmatpush1.msra.mxu0 0.0
    %1374 = vmatprep.subr.mxu0 0.0
    %1375 = vmatpush1.msra.mxu0 %v1336
    %1376 = vmatprep.subr.mxu0 0.0
    %1377 = vmatpush1.msra.mxu0 %v1335
    %1378 = vmatprep.subr.mxu0 0.0
    %1379 = vmatpush1.msra.mxu0 %v1334
    %1380 = vmatprep.subr.mxu0 0.0
    %1381 = vmatpush1.msra.mxu0 %v1333
    %1382 = vmatprep.subr.mxu0 0.0
    %1383 = vmatpush2.msra.mxu0 0.0
    %1384 = vmatprep.subr.mxu0 0.0
    %1385 = vmatpush2.msra.mxu0 0.0
    %1386 = vmatprep.subr.mxu0 0.0
    %1387 = vmatpush2.msra.mxu0 0.0
    %1388 = vmatprep.subr.mxu0 0.0
    %1389 = vmatpush2.msra.mxu0 0.0
    %1390 = vmatprep.subr.mxu0 0.0
    %1391 = vmatpush2.msra.mxu0 0.0
    %1392 = vmatprep.subr.mxu0 0.0
    %1393 = vmatpush2.msra.mxu0 0.0
    %1394 = vmatprep.subr.mxu0 0.0
    %1395 = vmatpush2.msra.mxu0 0.0
    %1396 = vmatprep.subr.mxu0 0.0
    %1397 = vmatpush2.msra.mxu0 0.0
    %1398 = vmatprep.subr.mxu0 0.0
    %1399 = vmatpush2.msra.mxu0 0.0
    %1400 = vmatprep.subr.mxu0 0.0
    %1401 = vmatpush2.msra.mxu0 0.0
    %1402 = vmatprep.subr.mxu0 0.0
    %1403 = vmatpush2.msra.mxu0 0.0
    %1404 = vmatprep.subr.mxu0 0.0
    %1405 = vmatpush2.msra.mxu0 0.0
    %1406 = vmatprep.subr.mxu0 0.0
    %1407 = vmatpush2.msra.mxu0 0.0
    %1408 = vmatprep.subr.mxu0 0.0
    %1409 = vmatpush2.msra.mxu0 0.0
    %1410 = vmatprep.subr.mxu0 0.0
    %1411 = vmatpush2.msra.mxu0 0.0
    %1412 = vmatprep.subr.mxu0 0.0
    %1413 = vmatpush2.msra.mxu0 0.0
    %1414 = vmatprep.mubr.f32.mxu0 0.0
    %1415 = vmatmul.mubr.f32.gmra.mxu0 %v1345
    %v1416 = vpop.f32.mrf.mxu0
    %v1417 = vadd.f32 %v1342, %v1416
    %v1418 = vpop.f32.mrf.mxu0
    %1419 = vmatprep.mubr.f32.mxu0 0.0
    %1420 = vmatmul.mubr.f32.gmra.mxu0 %v1348
    %v1421 = vpop.f32.mrf.mxu0
    %v1422 = vadd.f32 %v1342, %v1421
    %v1423 = vpop.f32.mrf.mxu0
    %1424 = vdwg.mxu0
    %v1425 = vmul.f32 %v1417, 0.5
    %v1426 = vmul.f32 %v1422, 0.5
    %v1427 = vmul.f32 %v1417, 0.044715
    %v1428 = vmul.f32 %v1422, 0.044715
    %v1429 = vmul.f32 %v1427, %v1417
    %v1430 = vmul.f32 %v1428, %v1422
    %v1431 = vmul.f32 %v1429, %v1417
    %v1432 = vmul.f32 %v1430, %v1422
    %v1433 = vadd.f32 %v1417, %v1431
    %v1434 = vadd.f32 %v1422, %v1432
    %v1435 = vmul.f32 %v1433, 0.7978846
    %v1436 = vmul.f32 %v1434, 0.7978846
    %v1437 = vtanh.pop %v1435
    %v1438 = vtanh.pop %v1436
    %v1439 = vadd.f32 %v1437, 1.0
    %v1440 = vadd.f32 %v1438, 1.0
    %v1441 = vmul.f32 %v1425, %v1439
    %v1442 = vmul.f32 %v1426, %v1440
    %v1443 = vld [vmem:[%s10] sm:$0xff]
    %v1444 = vld [vmem:[%s10 + $0x8] sm:$0xff]
    %v1445 = vld [vmem:[%s10 + $0x10] sm:$0xff]
    %v1446 = vld [vmem:[%s10 + $0x18] sm:$0xff]
    %v1447 = vld [vmem:[%s10 + $0x20] sm:$0xff]
    %v1448 = vld [vmem:[%s10 + $0x28] sm:$0xff]
    %v1449 = vld [vmem:[%s10 + $0x30] sm:$0xff]
    %v1450 = vld [vmem:[%s10 + $0x38] sm:$0xff]
    %v1451 = vld [vmem:[%s11] sm:$0x1]
    %v1453 = vlaneseq
    %v1454 = vshrl.u32 %v1453, 7
    %v1455 = vsub.s32 0, %v1454
    %v1456 = vrot.slane %v1451, %v1455
    %vm1458 = vcmask 523264
    %v1460 = vsel %vm1458, %v1441, 0
    %v1463 = vsel %vm1458, %v1442, 0
    %1465 = vmatprep.subr.mxu0 0.0
    %1466 = vmatpush1.msra.mxu0 0.0
    %1467 = vmatprep.subr.mxu0 0.0
    %1468 = vmatpush1.msra.mxu0 0.0
    %1469 = vmatprep.subr.mxu0 0.0
    %1470 = vmatpush1.msra.mxu0 0.0
    %1471 = vmatprep.subr.mxu0 0.0
    %1472 = vmatpush1.msra.mxu0 0.0
    %1473 = vmatprep.subr.mxu0 0.0
    %1474 = vmatpush1.msra.mxu0 0.0
    %1475 = vmatprep.subr.mxu0 0.0
    %1476 = vmatpush1.msra.mxu0 0.0
    %1477 = vmatprep.subr.mxu0 0.0
    %1478 = vmatpush1.msra.mxu0 0.0
    %1479 = vmatprep.subr.mxu0 0.0
    %1480 = vmatpush1.msra.mxu0 0.0
    %1481 = vmatprep.subr.mxu0 0.0
    %1482 = vmatpush1.msra.mxu0 %v1450
    %1483 = vmatprep.subr.mxu0 0.0
    %1484 = vmatpush1.msra.mxu0 %v1449
    %1485 = vmatprep.subr.mxu0 0.0
    %1486 = vmatpush1.msra.mxu0 %v1448
    %1487 = vmatprep.subr.mxu0 0.0
    %1488 = vmatpush1.msra.mxu0 %v1447
    %1489 = vmatprep.subr.mxu0 0.0
    %1490 = vmatpush1.msra.mxu0 %v1446
    %1491 = vmatprep.subr.mxu0 0.0
    %1492 = vmatpush1.msra.mxu0 %v1445
    %1493 = vmatprep.subr.mxu0 0.0
    %1494 = vmatpush1.msra.mxu0 %v1444
    %1495 = vmatprep.subr.mxu0 0.0
    %1496 = vmatpush1.msra.mxu0 %v1443
    %1497 = vmatprep.subr.mxu0 0.0
    %1498 = vmatpush2.msra.mxu0 0.0
    %1499 = vmatprep.subr.mxu0 0.0
    %1500 = vmatpush2.msra.mxu0 0.0
    %1501 = vmatprep.subr.mxu0 0.0
    %1502 = vmatpush2.msra.mxu0 0.0
    %1503 = vmatprep.subr.mxu0 0.0
    %1504 = vmatpush2.msra.mxu0 0.0
    %1505 = vmatprep.subr.mxu0 0.0
    %1506 = vmatpush2.msra.mxu0 0.0
    %1507 = vmatprep.subr.mxu0 0.0
    %1508 = vmatpush2.msra.mxu0 0.0
    %1509 = vmatprep.subr.mxu0 0.0
    %1510 = vmatpush2.msra.mxu0 0.0
    %1511 = vmatprep.subr.mxu0 0.0
    %1512 = vmatpush2.msra.mxu0 0.0
    %1513 = vmatprep.subr.mxu0 0.0
    %1514 = vmatpush2.msra.mxu0 0.0
    %1515 = vmatprep.subr.mxu0 0.0
    %1516 = vmatpush2.msra.mxu0 0.0
    %1517 = vmatprep.subr.mxu0 0.0
    %1518 = vmatpush2.msra.mxu0 0.0
    %1519 = vmatprep.subr.mxu0 0.0
    %1520 = vmatpush2.msra.mxu0 0.0
    %1521 = vmatprep.subr.mxu0 0.0
    %1522 = vmatpush2.msra.mxu0 0.0
    %1523 = vmatprep.subr.mxu0 0.0
    %1524 = vmatpush2.msra.mxu0 0.0
    %1525 = vmatprep.subr.mxu0 0.0
    %1526 = vmatpush2.msra.mxu0 0.0
    %1527 = vmatprep.subr.mxu0 0.0
    %1528 = vmatpush2.msra.mxu0 0.0
    %1529 = vmatprep.mubr.f32.mxu0 0.0
    %1530 = vmatmul.mubr.f32.gmra.mxu0 %v1460
    %v1531 = vpop.f32.mrf.mxu0
    %v1532 = vadd.f32 %v1456, %v1531
    %v1533 = vpop.f32.mrf.mxu0
    %1534 = vmatprep.mubr.f32.mxu0 0.0
    %1535 = vmatmul.mubr.f32.gmra.mxu0 %v1463
    %v1536 = vpop.f32.mrf.mxu0
    %v1537 = vadd.f32 %v1456, %v1536
    %v1538 = vpop.f32.mrf.mxu0
    %1539 = vdwg.mxu0
    %v1540 = vadd.f32 %v1532, %v1331
    %v1541 = vadd.f32 %v1537, %v1332
    %v1542 = vld [vmem:[%s12] sm:$0x1]
    %v1543 = vld [vmem:[%s13] sm:$0x1]
    %v1544 = vsel %vm63, %v1540, 0.0
    %1545 = vadd.xlane.f32.xlu0 %v1544
    %v1546 = vpop.xlane.xlu0 %1545
    %v1547 = vsel %vm63, %v1541, 0.0
    %1548 = vadd.xlane.f32.xlu0 %v1547
    %v1549 = vpop.xlane.xlu0 %1548
    %v1550 = vmul.f32 %v1546, %v1296
    %v1551 = vmul.f32 %v1549, %v1296
    %v1552 = vsub.f32 %v1540, %v1550
    %v1553 = vsub.f32 %v1541, %v1551
    %v1554 = vmul.f32 %v1552, %v1552
    %v1555 = vmul.f32 %v1553, %v1553
    %v1556 = vsel %vm63, %v1554, 0.0
    %1557 = vadd.xlane.f32.xlu0 %v1556
    %v1558 = vpop.xlane.xlu0 %1557
    %v1559 = vsel %vm63, %v1555, 0.0
    %1560 = vadd.xlane.f32.xlu0 %v1559
    %v1561 = vpop.xlane.xlu0 %1560
    %v1562 = vmul.f32 %v1558, %v1296
    %v1563 = vmul.f32 %v1561, %v1296
    %v1564 = vadd.f32 %v1562, 1e-12
    %v1565 = vadd.f32 %v1563, 1e-12
    %v1566 = vrsqrt.pop %v1564
    %v1567 = vrsqrt.pop %v1565
    %v1568 = vmul.f32 %v1552, %v1566
    %v1569 = vmul.f32 %v1553, %v1567
    %v1571 = vlaneseq
    %v1572 = vshrl.u32 %v1571, 7
    %v1573 = vsub.s32 0, %v1572
    %v1574 = vrot.slane %v1542, %v1573
    %v1576 = vmul.f32 %v1568, %v1574
    %v1577 = vmul.f32 %v1569, %v1574
    %v1579 = vlaneseq
    %v1580 = vshrl.u32 %v1579, 7
    %v1581 = vsub.s32 0, %v1580
    %v1582 = vrot.slane %v1543, %v1581
    %v1584 = vadd.f32 %v1576, %v1582
    %v1585 = vadd.f32 %v1577, %v1582
    %s1586 = scalar_lea.vmem %s2, 32
    %v1587 = vld [vmem:[%s1586] sm:$0xff]
    %v1588 = vld [vmem:[%s1586 + $0x8] sm:$0xff]
    %v1589 = vld [vmem:[%s1586 + $0x10] sm:$0xff]
    %v1590 = vld [vmem:[%s1586 + $0x18] sm:$0xff]
    %s1591 = scalar_lea.vmem %s3, 1
    %v1592 = vld [vmem:[%s1591] sm:$0x1]
    %v1594 = vlaneseq
    %v1595 = vshrl.u32 %v1594, 7
    %v1596 = vsub.s32 0, %v1595
    %v1597 = vrot.slane %v1592, %v1596
    %v1600 = vsel %vm63, %v1584, 0
    %v1603 = vsel %vm63, %v1585, 0
    %1605 = vmatprep.subr.mxu0 0.0
    %1606 = vmatpush1.msra.mxu0 0.0
    %1607 = vmatprep.subr.mxu0 0.0
    %1608 = vmatpush1.msra.mxu0 0.0
    %1609 = vmatprep.subr.mxu0 0.0
    %1610 = vmatpush1.msra.mxu0 0.0
    %1611 = vmatprep.subr.mxu0 0.0
    %1612 = vmatpush1.msra.mxu0 0.0
    %1613 = vmatprep.subr.mxu0 0.0
    %1614 = vmatpush1.msra.mxu0 0.0
    %1615 = vmatprep.subr.mxu0 0.0
    %1616 = vmatpush1.msra.mxu0 0.0
    %1617 = vmatprep.subr.mxu0 0.0
    %1618 = vmatpush1.msra.mxu0 0.0
    %1619 = vmatprep.subr.mxu0 0.0
    %1620 = vmatpush1.msra.mxu0 0.0
    %1621 = vmatprep.subr.mxu0 0.0
    %1622 = vmatpush1.msra.mxu0 0.0
    %1623 = vmatprep.subr.mxu0 0.0
    %1624 = vmatpush1.msra.mxu0 0.0
    %1625 = vmatprep.subr.mxu0 0.0
    %1626 = vmatpush1.msra.mxu0 0.0
    %1627 = vmatprep.subr.mxu0 0.0
    %1628 = vmatpush1.msra.mxu0 0.0
    %1629 = vmatprep.subr.mxu0 0.0
    %1630 = vmatpush1.msra.mxu0 %v1590
    %1631 = vmatprep.subr.mxu0 0.0
    %1632 = vmatpush1.msra.mxu0 %v1589
    %1633 = vmatprep.subr.mxu0 0.0
    %1634 = vmatpush1.msra.mxu0 %v1588
    %1635 = vmatprep.subr.mxu0 0.0
    %1636 = vmatpush1.msra.mxu0 %v1587
    %1637 = vmatprep.subr.mxu0 0.0
    %1638 = vmatpush2.msra.mxu0 0.0
    %1639 = vmatprep.subr.mxu0 0.0
    %1640 = vmatpush2.msra.mxu0 0.0
    %1641 = vmatprep.subr.mxu0 0.0
    %1642 = vmatpush2.msra.mxu0 0.0
    %1643 = vmatprep.subr.mxu0 0.0
    %1644 = vmatpush2.msra.mxu0 0.0
    %1645 = vmatprep.subr.mxu0 0.0
    %1646 = vmatpush2.msra.mxu0 0.0
    %1647 = vmatprep.subr.mxu0 0.0
    %1648 = vmatpush2.msra.mxu0 0.0
    %1649 = vmatprep.subr.mxu0 0.0
    %1650 = vmatpush2.msra.mxu0 0.0
    %1651 = vmatprep.subr.mxu0 0.0
    %1652 = vmatpush2.msra.mxu0 0.0
    %1653 = vmatprep.subr.mxu0 0.0
    %1654 = vmatpush2.msra.mxu0 0.0
    %1655 = vmatprep.subr.mxu0 0.0
    %1656 = vmatpush2.msra.mxu0 0.0
    %1657 = vmatprep.subr.mxu0 0.0
    %1658 = vmatpush2.msra.mxu0 0.0
    %1659 = vmatprep.subr.mxu0 0.0
    %1660 = vmatpush2.msra.mxu0 0.0
    %1661 = vmatprep.subr.mxu0 0.0
    %1662 = vmatpush2.msra.mxu0 0.0
    %1663 = vmatprep.subr.mxu0 0.0
    %1664 = vmatpush2.msra.mxu0 0.0
    %1665 = vmatprep.subr.mxu0 0.0
    %1666 = vmatpush2.msra.mxu0 0.0
    %1667 = vmatprep.subr.mxu0 0.0
    %1668 = vmatpush2.msra.mxu0 0.0
    %1669 = vmatprep.mubr.f32.mxu0 0.0
    %1670 = vmatmul.mubr.f32.gmra.mxu0 %v1600
    %v1671 = vpop.f32.mrf.mxu0
    %v1672 = vadd.f32 %v1597, %v1671
    %v1673 = vpop.f32.mrf.mxu0
    %1674 = vmatprep.mubr.f32.mxu0 0.0
    %1675 = vmatmul.mubr.f32.gmra.mxu0 %v1603
    %v1676 = vpop.f32.mrf.mxu0
    %v1677 = vadd.f32 %v1597, %v1676
    %v1678 = vpop.f32.mrf.mxu0
    %1679 = vdwg.mxu0
    %s1680 = scalar_lea.vmem %s4, 32
    %v1681 = vld [vmem:[%s1680] sm:$0xff]
    %v1682 = vld [vmem:[%s1680 + $0x8] sm:$0xff]
    %v1683 = vld [vmem:[%s1680 + $0x10] sm:$0xff]
    %v1684 = vld [vmem:[%s1680 + $0x18] sm:$0xff]
    %1687 = vrot.lane.b32.xlu0 %v1672, 96
    %v1688 = vpop.permute.xlu0 %1687
    %1689 = vrot.lane.b32.xlu0 %v1677, 96
    %v1690 = vpop.permute.xlu0 %1689
    %v1691 = vsel %vm155, %v1672, 0
    %v1693 = vsel %vm155, %v1677, 0
    %v1695 = vsel %vm155, %v1688, 0
    %v1697 = vsel %vm155, %v1690, 0
    %1699 = vmatprep.subr.mxu0 0.0
    %1700 = vmatpush1.xpose.msra.mxu0 0.0
    %1701 = vmatprep.subr.mxu0 0.0
    %1702 = vmatpush1.xpose.msra.mxu0 0.0
    %1703 = vmatprep.subr.mxu0 0.0
    %1704 = vmatpush1.xpose.msra.mxu0 0.0
    %1705 = vmatprep.subr.mxu0 0.0
    %1706 = vmatpush1.xpose.msra.mxu0 0.0
    %1707 = vmatprep.subr.mxu0 0.0
    %1708 = vmatpush1.xpose.msra.mxu0 0.0
    %1709 = vmatprep.subr.mxu0 0.0
    %1710 = vmatpush1.xpose.msra.mxu0 0.0
    %1711 = vmatprep.subr.mxu0 0.0
    %1712 = vmatpush1.xpose.msra.mxu0 0.0
    %1713 = vmatprep.subr.mxu0 0.0
    %1714 = vmatpush1.xpose.msra.mxu0 0.0
    %1715 = vmatprep.subr.mxu0 0.0
    %1716 = vmatpush1.xpose.msra.mxu0 0.0
    %1717 = vmatprep.subr.mxu0 0.0
    %1718 = vmatpush1.xpose.msra.mxu0 0.0
    %1719 = vmatprep.subr.mxu0 0.0
    %1720 = vmatpush1.xpose.msra.mxu0 0.0
    %1721 = vmatprep.subr.mxu0 0.0
    %1722 = vmatpush1.xpose.msra.mxu0 0.0
    %1723 = vmatprep.subr.mxu0 0.0
    %1724 = vmatpush1.xpose.msra.mxu0 0.0
    %1725 = vmatprep.subr.mxu0 0.0
    %1726 = vmatpush1.xpose.msra.mxu0 0.0
    %1727 = vmatprep.subr.mxu0 0.0
    %1728 = vmatpush1.xpose.msra.mxu0 %v1697
    %1729 = vmatprep.subr.mxu0 0.0
    %1730 = vmatpush1.xpose.msra.mxu0 %v1695
    %1731 = vmatprep.subr.mxu0 0.0
    %1732 = vmatpush2.xpose.msra.mxu0 0.0
    %1733 = vmatprep.subr.mxu0 0.0
    %1734 = vmatpush2.xpose.msra.mxu0 0.0
    %1735 = vmatprep.subr.mxu0 0.0
    %1736 = vmatpush2.xpose.msra.mxu0 0.0
    %1737 = vmatprep.subr.mxu0 0.0
    %1738 = vmatpush2.xpose.msra.mxu0 0.0
    %1739 = vmatprep.subr.mxu0 0.0
    %1740 = vmatpush2.xpose.msra.mxu0 0.0
    %1741 = vmatprep.subr.mxu0 0.0
    %1742 = vmatpush2.xpose.msra.mxu0 0.0
    %1743 = vmatprep.subr.mxu0 0.0
    %1744 = vmatpush2.xpose.msra.mxu0 0.0
    %1745 = vmatprep.subr.mxu0 0.0
    %1746 = vmatpush2.xpose.msra.mxu0 0.0
    %1747 = vmatprep.subr.mxu0 0.0
    %1748 = vmatpush2.xpose.msra.mxu0 0.0
    %1749 = vmatprep.subr.mxu0 0.0
    %1750 = vmatpush2.xpose.msra.mxu0 0.0
    %1751 = vmatprep.subr.mxu0 0.0
    %1752 = vmatpush2.xpose.msra.mxu0 0.0
    %1753 = vmatprep.subr.mxu0 0.0
    %1754 = vmatpush2.xpose.msra.mxu0 0.0
    %1755 = vmatprep.subr.mxu0 0.0
    %1756 = vmatpush2.xpose.msra.mxu0 0.0
    %1757 = vmatprep.subr.mxu0 0.0
    %1758 = vmatpush2.xpose.msra.mxu0 0.0
    %1759 = vmatprep.subr.mxu0 0.0
    %1760 = vmatpush2.xpose.msra.mxu0 0.0
    %1761 = vmatprep.subr.mxu0 0.0
    %1762 = vmatpush2.xpose.msra.mxu0 0.0
    %1763 = vmatprep.mubr.f32.mxu0 0.0
    %1764 = vmatmul.mubr.f32.gmra.mxu0 %v1691
    %v1765 = vpop.f32.mrf.mxu0
    %v1766 = vadd.f32 %v50, %v1765
    %v1767 = vpop.f32.mrf.mxu0
    %1768 = vmatprep.mubr.f32.mxu0 0.0
    %1769 = vmatmul.mubr.f32.gmra.mxu0 %v1693
    %v1770 = vpop.f32.mrf.mxu0
    %v1771 = vadd.f32 %v51, %v1770
    %v1772 = vpop.f32.mrf.mxu0
    %1773 = vdwg.mxu0
    %v1774 = vsel %vm239, %v1766, -inf
    %1775 = vmax.xlane.f32.xlu0 %v1774
    %v1776 = vpop.xlane.xlu0 %1775
    %v1777 = vsel %vm239, %v1771, -inf
    %1778 = vmax.xlane.f32.xlu0 %v1777
    %v1779 = vpop.xlane.xlu0 %1778
    %v1780 = vsub.f32 %v1766, %v1776
    %v1781 = vsub.f32 %v1771, %v1779
    %v1782 = vmul.f32 %v1780, 1.442695
    %v1783 = vpow.pop %v1782
    %v1784 = vmul.f32 %v1781, 1.442695
    %v1785 = vpow.pop %v1784
    %v1786 = vsel %vm239, %v1783, 0.0
    %1787 = vadd.xlane.f32.xlu0 %v1786
    %v1788 = vpop.xlane.xlu0 %1787
    %v1789 = vsel %vm239, %v1785, 0.0
    %1790 = vadd.xlane.f32.xlu0 %v1789
    %v1791 = vpop.xlane.xlu0 %1790
    %v1792 = vrcp.pop %v1788
    %v1793 = vrcp.pop %v1791
    %v1794 = vmul.f32 %v1783, %v1792
    %v1795 = vmul.f32 %v1785, %v1793
    %1796 = vrot.lane.b32.xlu0 %v1672, 64
    %v1797 = vpop.permute.xlu0 %1796
    %1798 = vrot.lane.b32.xlu0 %v1677, 64
    %v1799 = vpop.permute.xlu0 %1798
    %v1803 = vsel %vm239, %v1794, 0
    %v1806 = vsel %vm239, %v1795, 0
    %1808 = vmatprep.subr.mxu0 0.0
    %1809 = vmatpush1.msra.mxu0 0.0
    %1810 = vmatprep.subr.mxu0 0.0
    %1811 = vmatpush1.msra.mxu0 0.0
    %1812 = vmatprep.subr.mxu0 0.0
    %1813 = vmatpush1.msra.mxu0 0.0
    %1814 = vmatprep.subr.mxu0 0.0
    %1815 = vmatpush1.msra.mxu0 0.0
    %1816 = vmatprep.subr.mxu0 0.0
    %1817 = vmatpush1.msra.mxu0 0.0
    %1818 = vmatprep.subr.mxu0 0.0
    %1819 = vmatpush1.msra.mxu0 0.0
    %1820 = vmatprep.subr.mxu0 0.0
    %1821 = vmatpush1.msra.mxu0 0.0
    %1822 = vmatprep.subr.mxu0 0.0
    %1823 = vmatpush1.msra.mxu0 0.0
    %1824 = vmatprep.subr.mxu0 0.0
    %1825 = vmatpush1.msra.mxu0 0.0
    %1826 = vmatprep.subr.mxu0 0.0
    %1827 = vmatpush1.msra.mxu0 0.0
    %1828 = vmatprep.subr.mxu0 0.0
    %1829 = vmatpush1.msra.mxu0 0.0
    %1830 = vmatprep.subr.mxu0 0.0
    %1831 = vmatpush1.msra.mxu0 0.0
    %1832 = vmatprep.subr.mxu0 0.0
    %1833 = vmatpush1.msra.mxu0 0.0
    %1834 = vmatprep.subr.mxu0 0.0
    %1835 = vmatpush1.msra.mxu0 0.0
    %1836 = vmatprep.subr.mxu0 0.0
    %1837 = vmatpush1.msra.mxu0 %v1799
    %1838 = vmatprep.subr.mxu0 0.0
    %1839 = vmatpush1.msra.mxu0 %v1797
    %1840 = vmatprep.subr.mxu0 0.0
    %1841 = vmatpush2.msra.mxu0 0.0
    %1842 = vmatprep.subr.mxu0 0.0
    %1843 = vmatpush2.msra.mxu0 0.0
    %1844 = vmatprep.subr.mxu0 0.0
    %1845 = vmatpush2.msra.mxu0 0.0
    %1846 = vmatprep.subr.mxu0 0.0
    %1847 = vmatpush2.msra.mxu0 0.0
    %1848 = vmatprep.subr.mxu0 0.0
    %1849 = vmatpush2.msra.mxu0 0.0
    %1850 = vmatprep.subr.mxu0 0.0
    %1851 = vmatpush2.msra.mxu0 0.0
    %1852 = vmatprep.subr.mxu0 0.0
    %1853 = vmatpush2.msra.mxu0 0.0
    %1854 = vmatprep.subr.mxu0 0.0
    %1855 = vmatpush2.msra.mxu0 0.0
    %1856 = vmatprep.subr.mxu0 0.0
    %1857 = vmatpush2.msra.mxu0 0.0
    %1858 = vmatprep.subr.mxu0 0.0
    %1859 = vmatpush2.msra.mxu0 0.0
    %1860 = vmatprep.subr.mxu0 0.0
    %1861 = vmatpush2.msra.mxu0 0.0
    %1862 = vmatprep.subr.mxu0 0.0
    %1863 = vmatpush2.msra.mxu0 0.0
    %1864 = vmatprep.subr.mxu0 0.0
    %1865 = vmatpush2.msra.mxu0 0.0
    %1866 = vmatprep.subr.mxu0 0.0
    %1867 = vmatpush2.msra.mxu0 0.0
    %1868 = vmatprep.subr.mxu0 0.0
    %1869 = vmatpush2.msra.mxu0 0.0
    %1870 = vmatprep.subr.mxu0 0.0
    %1871 = vmatpush2.msra.mxu0 0.0
    %1872 = vmatprep.mubr.f32.mxu0 0.0
    %1873 = vmatmul.mubr.f32.gmra.mxu0 %v1803
    %v1874 = vpop.f32.mrf.mxu0
    %v1875 = vadd.f32 0.0, %v1874
    %v1876 = vpop.f32.mrf.mxu0
    %1877 = vmatprep.mubr.f32.mxu0 0.0
    %1878 = vmatmul.mubr.f32.gmra.mxu0 %v1806
    %v1879 = vpop.f32.mrf.mxu0
    %v1880 = vadd.f32 0.0, %v1879
    %v1881 = vpop.f32.mrf.mxu0
    %1882 = vdwg.mxu0
    %1883 = vrot.lane.b32.xlu0 %v1672, 120
    %v1884 = vpop.permute.xlu0 %1883
    %1885 = vrot.lane.b32.xlu0 %v1677, 120
    %v1886 = vpop.permute.xlu0 %1885
    %1887 = vrot.lane.b32.xlu0 %v1672, 88
    %v1888 = vpop.permute.xlu0 %1887
    %1889 = vrot.lane.b32.xlu0 %v1677, 88
    %v1890 = vpop.permute.xlu0 %1889
    %v1891 = vsel %vm155, %v1884, 0
    %v1893 = vsel %vm155, %v1886, 0
    %v1895 = vsel %vm155, %v1888, 0
    %v1897 = vsel %vm155, %v1890, 0
    %1899 = vmatprep.subr.mxu0 0.0
    %1900 = vmatpush1.xpose.msra.mxu0 0.0
    %1901 = vmatprep.subr.mxu0 0.0
    %1902 = vmatpush1.xpose.msra.mxu0 0.0
    %1903 = vmatprep.subr.mxu0 0.0
    %1904 = vmatpush1.xpose.msra.mxu0 0.0
    %1905 = vmatprep.subr.mxu0 0.0
    %1906 = vmatpush1.xpose.msra.mxu0 0.0
    %1907 = vmatprep.subr.mxu0 0.0
    %1908 = vmatpush1.xpose.msra.mxu0 0.0
    %1909 = vmatprep.subr.mxu0 0.0
    %1910 = vmatpush1.xpose.msra.mxu0 0.0
    %1911 = vmatprep.subr.mxu0 0.0
    %1912 = vmatpush1.xpose.msra.mxu0 0.0
    %1913 = vmatprep.subr.mxu0 0.0
    %1914 = vmatpush1.xpose.msra.mxu0 0.0
    %1915 = vmatprep.subr.mxu0 0.0
    %1916 = vmatpush1.xpose.msra.mxu0 0.0
    %1917 = vmatprep.subr.mxu0 0.0
    %1918 = vmatpush1.xpose.msra.mxu0 0.0
    %1919 = vmatprep.subr.mxu0 0.0
    %1920 = vmatpush1.xpose.msra.mxu0 0.0
    %1921 = vmatprep.subr.mxu0 0.0
    %1922 = vmatpush1.xpose.msra.mxu0 0.0
    %1923 = vmatprep.subr.mxu0 0.0
    %1924 = vmatpush1.xpose.msra.mxu0 0.0
    %1925 = vmatprep.subr.mxu0 0.0
    %1926 = vmatpush1.xpose.msra.mxu0 0.0
    %1927 = vmatprep.subr.mxu0 0.0
    %1928 = vmatpush1.xpose.msra.mxu0 %v1897
    %1929 = vmatprep.subr.mxu0 0.0
    %1930 = vmatpush1.xpose.msra.mxu0 %v1895
    %1931 = vmatprep.subr.mxu0 0.0
    %1932 = vmatpush2.xpose.msra.mxu0 0.0
    %1933 = vmatprep.subr.mxu0 0.0
    %1934 = vmatpush2.xpose.msra.mxu0 0.0
    %1935 = vmatprep.subr.mxu0 0.0
    %1936 = vmatpush2.xpose.msra.mxu0 0.0
    %1937 = vmatprep.subr.mxu0 0.0
    %1938 = vmatpush2.xpose.msra.mxu0 0.0
    %1939 = vmatprep.subr.mxu0 0.0
    %1940 = vmatpush2.xpose.msra.mxu0 0.0
    %1941 = vmatprep.subr.mxu0 0.0
    %1942 = vmatpush2.xpose.msra.mxu0 0.0
    %1943 = vmatprep.subr.mxu0 0.0
    %1944 = vmatpush2.xpose.msra.mxu0 0.0
    %1945 = vmatprep.subr.mxu0 0.0
    %1946 = vmatpush2.xpose.msra.mxu0 0.0
    %1947 = vmatprep.subr.mxu0 0.0
    %1948 = vmatpush2.xpose.msra.mxu0 0.0
    %1949 = vmatprep.subr.mxu0 0.0
    %1950 = vmatpush2.xpose.msra.mxu0 0.0
    %1951 = vmatprep.subr.mxu0 0.0
    %1952 = vmatpush2.xpose.msra.mxu0 0.0
    %1953 = vmatprep.subr.mxu0 0.0
    %1954 = vmatpush2.xpose.msra.mxu0 0.0
    %1955 = vmatprep.subr.mxu0 0.0
    %1956 = vmatpush2.xpose.msra.mxu0 0.0
    %1957 = vmatprep.subr.mxu0 0.0
    %1958 = vmatpush2.xpose.msra.mxu0 0.0
    %1959 = vmatprep.subr.mxu0 0.0
    %1960 = vmatpush2.xpose.msra.mxu0 0.0
    %1961 = vmatprep.subr.mxu0 0.0
    %1962 = vmatpush2.xpose.msra.mxu0 0.0
    %1963 = vmatprep.mubr.f32.mxu0 0.0
    %1964 = vmatmul.mubr.f32.gmra.mxu0 %v1891
    %v1965 = vpop.f32.mrf.mxu0
    %v1966 = vadd.f32 %v50, %v1965
    %v1967 = vpop.f32.mrf.mxu0
    %1968 = vmatprep.mubr.f32.mxu0 0.0
    %1969 = vmatmul.mubr.f32.gmra.mxu0 %v1893
    %v1970 = vpop.f32.mrf.mxu0
    %v1971 = vadd.f32 %v51, %v1970
    %v1972 = vpop.f32.mrf.mxu0
    %1973 = vdwg.mxu0
    %v1974 = vsel %vm239, %v1966, -inf
    %1975 = vmax.xlane.f32.xlu0 %v1974
    %v1976 = vpop.xlane.xlu0 %1975
    %v1977 = vsel %vm239, %v1971, -inf
    %1978 = vmax.xlane.f32.xlu0 %v1977
    %v1979 = vpop.xlane.xlu0 %1978
    %v1980 = vsub.f32 %v1966, %v1976
    %v1981 = vsub.f32 %v1971, %v1979
    %v1982 = vmul.f32 %v1980, 1.442695
    %v1983 = vpow.pop %v1982
    %v1984 = vmul.f32 %v1981, 1.442695
    %v1985 = vpow.pop %v1984
    %v1986 = vsel %vm239, %v1983, 0.0
    %1987 = vadd.xlane.f32.xlu0 %v1986
    %v1988 = vpop.xlane.xlu0 %1987
    %v1989 = vsel %vm239, %v1985, 0.0
    %1990 = vadd.xlane.f32.xlu0 %v1989
    %v1991 = vpop.xlane.xlu0 %1990
    %v1992 = vrcp.pop %v1988
    %v1993 = vrcp.pop %v1991
    %v1994 = vmul.f32 %v1983, %v1992
    %v1995 = vmul.f32 %v1985, %v1993
    %1996 = vrot.lane.b32.xlu0 %v1672, 56
    %v1997 = vpop.permute.xlu0 %1996
    %1998 = vrot.lane.b32.xlu0 %v1677, 56
    %v1999 = vpop.permute.xlu0 %1998
    %v2003 = vsel %vm239, %v1994, 0
    %v2006 = vsel %vm239, %v1995, 0
    %2008 = vmatprep.subr.mxu0 0.0
    %2009 = vmatpush1.msra.mxu0 0.0
    %2010 = vmatprep.subr.mxu0 0.0
    %2011 = vmatpush1.msra.mxu0 0.0
    %2012 = vmatprep.subr.mxu0 0.0
    %2013 = vmatpush1.msra.mxu0 0.0
    %2014 = vmatprep.subr.mxu0 0.0
    %2015 = vmatpush1.msra.mxu0 0.0
    %2016 = vmatprep.subr.mxu0 0.0
    %2017 = vmatpush1.msra.mxu0 0.0
    %2018 = vmatprep.subr.mxu0 0.0
    %2019 = vmatpush1.msra.mxu0 0.0
    %2020 = vmatprep.subr.mxu0 0.0
    %2021 = vmatpush1.msra.mxu0 0.0
    %2022 = vmatprep.subr.mxu0 0.0
    %2023 = vmatpush1.msra.mxu0 0.0
    %2024 = vmatprep.subr.mxu0 0.0
    %2025 = vmatpush1.msra.mxu0 0.0
    %2026 = vmatprep.subr.mxu0 0.0
    %2027 = vmatpush1.msra.mxu0 0.0
    %2028 = vmatprep.subr.mxu0 0.0
    %2029 = vmatpush1.msra.mxu0 0.0
    %2030 = vmatprep.subr.mxu0 0.0
    %2031 = vmatpush1.msra.mxu0 0.0
    %2032 = vmatprep.subr.mxu0 0.0
    %2033 = vmatpush1.msra.mxu0 0.0
    %2034 = vmatprep.subr.mxu0 0.0
    %2035 = vmatpush1.msra.mxu0 0.0
    %2036 = vmatprep.subr.mxu0 0.0
    %2037 = vmatpush1.msra.mxu0 %v1999
    %2038 = vmatprep.subr.mxu0 0.0
    %2039 = vmatpush1.msra.mxu0 %v1997
    %2040 = vmatprep.subr.mxu0 0.0
    %2041 = vmatpush2.msra.mxu0 0.0
    %2042 = vmatprep.subr.mxu0 0.0
    %2043 = vmatpush2.msra.mxu0 0.0
    %2044 = vmatprep.subr.mxu0 0.0
    %2045 = vmatpush2.msra.mxu0 0.0
    %2046 = vmatprep.subr.mxu0 0.0
    %2047 = vmatpush2.msra.mxu0 0.0
    %2048 = vmatprep.subr.mxu0 0.0
    %2049 = vmatpush2.msra.mxu0 0.0
    %2050 = vmatprep.subr.mxu0 0.0
    %2051 = vmatpush2.msra.mxu0 0.0
    %2052 = vmatprep.subr.mxu0 0.0
    %2053 = vmatpush2.msra.mxu0 0.0
    %2054 = vmatprep.subr.mxu0 0.0
    %2055 = vmatpush2.msra.mxu0 0.0
    %2056 = vmatprep.subr.mxu0 0.0
    %2057 = vmatpush2.msra.mxu0 0.0
    %2058 = vmatprep.subr.mxu0 0.0
    %2059 = vmatpush2.msra.mxu0 0.0
    %2060 = vmatprep.subr.mxu0 0.0
    %2061 = vmatpush2.msra.mxu0 0.0
    %2062 = vmatprep.subr.mxu0 0.0
    %2063 = vmatpush2.msra.mxu0 0.0
    %2064 = vmatprep.subr.mxu0 0.0
    %2065 = vmatpush2.msra.mxu0 0.0
    %2066 = vmatprep.subr.mxu0 0.0
    %2067 = vmatpush2.msra.mxu0 0.0
    %2068 = vmatprep.subr.mxu0 0.0
    %2069 = vmatpush2.msra.mxu0 0.0
    %2070 = vmatprep.subr.mxu0 0.0
    %2071 = vmatpush2.msra.mxu0 0.0
    %2072 = vmatprep.mubr.f32.mxu0 0.0
    %2073 = vmatmul.mubr.f32.gmra.mxu0 %v2003
    %v2074 = vpop.f32.mrf.mxu0
    %v2075 = vadd.f32 0.0, %v2074
    %v2076 = vpop.f32.mrf.mxu0
    %2077 = vmatprep.mubr.f32.mxu0 0.0
    %2078 = vmatmul.mubr.f32.gmra.mxu0 %v2006
    %v2079 = vpop.f32.mrf.mxu0
    %v2080 = vadd.f32 0.0, %v2079
    %v2081 = vpop.f32.mrf.mxu0
    %2082 = vdwg.mxu0
    %v2084 = vsel %vm155, %v2075, 0
    %v2087 = vsel %vm155, %v2080, 0
    %2089 = vmatprep.subr.mxu0 0.0
    %2090 = vmatpush1.msra.mxu0 0.0
    %2091 = vmatprep.subr.mxu0 0.0
    %2092 = vmatpush1.msra.mxu0 0.0
    %2093 = vmatprep.subr.mxu0 0.0
    %2094 = vmatpush1.msra.mxu0 0.0
    %2095 = vmatprep.subr.mxu0 0.0
    %2096 = vmatpush1.msra.mxu0 0.0
    %2097 = vmatprep.subr.mxu0 0.0
    %2098 = vmatpush1.msra.mxu0 0.0
    %2099 = vmatprep.subr.mxu0 0.0
    %2100 = vmatpush1.msra.mxu0 0.0
    %2101 = vmatprep.subr.mxu0 0.0
    %2102 = vmatpush1.msra.mxu0 0.0
    %2103 = vmatprep.subr.mxu0 0.0
    %2104 = vmatpush1.msra.mxu0 0.0
    %2105 = vmatprep.subr.mxu0 0.0
    %2106 = vmatpush1.msra.mxu0 0.0
    %2107 = vmatprep.subr.mxu0 0.0
    %2108 = vmatpush1.msra.mxu0 0.0
    %2109 = vmatprep.subr.mxu0 0.0
    %2110 = vmatpush1.msra.mxu0 0.0
    %2111 = vmatprep.subr.mxu0 0.0
    %2112 = vmatpush1.msra.mxu0 0.0
    %2113 = vmatprep.subr.mxu0 0.0
    %2114 = vmatpush1.msra.mxu0 0.0
    %2115 = vmatprep.subr.mxu0 0.0
    %2116 = vmatpush1.msra.mxu0 0.0
    %2117 = vmatprep.subr.mxu0 0.0
    %2118 = vmatpush1.msra.mxu0 0.0
    %2119 = vmatprep.subr.mxu0 0.0
    %2120 = vmatpush1.msra.mxu0 %v1682
    %2121 = vmatprep.subr.mxu0 0.0
    %2122 = vmatpush2.msra.mxu0 0.0
    %2123 = vmatprep.subr.mxu0 0.0
    %2124 = vmatpush2.msra.mxu0 0.0
    %2125 = vmatprep.subr.mxu0 0.0
    %2126 = vmatpush2.msra.mxu0 0.0
    %2127 = vmatprep.subr.mxu0 0.0
    %2128 = vmatpush2.msra.mxu0 0.0
    %2129 = vmatprep.subr.mxu0 0.0
    %2130 = vmatpush2.msra.mxu0 0.0
    %2131 = vmatprep.subr.mxu0 0.0
    %2132 = vmatpush2.msra.mxu0 0.0
    %2133 = vmatprep.subr.mxu0 0.0
    %2134 = vmatpush2.msra.mxu0 0.0
    %2135 = vmatprep.subr.mxu0 0.0
    %2136 = vmatpush2.msra.mxu0 0.0
    %2137 = vmatprep.subr.mxu0 0.0
    %2138 = vmatpush2.msra.mxu0 0.0
    %2139 = vmatprep.subr.mxu0 0.0
    %2140 = vmatpush2.msra.mxu0 0.0
    %2141 = vmatprep.subr.mxu0 0.0
    %2142 = vmatpush2.msra.mxu0 0.0
    %2143 = vmatprep.subr.mxu0 0.0
    %2144 = vmatpush2.msra.mxu0 0.0
    %2145 = vmatprep.subr.mxu0 0.0
    %2146 = vmatpush2.msra.mxu0 0.0
    %2147 = vmatprep.subr.mxu0 0.0
    %2148 = vmatpush2.msra.mxu0 0.0
    %2149 = vmatprep.subr.mxu0 0.0
    %2150 = vmatpush2.msra.mxu0 0.0
    %2151 = vmatprep.subr.mxu0 0.0
    %2152 = vmatpush2.msra.mxu0 0.0
    %2153 = vmatprep.mubr.f32.mxu0 0.0
    %2154 = vmatmul.mubr.f32.gmra.mxu0 %v2084
    %v2155 = vpop.f32.mrf.mxu0
    %v2156 = vadd.f32 0.0, %v2155
    %v2157 = vpop.f32.mrf.mxu0
    %2158 = vmatprep.mubr.f32.mxu0 0.0
    %2159 = vmatmul.mubr.f32.gmra.mxu0 %v2087
    %v2160 = vpop.f32.mrf.mxu0
    %v2161 = vadd.f32 0.0, %v2160
    %v2162 = vpop.f32.mrf.mxu0
    %2163 = vdwg.mxu0
    %v2165 = vsel %vm155, %v1875, 0
    %v2168 = vsel %vm155, %v1880, 0
    %2170 = vmatprep.subr.mxu0 0.0
    %2171 = vmatpush1.msra.mxu0 0.0
    %2172 = vmatprep.subr.mxu0 0.0
    %2173 = vmatpush1.msra.mxu0 0.0
    %2174 = vmatprep.subr.mxu0 0.0
    %2175 = vmatpush1.msra.mxu0 0.0
    %2176 = vmatprep.subr.mxu0 0.0
    %2177 = vmatpush1.msra.mxu0 0.0
    %2178 = vmatprep.subr.mxu0 0.0
    %2179 = vmatpush1.msra.mxu0 0.0
    %2180 = vmatprep.subr.mxu0 0.0
    %2181 = vmatpush1.msra.mxu0 0.0
    %2182 = vmatprep.subr.mxu0 0.0
    %2183 = vmatpush1.msra.mxu0 0.0
    %2184 = vmatprep.subr.mxu0 0.0
    %2185 = vmatpush1.msra.mxu0 0.0
    %2186 = vmatprep.subr.mxu0 0.0
    %2187 = vmatpush1.msra.mxu0 0.0
    %2188 = vmatprep.subr.mxu0 0.0
    %2189 = vmatpush1.msra.mxu0 0.0
    %2190 = vmatprep.subr.mxu0 0.0
    %2191 = vmatpush1.msra.mxu0 0.0
    %2192 = vmatprep.subr.mxu0 0.0
    %2193 = vmatpush1.msra.mxu0 0.0
    %2194 = vmatprep.subr.mxu0 0.0
    %2195 = vmatpush1.msra.mxu0 0.0
    %2196 = vmatprep.subr.mxu0 0.0
    %2197 = vmatpush1.msra.mxu0 0.0
    %2198 = vmatprep.subr.mxu0 0.0
    %2199 = vmatpush1.msra.mxu0 0.0
    %2200 = vmatprep.subr.mxu0 0.0
    %2201 = vmatpush1.msra.mxu0 %v1681
    %2202 = vmatprep.subr.mxu0 0.0
    %2203 = vmatpush2.msra.mxu0 0.0
    %2204 = vmatprep.subr.mxu0 0.0
    %2205 = vmatpush2.msra.mxu0 0.0
    %2206 = vmatprep.subr.mxu0 0.0
    %2207 = vmatpush2.msra.mxu0 0.0
    %2208 = vmatprep.subr.mxu0 0.0
    %2209 = vmatpush2.msra.mxu0 0.0
    %2210 = vmatprep.subr.mxu0 0.0
    %2211 = vmatpush2.msra.mxu0 0.0
    %2212 = vmatprep.subr.mxu0 0.0
    %2213 = vmatpush2.msra.mxu0 0.0
    %2214 = vmatprep.subr.mxu0 0.0
    %2215 = vmatpush2.msra.mxu0 0.0
    %2216 = vmatprep.subr.mxu0 0.0
    %2217 = vmatpush2.msra.mxu0 0.0
    %2218 = vmatprep.subr.mxu0 0.0
    %2219 = vmatpush2.msra.mxu0 0.0
    %2220 = vmatprep.subr.mxu0 0.0
    %2221 = vmatpush2.msra.mxu0 0.0
    %2222 = vmatprep.subr.mxu0 0.0
    %2223 = vmatpush2.msra.mxu0 0.0
    %2224 = vmatprep.subr.mxu0 0.0
    %2225 = vmatpush2.msra.mxu0 0.0
    %2226 = vmatprep.subr.mxu0 0.0
    %2227 = vmatpush2.msra.mxu0 0.0
    %2228 = vmatprep.subr.mxu0 0.0
    %2229 = vmatpush2.msra.mxu0 0.0
    %2230 = vmatprep.subr.mxu0 0.0
    %2231 = vmatpush2.msra.mxu0 0.0
    %2232 = vmatprep.subr.mxu0 0.0
    %2233 = vmatpush2.msra.mxu0 0.0
    %2234 = vmatprep.mubr.f32.mxu0 0.0
    %2235 = vmatmul.mubr.f32.gmra.mxu0 %v2165
    %v2236 = vpop.f32.mrf.mxu0
    %v2237 = vadd.f32 %v2156, %v2236
    %v2238 = vpop.f32.mrf.mxu0
    %2239 = vmatprep.mubr.f32.mxu0 0.0
    %2240 = vmatmul.mubr.f32.gmra.mxu0 %v2168
    %v2241 = vpop.f32.mrf.mxu0
    %v2242 = vadd.f32 %v2161, %v2241
    %v2243 = vpop.f32.mrf.mxu0
    %2244 = vdwg.mxu0
    %2245 = vrot.lane.b32.xlu0 %v1672, 112
    %v2246 = vpop.permute.xlu0 %2245
    %2247 = vrot.lane.b32.xlu0 %v1677, 112
    %v2248 = vpop.permute.xlu0 %2247
    %2249 = vrot.lane.b32.xlu0 %v1672, 80
    %v2250 = vpop.permute.xlu0 %2249
    %2251 = vrot.lane.b32.xlu0 %v1677, 80
    %v2252 = vpop.permute.xlu0 %2251
    %v2253 = vsel %vm155, %v2246, 0
    %v2255 = vsel %vm155, %v2248, 0
    %v2257 = vsel %vm155, %v2250, 0
    %v2259 = vsel %vm155, %v2252, 0
    %2261 = vmatprep.subr.mxu0 0.0
    %2262 = vmatpush1.xpose.msra.mxu0 0.0
    %2263 = vmatprep.subr.mxu0 0.0
    %2264 = vmatpush1.xpose.msra.mxu0 0.0
    %2265 = vmatprep.subr.mxu0 0.0
    %2266 = vmatpush1.xpose.msra.mxu0 0.0
    %2267 = vmatprep.subr.mxu0 0.0
    %2268 = vmatpush1.xpose.msra.mxu0 0.0
    %2269 = vmatprep.subr.mxu0 0.0
    %2270 = vmatpush1.xpose.msra.mxu0 0.0
    %2271 = vmatprep.subr.mxu0 0.0
    %2272 = vmatpush1.xpose.msra.mxu0 0.0
    %2273 = vmatprep.subr.mxu0 0.0
    %2274 = vmatpush1.xpose.msra.mxu0 0.0
    %2275 = vmatprep.subr.mxu0 0.0
    %2276 = vmatpush1.xpose.msra.mxu0 0.0
    %2277 = vmatprep.subr.mxu0 0.0
    %2278 = vmatpush1.xpose.msra.mxu0 0.0
    %2279 = vmatprep.subr.mxu0 0.0
    %2280 = vmatpush1.xpose.msra.mxu0 0.0
    %2281 = vmatprep.subr.mxu0 0.0
    %2282 = vmatpush1.xpose.msra.mxu0 0.0
    %2283 = vmatprep.subr.mxu0 0.0
    %2284 = vmatpush1.xpose.msra.mxu0 0.0
    %2285 = vmatprep.subr.mxu0 0.0
    %2286 = vmatpush1.xpose.msra.mxu0 0.0
    %2287 = vmatprep.subr.mxu0 0.0
    %2288 = vmatpush1.xpose.msra.mxu0 0.0
    %2289 = vmatprep.subr.mxu0 0.0
    %2290 = vmatpush1.xpose.msra.mxu0 %v2259
    %2291 = vmatprep.subr.mxu0 0.0
    %2292 = vmatpush1.xpose.msra.mxu0 %v2257
    %2293 = vmatprep.subr.mxu0 0.0
    %2294 = vmatpush2.xpose.msra.mxu0 0.0
    %2295 = vmatprep.subr.mxu0 0.0
    %2296 = vmatpush2.xpose.msra.mxu0 0.0
    %2297 = vmatprep.subr.mxu0 0.0
    %2298 = vmatpush2.xpose.msra.mxu0 0.0
    %2299 = vmatprep.subr.mxu0 0.0
    %2300 = vmatpush2.xpose.msra.mxu0 0.0
    %2301 = vmatprep.subr.mxu0 0.0
    %2302 = vmatpush2.xpose.msra.mxu0 0.0
    %2303 = vmatprep.subr.mxu0 0.0
    %2304 = vmatpush2.xpose.msra.mxu0 0.0
    %2305 = vmatprep.subr.mxu0 0.0
    %2306 = vmatpush2.xpose.msra.mxu0 0.0
    %2307 = vmatprep.subr.mxu0 0.0
    %2308 = vmatpush2.xpose.msra.mxu0 0.0
    %2309 = vmatprep.subr.mxu0 0.0
    %2310 = vmatpush2.xpose.msra.mxu0 0.0
    %2311 = vmatprep.subr.mxu0 0.0
    %2312 = vmatpush2.xpose.msra.mxu0 0.0
    %2313 = vmatprep.subr.mxu0 0.0
    %2314 = vmatpush2.xpose.msra.mxu0 0.0
    %2315 = vmatprep.subr.mxu0 0.0
    %2316 = vmatpush2.xpose.msra.mxu0 0.0
    %2317 = vmatprep.subr.mxu0 0.0
    %2318 = vmatpush2.xpose.msra.mxu0 0.0
    %2319 = vmatprep.subr.mxu0 0.0
    %2320 = vmatpush2.xpose.msra.mxu0 0.0
    %2321 = vmatprep.subr.mxu0 0.0
    %2322 = vmatpush2.xpose.msra.mxu0 0.0
    %2323 = vmatprep.subr.mxu0 0.0
    %2324 = vmatpush2.xpose.msra.mxu0 0.0
    %2325 = vmatprep.mubr.f32.mxu0 0.0
    %2326 = vmatmul.mubr.f32.gmra.mxu0 %v2253
    %v2327 = vpop.f32.mrf.mxu0
    %v2328 = vadd.f32 %v50, %v2327
    %v2329 = vpop.f32.mrf.mxu0
    %2330 = vmatprep.mubr.f32.mxu0 0.0
    %2331 = vmatmul.mubr.f32.gmra.mxu0 %v2255
    %v2332 = vpop.f32.mrf.mxu0
    %v2333 = vadd.f32 %v51, %v2332
    %v2334 = vpop.f32.mrf.mxu0
    %2335 = vdwg.mxu0
    %v2336 = vsel %vm239, %v2328, -inf
    %2337 = vmax.xlane.f32.xlu0 %v2336
    %v2338 = vpop.xlane.xlu0 %2337
    %v2339 = vsel %vm239, %v2333, -inf
    %2340 = vmax.xlane.f32.xlu0 %v2339
    %v2341 = vpop.xlane.xlu0 %2340
    %v2342 = vsub.f32 %v2328, %v2338
    %v2343 = vsub.f32 %v2333, %v2341
    %v2344 = vmul.f32 %v2342, 1.442695
    %v2345 = vpow.pop %v2344
    %v2346 = vmul.f32 %v2343, 1.442695
    %v2347 = vpow.pop %v2346
    %v2348 = vsel %vm239, %v2345, 0.0
    %2349 = vadd.xlane.f32.xlu0 %v2348
    %v2350 = vpop.xlane.xlu0 %2349
    %v2351 = vsel %vm239, %v2347, 0.0
    %2352 = vadd.xlane.f32.xlu0 %v2351
    %v2353 = vpop.xlane.xlu0 %2352
    %v2354 = vrcp.pop %v2350
    %v2355 = vrcp.pop %v2353
    %v2356 = vmul.f32 %v2345, %v2354
    %v2357 = vmul.f32 %v2347, %v2355
    %2358 = vrot.lane.b32.xlu0 %v1672, 48
    %v2359 = vpop.permute.xlu0 %2358
    %2360 = vrot.lane.b32.xlu0 %v1677, 48
    %v2361 = vpop.permute.xlu0 %2360
    %v2365 = vsel %vm239, %v2356, 0
    %v2368 = vsel %vm239, %v2357, 0
    %2370 = vmatprep.subr.mxu0 0.0
    %2371 = vmatpush1.msra.mxu0 0.0
    %2372 = vmatprep.subr.mxu0 0.0
    %2373 = vmatpush1.msra.mxu0 0.0
    %2374 = vmatprep.subr.mxu0 0.0
    %2375 = vmatpush1.msra.mxu0 0.0
    %2376 = vmatprep.subr.mxu0 0.0
    %2377 = vmatpush1.msra.mxu0 0.0
    %2378 = vmatprep.subr.mxu0 0.0
    %2379 = vmatpush1.msra.mxu0 0.0
    %2380 = vmatprep.subr.mxu0 0.0
    %2381 = vmatpush1.msra.mxu0 0.0
    %2382 = vmatprep.subr.mxu0 0.0
    %2383 = vmatpush1.msra.mxu0 0.0
    %2384 = vmatprep.subr.mxu0 0.0
    %2385 = vmatpush1.msra.mxu0 0.0
    %2386 = vmatprep.subr.mxu0 0.0
    %2387 = vmatpush1.msra.mxu0 0.0
    %2388 = vmatprep.subr.mxu0 0.0
    %2389 = vmatpush1.msra.mxu0 0.0
    %2390 = vmatprep.subr.mxu0 0.0
    %2391 = vmatpush1.msra.mxu0 0.0
    %2392 = vmatprep.subr.mxu0 0.0
    %2393 = vmatpush1.msra.mxu0 0.0
    %2394 = vmatprep.subr.mxu0 0.0
    %2395 = vmatpush1.msra.mxu0 0.0
    %2396 = vmatprep.subr.mxu0 0.0
    %2397 = vmatpush1.msra.mxu0 0.0
    %2398 = vmatprep.subr.mxu0 0.0
    %2399 = vmatpush1.msra.mxu0 %v2361
    %2400 = vmatprep.subr.mxu0 0.0
    %2401 = vmatpush1.msra.mxu0 %v2359
    %2402 = vmatprep.subr.mxu0 0.0
    %2403 = vmatpush2.msra.mxu0 0.0
    %2404 = vmatprep.subr.mxu0 0.0
    %2405 = vmatpush2.msra.mxu0 0.0
    %2406 = vmatprep.subr.mxu0 0.0
    %2407 = vmatpush2.msra.mxu0 0.0
    %2408 = vmatprep.subr.mxu0 0.0
    %2409 = vmatpush2.msra.mxu0 0.0
    %2410 = vmatprep.subr.mxu0 0.0
    %2411 = vmatpush2.msra.mxu0 0.0
    %2412 = vmatprep.subr.mxu0 0.0
    %2413 = vmatpush2.msra.mxu0 0.0
    %2414 = vmatprep.subr.mxu0 0.0
    %2415 = vmatpush2.msra.mxu0 0.0
    %2416 = vmatprep.subr.mxu0 0.0
    %2417 = vmatpush2.msra.mxu0 0.0
    %2418 = vmatprep.subr.mxu0 0.0
    %2419 = vmatpush2.msra.mxu0 0.0
    %2420 = vmatprep.subr.mxu0 0.0
    %2421 = vmatpush2.msra.mxu0 0.0
    %2422 = vmatprep.subr.mxu0 0.0
    %2423 = vmatpush2.msra.mxu0 0.0
    %2424 = vmatprep.subr.mxu0 0.0
    %2425 = vmatpush2.msra.mxu0 0.0
    %2426 = vmatprep.subr.mxu0 0.0
    %2427 = vmatpush2.msra.mxu0 0.0
    %2428 = vmatprep.subr.mxu0 0.0
    %2429 = vmatpush2.msra.mxu0 0.0
    %2430 = vmatprep.subr.mxu0 0.0
    %2431 = vmatpush2.msra.mxu0 0.0
    %2432 = vmatprep.subr.mxu0 0.0
    %2433 = vmatpush2.msra.mxu0 0.0
    %2434 = vmatprep.mubr.f32.mxu0 0.0
    %2435 = vmatmul.mubr.f32.gmra.mxu0 %v2365
    %v2436 = vpop.f32.mrf.mxu0
    %v2437 = vadd.f32 0.0, %v2436
    %v2438 = vpop.f32.mrf.mxu0
    %2439 = vmatprep.mubr.f32.mxu0 0.0
    %2440 = vmatmul.mubr.f32.gmra.mxu0 %v2368
    %v2441 = vpop.f32.mrf.mxu0
    %v2442 = vadd.f32 0.0, %v2441
    %v2443 = vpop.f32.mrf.mxu0
    %2444 = vdwg.mxu0
    %v2446 = vsel %vm155, %v2437, 0
    %v2449 = vsel %vm155, %v2442, 0
    %2451 = vmatprep.subr.mxu0 0.0
    %2452 = vmatpush1.msra.mxu0 0.0
    %2453 = vmatprep.subr.mxu0 0.0
    %2454 = vmatpush1.msra.mxu0 0.0
    %2455 = vmatprep.subr.mxu0 0.0
    %2456 = vmatpush1.msra.mxu0 0.0
    %2457 = vmatprep.subr.mxu0 0.0
    %2458 = vmatpush1.msra.mxu0 0.0
    %2459 = vmatprep.subr.mxu0 0.0
    %2460 = vmatpush1.msra.mxu0 0.0
    %2461 = vmatprep.subr.mxu0 0.0
    %2462 = vmatpush1.msra.mxu0 0.0
    %2463 = vmatprep.subr.mxu0 0.0
    %2464 = vmatpush1.msra.mxu0 0.0
    %2465 = vmatprep.subr.mxu0 0.0
    %2466 = vmatpush1.msra.mxu0 0.0
    %2467 = vmatprep.subr.mxu0 0.0
    %2468 = vmatpush1.msra.mxu0 0.0
    %2469 = vmatprep.subr.mxu0 0.0
    %2470 = vmatpush1.msra.mxu0 0.0
    %2471 = vmatprep.subr.mxu0 0.0
    %2472 = vmatpush1.msra.mxu0 0.0
    %2473 = vmatprep.subr.mxu0 0.0
    %2474 = vmatpush1.msra.mxu0 0.0
    %2475 = vmatprep.subr.mxu0 0.0
    %2476 = vmatpush1.msra.mxu0 0.0
    %2477 = vmatprep.subr.mxu0 0.0
    %2478 = vmatpush1.msra.mxu0 0.0
    %2479 = vmatprep.subr.mxu0 0.0
    %2480 = vmatpush1.msra.mxu0 0.0
    %2481 = vmatprep.subr.mxu0 0.0
    %2482 = vmatpush1.msra.mxu0 %v1683
    %2483 = vmatprep.subr.mxu0 0.0
    %2484 = vmatpush2.msra.mxu0 0.0
    %2485 = vmatprep.subr.mxu0 0.0
    %2486 = vmatpush2.msra.mxu0 0.0
    %2487 = vmatprep.subr.mxu0 0.0
    %2488 = vmatpush2.msra.mxu0 0.0
    %2489 = vmatprep.subr.mxu0 0.0
    %2490 = vmatpush2.msra.mxu0 0.0
    %2491 = vmatprep.subr.mxu0 0.0
    %2492 = vmatpush2.msra.mxu0 0.0
    %2493 = vmatprep.subr.mxu0 0.0
    %2494 = vmatpush2.msra.mxu0 0.0
    %2495 = vmatprep.subr.mxu0 0.0
    %2496 = vmatpush2.msra.mxu0 0.0
    %2497 = vmatprep.subr.mxu0 0.0
    %2498 = vmatpush2.msra.mxu0 0.0
    %2499 = vmatprep.subr.mxu0 0.0
    %2500 = vmatpush2.msra.mxu0 0.0
    %2501 = vmatprep.subr.mxu0 0.0
    %2502 = vmatpush2.msra.mxu0 0.0
    %2503 = vmatprep.subr.mxu0 0.0
    %2504 = vmatpush2.msra.mxu0 0.0
    %2505 = vmatprep.subr.mxu0 0.0
    %2506 = vmatpush2.msra.mxu0 0.0
    %2507 = vmatprep.subr.mxu0 0.0
    %2508 = vmatpush2.msra.mxu0 0.0
    %2509 = vmatprep.subr.mxu0 0.0
    %2510 = vmatpush2.msra.mxu0 0.0
    %2511 = vmatprep.subr.mxu0 0.0
    %2512 = vmatpush2.msra.mxu0 0.0
    %2513 = vmatprep.subr.mxu0 0.0
    %2514 = vmatpush2.msra.mxu0 0.0
    %2515 = vmatprep.mubr.f32.mxu0 0.0
    %2516 = vmatmul.mubr.f32.gmra.mxu0 %v2446
    %v2517 = vpop.f32.mrf.mxu0
    %v2518 = vadd.f32 0.0, %v2517
    %v2519 = vpop.f32.mrf.mxu0
    %2520 = vmatprep.mubr.f32.mxu0 0.0
    %2521 = vmatmul.mubr.f32.gmra.mxu0 %v2449
    %v2522 = vpop.f32.mrf.mxu0
    %v2523 = vadd.f32 0.0, %v2522
    %v2524 = vpop.f32.mrf.mxu0
    %2525 = vdwg.mxu0
    %v2526 = vadd.f32 %v2237, %v2518
    %v2527 = vadd.f32 %v2242, %v2523
    %2528 = vrot.lane.b32.xlu0 %v1672, 104
    %v2529 = vpop.permute.xlu0 %2528
    %2530 = vrot.lane.b32.xlu0 %v1677, 104
    %v2531 = vpop.permute.xlu0 %2530
    %2532 = vrot.lane.b32.xlu0 %v1672, 72
    %v2533 = vpop.permute.xlu0 %2532
    %2534 = vrot.lane.b32.xlu0 %v1677, 72
    %v2535 = vpop.permute.xlu0 %2534
    %v2536 = vsel %vm155, %v2529, 0
    %v2538 = vsel %vm155, %v2531, 0
    %v2540 = vsel %vm155, %v2533, 0
    %v2542 = vsel %vm155, %v2535, 0
    %2544 = vmatprep.subr.mxu0 0.0
    %2545 = vmatpush1.xpose.msra.mxu0 0.0
    %2546 = vmatprep.subr.mxu0 0.0
    %2547 = vmatpush1.xpose.msra.mxu0 0.0
    %2548 = vmatprep.subr.mxu0 0.0
    %2549 = vmatpush1.xpose.msra.mxu0 0.0
    %2550 = vmatprep.subr.mxu0 0.0
    %2551 = vmatpush1.xpose.msra.mxu0 0.0
    %2552 = vmatprep.subr.mxu0 0.0
    %2553 = vmatpush1.xpose.msra.mxu0 0.0
    %2554 = vmatprep.subr.mxu0 0.0
    %2555 = vmatpush1.xpose.msra.mxu0 0.0
    %2556 = vmatprep.subr.mxu0 0.0
    %2557 = vmatpush1.xpose.msra.mxu0 0.0
    %2558 = vmatprep.subr.mxu0 0.0
    %2559 = vmatpush1.xpose.msra.mxu0 0.0
    %2560 = vmatprep.subr.mxu0 0.0
    %2561 = vmatpush1.xpose.msra.mxu0 0.0
    %2562 = vmatprep.subr.mxu0 0.0
    %2563 = vmatpush1.xpose.msra.mxu0 0.0
    %2564 = vmatprep.subr.mxu0 0.0
    %2565 = vmatpush1.xpose.msra.mxu0 0.0
    %2566 = vmatprep.subr.mxu0 0.0
    %2567 = vmatpush1.xpose.msra.mxu0 0.0
    %2568 = vmatprep.subr.mxu0 0.0
    %2569 = vmatpush1.xpose.msra.mxu0 0.0
    %2570 = vmatprep.subr.mxu0 0.0
    %2571 = vmatpush1.xpose.msra.mxu0 0.0
    %2572 = vmatprep.subr.mxu0 0.0
    %2573 = vmatpush1.xpose.msra.mxu0 %v2542
    %2574 = vmatprep.subr.mxu0 0.0
    %2575 = vmatpush1.xpose.msra.mxu0 %v2540
    %2576 = vmatprep.subr.mxu0 0.0
    %2577 = vmatpush2.xpose.msra.mxu0 0.0
    %2578 = vmatprep.subr.mxu0 0.0
    %2579 = vmatpush2.xpose.msra.mxu0 0.0
    %2580 = vmatprep.subr.mxu0 0.0
    %2581 = vmatpush2.xpose.msra.mxu0 0.0
    %2582 = vmatprep.subr.mxu0 0.0
    %2583 = vmatpush2.xpose.msra.mxu0 0.0
    %2584 = vmatprep.subr.mxu0 0.0
    %2585 = vmatpush2.xpose.msra.mxu0 0.0
    %2586 = vmatprep.subr.mxu0 0.0
    %2587 = vmatpush2.xpose.msra.mxu0 0.0
    %2588 = vmatprep.subr.mxu0 0.0
    %2589 = vmatpush2.xpose.msra.mxu0 0.0
    %2590 = vmatprep.subr.mxu0 0.0
    %2591 = vmatpush2.xpose.msra.mxu0 0.0
    %2592 = vmatprep.subr.mxu0 0.0
    %2593 = vmatpush2.xpose.msra.mxu0 0.0
    %2594 = vmatprep.subr.mxu0 0.0
    %2595 = vmatpush2.xpose.msra.mxu0 0.0
    %2596 = vmatprep.subr.mxu0 0.0
    %2597 = vmatpush2.xpose.msra.mxu0 0.0
    %2598 = vmatprep.subr.mxu0 0.0
    %2599 = vmatpush2.xpose.msra.mxu0 0.0
    %2600 = vmatprep.subr.mxu0 0.0
    %2601 = vmatpush2.xpose.msra.mxu0 0.0
    %2602 = vmatprep.subr.mxu0 0.0
    %2603 = vmatpush2.xpose.msra.mxu0 0.0
    %2604 = vmatprep.subr.mxu0 0.0
    %2605 = vmatpush2.xpose.msra.mxu0 0.0
    %2606 = vmatprep.subr.mxu0 0.0
    %2607 = vmatpush2.xpose.msra.mxu0 0.0
    %2608 = vmatprep.mubr.f32.mxu0 0.0
    %2609 = vmatmul.mubr.f32.gmra.mxu0 %v2536
    %v2610 = vpop.f32.mrf.mxu0
    %v2611 = vadd.f32 %v50, %v2610
    %v2612 = vpop.f32.mrf.mxu0
    %2613 = vmatprep.mubr.f32.mxu0 0.0
    %2614 = vmatmul.mubr.f32.gmra.mxu0 %v2538
    %v2615 = vpop.f32.mrf.mxu0
    %v2616 = vadd.f32 %v51, %v2615
    %v2617 = vpop.f32.mrf.mxu0
    %2618 = vdwg.mxu0
    %v2619 = vsel %vm239, %v2611, -inf
    %2620 = vmax.xlane.f32.xlu0 %v2619
    %v2621 = vpop.xlane.xlu0 %2620
    %v2622 = vsel %vm239, %v2616, -inf
    %2623 = vmax.xlane.f32.xlu0 %v2622
    %v2624 = vpop.xlane.xlu0 %2623
    %v2625 = vsub.f32 %v2611, %v2621
    %v2626 = vsub.f32 %v2616, %v2624
    %v2627 = vmul.f32 %v2625, 1.442695
    %v2628 = vpow.pop %v2627
    %v2629 = vmul.f32 %v2626, 1.442695
    %v2630 = vpow.pop %v2629
    %v2631 = vsel %vm239, %v2628, 0.0
    %2632 = vadd.xlane.f32.xlu0 %v2631
    %v2633 = vpop.xlane.xlu0 %2632
    %v2634 = vsel %vm239, %v2630, 0.0
    %2635 = vadd.xlane.f32.xlu0 %v2634
    %v2636 = vpop.xlane.xlu0 %2635
    %v2637 = vrcp.pop %v2633
    %v2638 = vrcp.pop %v2636
    %v2639 = vmul.f32 %v2628, %v2637
    %v2640 = vmul.f32 %v2630, %v2638
    %2641 = vrot.lane.b32.xlu0 %v1672, 40
    %v2642 = vpop.permute.xlu0 %2641
    %2643 = vrot.lane.b32.xlu0 %v1677, 40
    %v2644 = vpop.permute.xlu0 %2643
    %v2648 = vsel %vm239, %v2639, 0
    %v2651 = vsel %vm239, %v2640, 0
    %2653 = vmatprep.subr.mxu0 0.0
    %2654 = vmatpush1.msra.mxu0 0.0
    %2655 = vmatprep.subr.mxu0 0.0
    %2656 = vmatpush1.msra.mxu0 0.0
    %2657 = vmatprep.subr.mxu0 0.0
    %2658 = vmatpush1.msra.mxu0 0.0
    %2659 = vmatprep.subr.mxu0 0.0
    %2660 = vmatpush1.msra.mxu0 0.0
    %2661 = vmatprep.subr.mxu0 0.0
    %2662 = vmatpush1.msra.mxu0 0.0
    %2663 = vmatprep.subr.mxu0 0.0
    %2664 = vmatpush1.msra.mxu0 0.0
    %2665 = vmatprep.subr.mxu0 0.0
    %2666 = vmatpush1.msra.mxu0 0.0
    %2667 = vmatprep.subr.mxu0 0.0
    %2668 = vmatpush1.msra.mxu0 0.0
    %2669 = vmatprep.subr.mxu0 0.0
    %2670 = vmatpush1.msra.mxu0 0.0
    %2671 = vmatprep.subr.mxu0 0.0
    %2672 = vmatpush1.msra.mxu0 0.0
    %2673 = vmatprep.subr.mxu0 0.0
    %2674 = vmatpush1.msra.mxu0 0.0
    %2675 = vmatprep.subr.mxu0 0.0
    %2676 = vmatpush1.msra.mxu0 0.0
    %2677 = vmatprep.subr.mxu0 0.0
    %2678 = vmatpush1.msra.mxu0 0.0
    %2679 = vmatprep.subr.mxu0 0.0
    %2680 = vmatpush1.msra.mxu0 0.0
    %2681 = vmatprep.subr.mxu0 0.0
    %2682 = vmatpush1.msra.mxu0 %v2644
    %2683 = vmatprep.subr.mxu0 0.0
    %2684 = vmatpush1.msra.mxu0 %v2642
    %2685 = vmatprep.subr.mxu0 0.0
    %2686 = vmatpush2.msra.mxu0 0.0
    %2687 = vmatprep.subr.mxu0 0.0
    %2688 = vmatpush2.msra.mxu0 0.0
    %2689 = vmatprep.subr.mxu0 0.0
    %2690 = vmatpush2.msra.mxu0 0.0
    %2691 = vmatprep.subr.mxu0 0.0
    %2692 = vmatpush2.msra.mxu0 0.0
    %2693 = vmatprep.subr.mxu0 0.0
    %2694 = vmatpush2.msra.mxu0 0.0
    %2695 = vmatprep.subr.mxu0 0.0
    %2696 = vmatpush2.msra.mxu0 0.0
    %2697 = vmatprep.subr.mxu0 0.0
    %2698 = vmatpush2.msra.mxu0 0.0
    %2699 = vmatprep.subr.mxu0 0.0
    %2700 = vmatpush2.msra.mxu0 0.0
    %2701 = vmatprep.subr.mxu0 0.0
    %2702 = vmatpush2.msra.mxu0 0.0
    %2703 = vmatprep.subr.mxu0 0.0
    %2704 = vmatpush2.msra.mxu0 0.0
    %2705 = vmatprep.subr.mxu0 0.0
    %2706 = vmatpush2.msra.mxu0 0.0
    %2707 = vmatprep.subr.mxu0 0.0
    %2708 = vmatpush2.msra.mxu0 0.0
    %2709 = vmatprep.subr.mxu0 0.0
    %2710 = vmatpush2.msra.mxu0 0.0
    %2711 = vmatprep.subr.mxu0 0.0
    %2712 = vmatpush2.msra.mxu0 0.0
    %2713 = vmatprep.subr.mxu0 0.0
    %2714 = vmatpush2.msra.mxu0 0.0
    %2715 = vmatprep.subr.mxu0 0.0
    %2716 = vmatpush2.msra.mxu0 0.0
    %2717 = vmatprep.mubr.f32.mxu0 0.0
    %2718 = vmatmul.mubr.f32.gmra.mxu0 %v2648
    %v2719 = vpop.f32.mrf.mxu0
    %v2720 = vadd.f32 0.0, %v2719
    %v2721 = vpop.f32.mrf.mxu0
    %2722 = vmatprep.mubr.f32.mxu0 0.0
    %2723 = vmatmul.mubr.f32.gmra.mxu0 %v2651
    %v2724 = vpop.f32.mrf.mxu0
    %v2725 = vadd.f32 0.0, %v2724
    %v2726 = vpop.f32.mrf.mxu0
    %2727 = vdwg.mxu0
    %v2729 = vsel %vm155, %v2720, 0
    %v2732 = vsel %vm155, %v2725, 0
    %2734 = vmatprep.subr.mxu0 0.0
    %2735 = vmatpush1.msra.mxu0 0.0
    %2736 = vmatprep.subr.mxu0 0.0
    %2737 = vmatpush1.msra.mxu0 0.0
    %2738 = vmatprep.subr.mxu0 0.0
    %2739 = vmatpush1.msra.mxu0 0.0
    %2740 = vmatprep.subr.mxu0 0.0
    %2741 = vmatpush1.msra.mxu0 0.0
    %2742 = vmatprep.subr.mxu0 0.0
    %2743 = vmatpush1.msra.mxu0 0.0
    %2744 = vmatprep.subr.mxu0 0.0
    %2745 = vmatpush1.msra.mxu0 0.0
    %2746 = vmatprep.subr.mxu0 0.0
    %2747 = vmatpush1.msra.mxu0 0.0
    %2748 = vmatprep.subr.mxu0 0.0
    %2749 = vmatpush1.msra.mxu0 0.0
    %2750 = vmatprep.subr.mxu0 0.0
    %2751 = vmatpush1.msra.mxu0 0.0
    %2752 = vmatprep.subr.mxu0 0.0
    %2753 = vmatpush1.msra.mxu0 0.0
    %2754 = vmatprep.subr.mxu0 0.0
    %2755 = vmatpush1.msra.mxu0 0.0
    %2756 = vmatprep.subr.mxu0 0.0
    %2757 = vmatpush1.msra.mxu0 0.0
    %2758 = vmatprep.subr.mxu0 0.0
    %2759 = vmatpush1.msra.mxu0 0.0
    %2760 = vmatprep.subr.mxu0 0.0
    %2761 = vmatpush1.msra.mxu0 0.0
    %2762 = vmatprep.subr.mxu0 0.0
    %2763 = vmatpush1.msra.mxu0 0.0
    %2764 = vmatprep.subr.mxu0 0.0
    %2765 = vmatpush1.msra.mxu0 %v1684
    %2766 = vmatprep.subr.mxu0 0.0
    %2767 = vmatpush2.msra.mxu0 0.0
    %2768 = vmatprep.subr.mxu0 0.0
    %2769 = vmatpush2.msra.mxu0 0.0
    %2770 = vmatprep.subr.mxu0 0.0
    %2771 = vmatpush2.msra.mxu0 0.0
    %2772 = vmatprep.subr.mxu0 0.0
    %2773 = vmatpush2.msra.mxu0 0.0
    %2774 = vmatprep.subr.mxu0 0.0
    %2775 = vmatpush2.msra.mxu0 0.0
    %2776 = vmatprep.subr.mxu0 0.0
    %2777 = vmatpush2.msra.mxu0 0.0
    %2778 = vmatprep.subr.mxu0 0.0
    %2779 = vmatpush2.msra.mxu0 0.0
    %2780 = vmatprep.subr.mxu0 0.0
    %2781 = vmatpush2.msra.mxu0 0.0
    %2782 = vmatprep.subr.mxu0 0.0
    %2783 = vmatpush2.msra.mxu0 0.0
    %2784 = vmatprep.subr.mxu0 0.0
    %2785 = vmatpush2.msra.mxu0 0.0
    %2786 = vmatprep.subr.mxu0 0.0
    %2787 = vmatpush2.msra.mxu0 0.0
    %2788 = vmatprep.subr.mxu0 0.0
    %2789 = vmatpush2.msra.mxu0 0.0
    %2790 = vmatprep.subr.mxu0 0.0
    %2791 = vmatpush2.msra.mxu0 0.0
    %2792 = vmatprep.subr.mxu0 0.0
    %2793 = vmatpush2.msra.mxu0 0.0
    %2794 = vmatprep.subr.mxu0 0.0
    %2795 = vmatpush2.msra.mxu0 0.0
    %2796 = vmatprep.subr.mxu0 0.0
    %2797 = vmatpush2.msra.mxu0 0.0
    %2798 = vmatprep.mubr.f32.mxu0 0.0
    %2799 = vmatmul.mubr.f32.gmra.mxu0 %v2729
    %v2800 = vpop.f32.mrf.mxu0
    %v2801 = vadd.f32 0.0, %v2800
    %v2802 = vpop.f32.mrf.mxu0
    %2803 = vmatprep.mubr.f32.mxu0 0.0
    %2804 = vmatmul.mubr.f32.gmra.mxu0 %v2732
    %v2805 = vpop.f32.mrf.mxu0
    %v2806 = vadd.f32 0.0, %v2805
    %v2807 = vpop.f32.mrf.mxu0
    %2808 = vdwg.mxu0
    %v2809 = vadd.f32 %v2526, %v2801
    %v2810 = vadd.f32 %v2527, %v2806
    %s2811 = scalar_lea.vmem %s5, 1
    %v2812 = vld [vmem:[%s2811] sm:$0x1]
    %v2814 = vlaneseq
    %v2815 = vshrl.u32 %v2814, 7
    %v2816 = vsub.s32 0, %v2815
    %v2817 = vrot.slane %v2812, %v2816
    %v2819 = vadd.f32 %v2809, %v2817
    %v2820 = vadd.f32 %v2810, %v2817
    %v2821 = vadd.f32 %v1584, %v2819
    %v2822 = vadd.f32 %v1585, %v2820
    %s2823 = scalar_lea.vmem %s6, 1
    %v2824 = vld [vmem:[%s2823] sm:$0x1]
    %s2825 = scalar_lea.vmem %s7, 1
    %v2826 = vld [vmem:[%s2825] sm:$0x1]
    %v2827 = vsel %vm63, %v2821, 0.0
    %2828 = vadd.xlane.f32.xlu0 %v2827
    %v2829 = vpop.xlane.xlu0 %2828
    %v2830 = vsel %vm63, %v2822, 0.0
    %2831 = vadd.xlane.f32.xlu0 %v2830
    %v2832 = vpop.xlane.xlu0 %2831
    %v2833 = vmul.f32 %v2829, %v1296
    %v2834 = vmul.f32 %v2832, %v1296
    %v2835 = vsub.f32 %v2821, %v2833
    %v2836 = vsub.f32 %v2822, %v2834
    %v2837 = vmul.f32 %v2835, %v2835
    %v2838 = vmul.f32 %v2836, %v2836
    %v2839 = vsel %vm63, %v2837, 0.0
    %2840 = vadd.xlane.f32.xlu0 %v2839
    %v2841 = vpop.xlane.xlu0 %2840
    %v2842 = vsel %vm63, %v2838, 0.0
    %2843 = vadd.xlane.f32.xlu0 %v2842
    %v2844 = vpop.xlane.xlu0 %2843
    %v2845 = vmul.f32 %v2841, %v1296
    %v2846 = vmul.f32 %v2844, %v1296
    %v2847 = vadd.f32 %v2845, 1e-12
    %v2848 = vadd.f32 %v2846, 1e-12
    %v2849 = vrsqrt.pop %v2847
    %v2850 = vrsqrt.pop %v2848
    %v2851 = vmul.f32 %v2835, %v2849
    %v2852 = vmul.f32 %v2836, %v2850
    %v2854 = vlaneseq
    %v2855 = vshrl.u32 %v2854, 7
    %v2856 = vsub.s32 0, %v2855
    %v2857 = vrot.slane %v2824, %v2856
    %v2859 = vmul.f32 %v2851, %v2857
    %v2860 = vmul.f32 %v2852, %v2857
    %v2862 = vlaneseq
    %v2863 = vshrl.u32 %v2862, 7
    %v2864 = vsub.s32 0, %v2863
    %v2865 = vrot.slane %v2826, %v2864
    %v2867 = vadd.f32 %v2859, %v2865
    %v2868 = vadd.f32 %v2860, %v2865
    %s2869 = scalar_lea.vmem %s8, 32
    %v2870 = vld [vmem:[%s2869] sm:$0xff]
    %v2871 = vld [vmem:[%s2869 + $0x8] sm:$0xff]
    %v2872 = vld [vmem:[%s2869 + $0x10] sm:$0xff]
    %v2873 = vld [vmem:[%s2869 + $0x18] sm:$0xff]
    %s2874 = scalar_lea.vmem %s9, 1
    %v2875 = vld [vmem:[%s2874] sm:$0x1]
    %v2877 = vlaneseq
    %v2878 = vshrl.u32 %v2877, 7
    %v2879 = vsub.s32 0, %v2878
    %v2880 = vrot.slane %v2875, %v2879
    %v2883 = vsel %vm63, %v2867, 0
    %v2886 = vsel %vm63, %v2868, 0
    %2888 = vmatprep.subr.mxu0 0.0
    %2889 = vmatpush1.msra.mxu0 0.0
    %2890 = vmatprep.subr.mxu0 0.0
    %2891 = vmatpush1.msra.mxu0 0.0
    %2892 = vmatprep.subr.mxu0 0.0
    %2893 = vmatpush1.msra.mxu0 0.0
    %2894 = vmatprep.subr.mxu0 0.0
    %2895 = vmatpush1.msra.mxu0 0.0
    %2896 = vmatprep.subr.mxu0 0.0
    %2897 = vmatpush1.msra.mxu0 0.0
    %2898 = vmatprep.subr.mxu0 0.0
    %2899 = vmatpush1.msra.mxu0 0.0
    %2900 = vmatprep.subr.mxu0 0.0
    %2901 = vmatpush1.msra.mxu0 0.0
    %2902 = vmatprep.subr.mxu0 0.0
    %2903 = vmatpush1.msra.mxu0 0.0
    %2904 = vmatprep.subr.mxu0 0.0
    %2905 = vmatpush1.msra.mxu0 0.0
    %2906 = vmatprep.subr.mxu0 0.0
    %2907 = vmatpush1.msra.mxu0 0.0
    %2908 = vmatprep.subr.mxu0 0.0
    %2909 = vmatpush1.msra.mxu0 0.0
    %2910 = vmatprep.subr.mxu0 0.0
    %2911 = vmatpush1.msra.mxu0 0.0
    %2912 = vmatprep.subr.mxu0 0.0
    %2913 = vmatpush1.msra.mxu0 %v2873
    %2914 = vmatprep.subr.mxu0 0.0
    %2915 = vmatpush1.msra.mxu0 %v2872
    %2916 = vmatprep.subr.mxu0 0.0
    %2917 = vmatpush1.msra.mxu0 %v2871
    %2918 = vmatprep.subr.mxu0 0.0
    %2919 = vmatpush1.msra.mxu0 %v2870
    %2920 = vmatprep.subr.mxu0 0.0
    %2921 = vmatpush2.msra.mxu0 0.0
    %2922 = vmatprep.subr.mxu0 0.0
    %2923 = vmatpush2.msra.mxu0 0.0
    %2924 = vmatprep.subr.mxu0 0.0
    %2925 = vmatpush2.msra.mxu0 0.0
    %2926 = vmatprep.subr.mxu0 0.0
    %2927 = vmatpush2.msra.mxu0 0.0
    %2928 = vmatprep.subr.mxu0 0.0
    %2929 = vmatpush2.msra.mxu0 0.0
    %2930 = vmatprep.subr.mxu0 0.0
    %2931 = vmatpush2.msra.mxu0 0.0
    %2932 = vmatprep.subr.mxu0 0.0
    %2933 = vmatpush2.msra.mxu0 0.0
    %2934 = vmatprep.subr.mxu0 0.0
    %2935 = vmatpush2.msra.mxu0 0.0
    %2936 = vmatprep.subr.mxu0 0.0
    %2937 = vmatpush2.msra.mxu0 0.0
    %2938 = vmatprep.subr.mxu0 0.0
    %2939 = vmatpush2.msra.mxu0 0.0
    %2940 = vmatprep.subr.mxu0 0.0
    %2941 = vmatpush2.msra.mxu0 0.0
    %2942 = vmatprep.subr.mxu0 0.0
    %2943 = vmatpush2.msra.mxu0 0.0
    %2944 = vmatprep.subr.mxu0 0.0
    %2945 = vmatpush2.msra.mxu0 0.0
    %2946 = vmatprep.subr.mxu0 0.0
    %2947 = vmatpush2.msra.mxu0 0.0
    %2948 = vmatprep.subr.mxu0 0.0
    %2949 = vmatpush2.msra.mxu0 0.0
    %2950 = vmatprep.subr.mxu0 0.0
    %2951 = vmatpush2.msra.mxu0 0.0
    %2952 = vmatprep.mubr.f32.mxu0 0.0
    %2953 = vmatmul.mubr.f32.gmra.mxu0 %v2883
    %v2954 = vpop.f32.mrf.mxu0
    %v2955 = vadd.f32 %v2880, %v2954
    %v2956 = vpop.f32.mrf.mxu0
    %2957 = vmatprep.mubr.f32.mxu0 0.0
    %2958 = vmatmul.mubr.f32.gmra.mxu0 %v2886
    %v2959 = vpop.f32.mrf.mxu0
    %v2960 = vadd.f32 %v2880, %v2959
    %v2961 = vpop.f32.mrf.mxu0
    %2962 = vdwg.mxu0
    %v2963 = vmul.f32 %v2955, 0.5
    %v2964 = vmul.f32 %v2960, 0.5
    %v2965 = vmul.f32 %v2955, 0.044715
    %v2966 = vmul.f32 %v2960, 0.044715
    %v2967 = vmul.f32 %v2965, %v2955
    %v2968 = vmul.f32 %v2966, %v2960
    %v2969 = vmul.f32 %v2967, %v2955
    %v2970 = vmul.f32 %v2968, %v2960
    %v2971 = vadd.f32 %v2955, %v2969
    %v2972 = vadd.f32 %v2960, %v2970
    %v2973 = vmul.f32 %v2971, 0.7978846
    %v2974 = vmul.f32 %v2972, 0.7978846
    %v2975 = vtanh.pop %v2973
    %v2976 = vtanh.pop %v2974
    %v2977 = vadd.f32 %v2975, 1.0
    %v2978 = vadd.f32 %v2976, 1.0
    %v2979 = vmul.f32 %v2963, %v2977
    %v2980 = vmul.f32 %v2964, %v2978
    %s2981 = scalar_lea.vmem %s10, 64
    %v2982 = vld [vmem:[%s2981] sm:$0xff]
    %v2983 = vld [vmem:[%s2981 + $0x8] sm:$0xff]
    %v2984 = vld [vmem:[%s2981 + $0x10] sm:$0xff]
    %v2985 = vld [vmem:[%s2981 + $0x18] sm:$0xff]
    %v2986 = vld [vmem:[%s2981 + $0x20] sm:$0xff]
    %v2987 = vld [vmem:[%s2981 + $0x28] sm:$0xff]
    %v2988 = vld [vmem:[%s2981 + $0x30] sm:$0xff]
    %v2989 = vld [vmem:[%s2981 + $0x38] sm:$0xff]
    %s2990 = scalar_lea.vmem %s11, 1
    %v2991 = vld [vmem:[%s2990] sm:$0x1]
    %v2993 = vlaneseq
    %v2994 = vshrl.u32 %v2993, 7
    %v2995 = vsub.s32 0, %v2994
    %v2996 = vrot.slane %v2991, %v2995
    %v2999 = vsel %vm1458, %v2979, 0
    %v3002 = vsel %vm1458, %v2980, 0
    %3004 = vmatprep.subr.mxu0 0.0
    %3005 = vmatpush1.msra.mxu0 0.0
    %3006 = vmatprep.subr.mxu0 0.0
    %3007 = vmatpush1.msra.mxu0 0.0
    %3008 = vmatprep.subr.mxu0 0.0
    %3009 = vmatpush1.msra.mxu0 0.0
    %3010 = vmatprep.subr.mxu0 0.0
    %3011 = vmatpush1.msra.mxu0 0.0
    %3012 = vmatprep.subr.mxu0 0.0
    %3013 = vmatpush1.msra.mxu0 0.0
    %3014 = vmatprep.subr.mxu0 0.0
    %3015 = vmatpush1.msra.mxu0 0.0
    %3016 = vmatprep.subr.mxu0 0.0
    %3017 = vmatpush1.msra.mxu0 0.0
    %3018 = vmatprep.subr.mxu0 0.0
    %3019 = vmatpush1.msra.mxu0 0.0
    %3020 = vmatprep.subr.mxu0 0.0
    %3021 = vmatpush1.msra.mxu0 %v2989
    %3022 = vmatprep.subr.mxu0 0.0
    %3023 = vmatpush1.msra.mxu0 %v2988
    %3024 = vmatprep.subr.mxu0 0.0
    %3025 = vmatpush1.msra.mxu0 %v2987
    %3026 = vmatprep.subr.mxu0 0.0
    %3027 = vmatpush1.msra.mxu0 %v2986
    %3028 = vmatprep.subr.mxu0 0.0
    %3029 = vmatpush1.msra.mxu0 %v2985
    %3030 = vmatprep.subr.mxu0 0.0
    %3031 = vmatpush1.msra.mxu0 %v2984
    %3032 = vmatprep.subr.mxu0 0.0
    %3033 = vmatpush1.msra.mxu0 %v2983
    %3034 = vmatprep.subr.mxu0 0.0
    %3035 = vmatpush1.msra.mxu0 %v2982
    %3036 = vmatprep.subr.mxu0 0.0
    %3037 = vmatpush2.msra.mxu0 0.0
    %3038 = vmatprep.subr.mxu0 0.0
    %3039 = vmatpush2.msra.mxu0 0.0
    %3040 = vmatprep.subr.mxu0 0.0
    %3041 = vmatpush2.msra.mxu0 0.0
    %3042 = vmatprep.subr.mxu0 0.0
    %3043 = vmatpush2.msra.mxu0 0.0
    %3044 = vmatprep.subr.mxu0 0.0
    %3045 = vmatpush2.msra.mxu0 0.0
    %3046 = vmatprep.subr.mxu0 0.0
    %3047 = vmatpush2.msra.mxu0 0.0
    %3048 = vmatprep.subr.mxu0 0.0
    %3049 = vmatpush2.msra.mxu0 0.0
    %3050 = vmatprep.subr.mxu0 0.0
    %3051 = vmatpush2.msra.mxu0 0.0
    %3052 = vmatprep.subr.mxu0 0.0
    %3053 = vmatpush2.msra.mxu0 0.0
    %3054 = vmatprep.subr.mxu0 0.0
    %3055 = vmatpush2.msra.mxu0 0.0
    %3056 = vmatprep.subr.mxu0 0.0
    %3057 = vmatpush2.msra.mxu0 0.0
    %3058 = vmatprep.subr.mxu0 0.0
    %3059 = vmatpush2.msra.mxu0 0.0
    %3060 = vmatprep.subr.mxu0 0.0
    %3061 = vmatpush2.msra.mxu0 0.0
    %3062 = vmatprep.subr.mxu0 0.0
    %3063 = vmatpush2.msra.mxu0 0.0
    %3064 = vmatprep.subr.mxu0 0.0
    %3065 = vmatpush2.msra.mxu0 0.0
    %3066 = vmatprep.subr.mxu0 0.0
    %3067 = vmatpush2.msra.mxu0 0.0
    %3068 = vmatprep.mubr.f32.mxu0 0.0
    %3069 = vmatmul.mubr.f32.gmra.mxu0 %v2999
    %v3070 = vpop.f32.mrf.mxu0
    %v3071 = vadd.f32 %v2996, %v3070
    %v3072 = vpop.f32.mrf.mxu0
    %3073 = vmatprep.mubr.f32.mxu0 0.0
    %3074 = vmatmul.mubr.f32.gmra.mxu0 %v3002
    %v3075 = vpop.f32.mrf.mxu0
    %v3076 = vadd.f32 %v2996, %v3075
    %v3077 = vpop.f32.mrf.mxu0
    %3078 = vdwg.mxu0
    %v3079 = vadd.f32 %v3071, %v2867
    %v3080 = vadd.f32 %v3076, %v2868
    %s3081 = scalar_lea.vmem %s12, 1
    %v3082 = vld [vmem:[%s3081] sm:$0x1]
    %s3083 = scalar_lea.vmem %s13, 1
    %v3084 = vld [vmem:[%s3083] sm:$0x1]
    %v3085 = vsel %vm63, %v3079, 0.0
    %3086 = vadd.xlane.f32.xlu0 %v3085
    %v3087 = vpop.xlane.xlu0 %3086
    %v3088 = vsel %vm63, %v3080, 0.0
    %3089 = vadd.xlane.f32.xlu0 %v3088
    %v3090 = vpop.xlane.xlu0 %3089
    %v3091 = vmul.f32 %v3087, %v1296
    %v3092 = vmul.f32 %v3090, %v1296
    %v3093 = vsub.f32 %v3079, %v3091
    %v3094 = vsub.f32 %v3080, %v3092
    %v3095 = vmul.f32 %v3093, %v3093
    %v3096 = vmul.f32 %v3094, %v3094
    %v3097 = vsel %vm63, %v3095, 0.0
    %3098 = vadd.xlane.f32.xlu0 %v3097
    %v3099 = vpop.xlane.xlu0 %3098
    %v3100 = vsel %vm63, %v3096, 0.0
    %3101 = vadd.xlane.f32.xlu0 %v3100
    %v3102 = vpop.xlane.xlu0 %3101
    %v3103 = vmul.f32 %v3099, %v1296
    %v3104 = vmul.f32 %v3102, %v1296
    %v3105 = vadd.f32 %v3103, 1e-12
    %v3106 = vadd.f32 %v3104, 1e-12
    %v3107 = vrsqrt.pop %v3105
    %v3108 = vrsqrt.pop %v3106
    %v3109 = vmul.f32 %v3093, %v3107
    %v3110 = vmul.f32 %v3094, %v3108
    %v3112 = vlaneseq
    %v3113 = vshrl.u32 %v3112, 7
    %v3114 = vsub.s32 0, %v3113
    %v3115 = vrot.slane %v3082, %v3114
    %v3117 = vmul.f32 %v3109, %v3115
    %v3118 = vmul.f32 %v3110, %v3115
    %v3120 = vlaneseq
    %v3121 = vshrl.u32 %v3120, 7
    %v3122 = vsub.s32 0, %v3121
    %v3123 = vrot.slane %v3084, %v3122
    %v3125 = vadd.f32 %v3117, %v3123
    %v3126 = vadd.f32 %v3118, %v3123
    %3127 = vst.msk [vmem:[#allocation2] sm:$0xff] %vm63, %v3125
    %3128 = vst.msk [vmem:[#allocation2 + $0x8] sm:$0xff] %vm63, %v3126
    // Predicated region
    $region58: #{albert_layer_group_forward.1} parent=1 // pred_check
      _
    $region59: #{albert_layer_group_forward.1} parent=1 // pred_check_branch
      %3130 = sbr.rel (0) target = $region61
    $region60: #{albert_layer_group_forward.1} parent=1 // pred_region
      %s3132 = ssub.s32 256, 256
      %3133 = vsyncadd [#allocation3], %s3132
      %s3134 = sshll.u32 [#allocation2], 4
      %s3135 = int_to_ptr.vmem [resolvable:$true] %s3134
      %3140 = dma.vmem_to_hbm [thread:$0]  %s3135, 256, %s14, [#allocation3], 128, 128, 8
    $region61: #{albert_layer_group_forward.1} parent=1 // pred_fallthru
      _
    // Predicated region
    $region62: #{albert_layer_group_forward.1} parent=1 // pred_check
      _
    $region63: #{albert_layer_group_forward.1} parent=1 // pred_check_branch
      %3142 = sbr.rel (0) target = $region65
    $region64: #{albert_layer_group_forward.1} parent=1 // pred_region
      %3143 = dma.done [#allocation3], 256
    $region65: #{albert_layer_group_forward.1} parent=1 // pred_fallthru
      _
    %3144 = vsyncpa [#allocation3], 1

</llo_original>
